<compile_context>
chip_gen: v7x
topology: tpu7x:2x2x1
jax: 0.10.0
libtpu: 0.0.40
codegen_flags: <defaults>
</compile_context>

<pallas_src>
import functools

import jax
import jax.numpy as jnp
from jax import lax
from jax.experimental import pallas as pl
from jax.experimental.pallas import tpu as pltpu


# --------------------------------------------------------------------------------------
# Fused Bottleneck kernel
# --------------------------------------------------------------------------------------
def _bottleneck_kernel(patches_ref, xs_ref, w1_ref, w2_ref, t2_ref, w3_ref, t3_ref,
                       *rest, has_down):
    """One grid step processes TM output pixels (rows) end-to-end.

    patches_ref : (9, TM, Cin+1) bf16  raw-input taps for conv2; last channel is the
                  "inside the image" indicator (carries the folded BN1 shift).
    xs_ref      : (TM, Cin) bf16 strided input for the conv shortcut, or
                  (TM, Cout) f32 identity activations when has_down=False.
    w1_ref      : (Cin+1, P) bf16   conv1 weight * bn1_scale, last row = bn1_shift.
    w2_ref      : (9, P, P)  bf16   conv2 taps (HW flattened) * bn2_scale.
    t2_ref      : (1, P)     f32    bn2 shift.
    w3_ref      : (P, Cout)  bf16   conv3 weight * bn3_scale.
    t3_ref      : (1, Cout)  f32    bn3 shift (+ shortcut-BN shift when has_down).
    wd_ref      : (Cin, Cout) bf16  shortcut conv weight * bnd_scale (only when has_down).
    """
    if has_down:
        wd_ref, out_ref = rest
    else:
        (out_ref,) = rest

    n_taps, tm, _ = patches_ref.shape

    # conv1 + BN1 + ReLU computed ONCE for all taps of this row tile: one long MXU
    # stream instead of 9 short fill/drain-dominated matmuls.
    p_all = patches_ref[...].reshape(n_taps * tm, -1)                 # (9*TM, Cin+1) bf16
    h1 = jnp.dot(p_all, w1_ref[...], preferred_element_type=jnp.float32)
    h1 = jnp.maximum(h1, 0.0).astype(jnp.bfloat16)                    # (9*TM, P)

    # conv2 (3x3, stride folded into the tap gather): 9 accumulated MXU matmuls, f32 acc.
    acc = jnp.dot(h1[0:tm], w2_ref[0], preferred_element_type=jnp.float32)
    for t in range(1, n_taps):                                        # static unroll
        acc += jnp.dot(h1[t * tm:(t + 1) * tm], w2_ref[t],
                       preferred_element_type=jnp.float32)

    h2 = jnp.maximum(acc + t2_ref[...], 0.0).astype(jnp.bfloat16)     # BN2 shift + ReLU

    # conv3 + BN3 (shortcut-BN shift already folded into t3 when has_down).
    out = jnp.dot(h2, w3_ref[...], preferred_element_type=jnp.float32) + t3_ref[...]

    if has_down:                                  # conv shortcut fused into the epilogue
        out = out + jnp.dot(xs_ref[...], wd_ref[...],
                            preferred_element_type=jnp.float32)
    else:                                         # identity shortcut (kept in f32)
        out = out + xs_ref[...]

    out_ref[...] = jnp.maximum(out, 0.0).astype(out_ref.dtype)        # final ReLU


# --------------------------------------------------------------------------------------
# Glue: BN folding, input-side tap gather, generation-aware tiling, wrapper
# --------------------------------------------------------------------------------------
def _bn_fold(bn, eps=1e-5):
    """Eval-mode BatchNorm2d -> per-channel affine (scale, shift)."""
    s = bn["gamma"] / jnp.sqrt(bn["var"] + eps)
    t = bn["beta"] - bn["mean"] * s
    return s, t


def _const_spec(shape, single_buffer):
    """BlockSpec for a grid-invariant operand (constant index_map).

    Single-buffered when supported: the block is fetched exactly once, so the default
    double-buffering only doubles its VMEM footprint (decisive at production channel
    counts on v7x's 64 MiB VMEM).
    """
    idx = lambda i, _r=len(shape): (0,) * _r
    if single_buffer:
        try:
            return pl.BlockSpec(shape, idx, pipeline_mode=pl.Buffered(1))
        except Exception:       # older Pallas without BlockSpec(pipeline_mode=...)
            pass
    return pl.BlockSpec(shape, idx)


def _tpu_layout_hints():
    """Best-effort (#TensorCores per device, VMEM budget bytes) for the current chip."""
    try:
        kind = jax.devices()[0].device_kind.lower()
    except Exception:
        kind = ""
    two_core = any(s in kind for s in ("v7", "7x", "v4", "v5p"))   # 2 TCs behind 1 device
    tight_vmem = any(s in kind for s in ("v7", "7x"))              # 64 MiB physical / TC
    n_cores = 2 if two_core else 1
    vmem_budget = (40 << 20) if tight_vmem else (96 << 20)
    return n_cores, vmem_budget


def _pick_row_tile(m, bytes_per_row, weight_bytes, n_cores, vmem_budget):
    """Largest row tile under the VMEM budget.

    Multi-core chips get >= 2 grid steps per core (both cores busy + DMA/compute
    overlap); single-core chips take the biggest tile that fits (the grid is a serial
    loop there, so extra steps only add per-step overhead and shorten MXU streams).
    """
    min_steps = 2 * n_cores if n_cores > 1 else 1
    cands = [tm for tm in (512, 256, 128, 64, 32, 16, 8) if tm <= m and m % tm == 0]
    if not cands:
        cands = [m]
    for tm in cands:                                # largest first
        if m // tm >= min_steps and weight_bytes + tm * bytes_per_row <= vmem_budget:
            return tm
    for tm in cands:                                # relax the step requirement
        if weight_bytes + tm * bytes_per_row <= vmem_budget:
            return tm
    return cands[-1]


def bottleneck_forward(params, x_nchw, *, stride, single_buffer_weights=True):
    """Forward pass of the PyTorch Bottleneck block (eval mode). Input/output NCHW."""
    B, Cin, H, W = x_nchw.shape
    P = params["w1"].shape[1]               # planes
    Cout = params["w3"].shape[1]            # expansion * planes
    has_down = (stride != 1) or (Cin != Cout)

    x = jnp.transpose(x_nchw, (0, 2, 3, 1)).astype(jnp.float32)   # NHWC (channels on lanes)

    # Fold eval-mode BN into the conv weights (scale, cast bf16) and f32 per-layer shifts.
    s1, t1 = _bn_fold(params["bn1"])
    s2, t2 = _bn_fold(params["bn2"])
    s3, t3 = _bn_fold(params["bn3"])
    w1aug = jnp.concatenate([params["w1"] * s1[None, :], t1[None, :]],
                            axis=0).astype(jnp.bfloat16)                  # (Cin+1, P)
    w2f = (params["w2"] * s2).reshape(9, P, P).astype(jnp.bfloat16)       # HWIO -> (9,P,P)
    w3f = (params["w3"] * s3[None, :]).astype(jnp.bfloat16)               # (P, Cout)
    t2r = t2.reshape(1, P)
    t3r = t3.reshape(1, Cout)

    # conv2: k=3, pad=1, stride=s -> same output size as the 1x1 stride-s shortcut.
    Ho = (H - 1) // stride + 1
    Wo = (W - 1) // stride + 1
    M = B * Ho * Wo

    # Input-side tap gather in bf16. The appended constant-1 channel is zero in the
    # padded border, so ReLU(BN1(conv1)) is exactly 0 where conv2 zero-pads.
    # (For production feature-map sizes, gather taps in-kernel from a halo'd input tile
    #  instead of this HBM im2col.)
    xa = jnp.concatenate([x, jnp.ones((B, H, W, 1), jnp.float32)],
                         axis=-1).astype(jnp.bfloat16)
    xa = jnp.pad(xa, ((0, 0), (1, 1), (1, 1), (0, 0)))
    taps = []
    for kh in range(3):
        for kw in range(3):
            taps.append(xa[:, kh:kh + stride * (Ho - 1) + 1:stride,
                           kw:kw + stride * (Wo - 1) + 1:stride, :])
    patches = jnp.stack(taps, axis=0).reshape(9, M, Cin + 1)              # bf16

    if has_down:
        sd, td = _bn_fold(params["bnd"])
        wdf = (params["wd"] * sd[None, :]).astype(jnp.bfloat16)
        t3r = t3r + td.reshape(1, Cout)          # fold shortcut-BN shift into conv3 bias
        xs = x[:, 0:stride * (Ho - 1) + 1:stride,
               0:stride * (Wo - 1) + 1:stride, :].reshape(M, Cin).astype(jnp.bfloat16)
    else:
        xs = x.reshape(M, Cin)                   # identity shortcut stays f32 (exact add)

    # Pad rows to a multiple of 8 so a sublane-aligned tile always exists.
    Mp = ((M + 7) // 8) * 8
    if Mp != M:
        patches = jnp.pad(patches, ((0, 0), (0, Mp - M), (0, 0)))
        xs = jnp.pad(xs, ((0, Mp - M), (0, 0)))

    # ---- generation-aware tile / VMEM budget -------------------------------------
    bytes_per_row = (
        9 * (Cin + 1) * 2 * 2                    # patches block, bf16, double-buffered
        + xs.shape[1] * xs.dtype.itemsize * 2    # shortcut block, double-buffered
        + Cout * 4 * 2                           # f32 output block, double-buffered
        + 9 * P * (4 + 2) + P * (4 + 2) + Cout * 4   # in-kernel h1/acc/out intermediates
    )
    weight_bytes = (w1aug.size + w2f.size + w3f.size) * 2 + (t2r.size + t3r.size) * 4
    if has_down:
        weight_bytes += wdf.size * 2
    if not single_buffer_weights:
        weight_bytes *= 2

    n_cores, vmem_budget = _tpu_layout_hints()
    TM = _pick_row_tile(Mp, bytes_per_row, weight_bytes, n_cores, vmem_budget)
    needed = weight_bytes + TM * bytes_per_row
    vmem_limit = int(min(vmem_budget, max(needed + (4 << 20), 32 << 20)))
    grid = (Mp // TM,)

    in_arrays = [patches, xs, w1aug, w2f, t2r, w3f, t3r]
    in_specs = [
        pl.BlockSpec((9, TM, Cin + 1), lambda i: (0, i, 0)),
        pl.BlockSpec((TM, xs.shape[1]), lambda i: (i, 0)),
        _const_spec((Cin + 1, P), single_buffer_weights),
        _const_spec((9, P, P), single_buffer_weights),
        _const_spec((1, P), single_buffer_weights),
        _const_spec((P, Cout), single_buffer_weights),
        _const_spec((1, Cout), single_buffer_weights),
    ]
    if has_down:
        in_arrays.append(wdf)
        in_specs.append(_const_spec((Cin, Cout), single_buffer_weights))

    out = pl.pallas_call(
        functools.partial(_bottleneck_kernel, has_down=has_down),
        out_shape=jax.ShapeDtypeStruct((Mp, Cout), jnp.float32),
        grid=grid,
        in_specs=in_specs,
        out_specs=pl.BlockSpec((TM, Cout), lambda i: (i, 0)),
        compiler_params=pltpu.CompilerParams(
            dimension_semantics=("parallel",),
            vmem_limit_bytes=vmem_limit),
    )(*in_arrays)

    out = out[:M]
    return jnp.transpose(out.reshape(B, Ho, Wo, Cout), (0, 3, 1, 2))   # back to NCHW


# --------------------------------------------------------------------------------------
# Pure-JAX reference (same eval-mode BN folding) for a correctness check
# --------------------------------------------------------------------------------------
def bottleneck_reference(params, x_nchw, *, stride):
    x = jnp.transpose(x_nchw, (0, 2, 3, 1)).astype(jnp.float32)
    Cin = x.shape[-1]
    Cout = params["w3"].shape[1]
    has_down = (stride != 1) or (Cin != Cout)

    def conv(y, w_hwio, s, pad):
        return lax.conv_general_dilated(
            y, w_hwio, window_strides=(s, s), padding=pad,
            dimension_numbers=("NHWC", "HWIO", "NHWC"),
            precision=lax.Precision.HIGHEST)

    s1, t1 = _bn_fold(params["bn1"])
    s2, t2 = _bn_fold(params["bn2"])
    s3, t3 = _bn_fold(params["bn3"])
    h = jnp.maximum(conv(x, params["w1"][None, None], 1, "VALID") * s1 + t1, 0.0)
    h = jnp.maximum(conv(h, params["w2"], stride, [(1, 1), (1, 1)]) * s2 + t2, 0.0)
    h = conv(h, params["w3"][None, None], 1, "VALID") * s3 + t3
    if has_down:
        sd, td = _bn_fold(params["bnd"])
        sc = conv(x, params["wd"][None, None], stride, "VALID") * sd + td
    else:
        sc = x
    return jnp.transpose(jnp.maximum(h + sc, 0.0), (0, 3, 1, 2))


# --------------------------------------------------------------------------------------
# Deterministic synthetic parameters
# --------------------------------------------------------------------------------------
def init_params(key, in_planes, planes, expansion=4):
    Cout = expansion * planes
    ks = iter(jax.random.split(key, 16))
    w = lambda shape: 0.1 * jax.random.normal(next(ks), shape, jnp.float32)

    def bn(n):
        k1, k2, k3, k4 = jax.random.split(next(ks), 4)
        return {
            "gamma": 1.0 + 0.1 * jax.random.normal(k1, (n,), jnp.float32),
            "beta": 0.1 * jax.random.normal(k2, (n,), jnp.float32),
            "mean": 0.1 * jax.random.normal(k3, (n,), jnp.float32),
            "var": jax.random.uniform(k4, (n,), jnp.float32, minval=0.5, maxval=1.5),
        }

    return {
        "w1": w((in_planes, planes)),        # conv1 1x1: (Cin, P)
        "bn1": bn(planes),
        "w2": w((3, 3, planes, planes)),     # conv2 3x3: HWIO
        "bn2": bn(planes),
        "w3": w((planes, Cout)),             # conv3 1x1: (P, 4P)
        "bn3": bn(Cout),
        "wd": w((in_planes, Cout)),          # shortcut conv 1x1: (Cin, 4P)
        "bnd": bn(Cout),
    }


# --------------------------------------------------------------------------------------
if __name__ == "__main__":
    key = jax.random.PRNGKey(0)
    kx, kp = jax.random.split(key)

    B, in_planes, planes, stride = 2, 4, 8, 2     # Bottleneck(4, 8, stride=2) -> 32 ch out
    H = W = 16
    x = jax.random.normal(kx, (B, in_planes, H, W), jnp.float32)   # NCHW like PyTorch
    params = init_params(kp, in_planes, planes)

    fwd = jax.jit(functools.partial(bottleneck_forward, stride=stride))
    try:
        out = jax.block_until_ready(fwd(params, x))
    except Exception:
        # Fallback for Pallas builds that reject single-buffered (Buffered(1)) specs at
        # lowering time: identical kernel with default double-buffered weight specs.
        fwd = jax.jit(functools.partial(bottleneck_forward, stride=stride,
                                        single_buffer_weights=False))
        out = jax.block_until_ready(fwd(params, x))

    assert out.shape == (B, 4 * planes, H // stride, W // stride), out.shape

    ref = jax.block_until_ready(
        jax.jit(functools.partial(bottleneck_reference, stride=stride))(params, x))
    # bf16 MXU operands (f32 accumulation) vs. f32 HIGHEST reference -> loosened tolerance.
    assert jnp.allclose(out, ref, atol=2e-2, rtol=2e-2), float(jnp.max(jnp.abs(out - ref)))

    # TODO(synk): training-mode BatchNorm (running-stat updates) has no eval-mode
    # equivalent here; BN is folded as an affine using running stats.
    print("KERNEL_OK")
</pallas_src>

<mosaic_0001>
module attributes {stable_mosaic.version = 11 : i64} {
  func.func @_bottleneck_kernel(%arg0: i32, %arg1: memref<9x128x5xbf16, #tpu.memory_space<vmem>>, %arg2: memref<128x4xbf16, #tpu.memory_space<vmem>>, %arg3: memref<5x8xbf16, #tpu.memory_space<vmem>>, %arg4: memref<9x8x8xbf16, #tpu.memory_space<vmem>>, %arg5: memref<1x8xf32, #tpu.memory_space<vmem>>, %arg6: memref<8x32xbf16, #tpu.memory_space<vmem>>, %arg7: memref<1x32xf32, #tpu.memory_space<vmem>>, %arg8: memref<4x32xbf16, #tpu.memory_space<vmem>>, %arg9: memref<128x32xf32, #tpu.memory_space<vmem>>) attributes {dimension_semantics = [#tpu.dimension_semantics<parallel>], iteration_bounds = array<i64: 1>, scalar_prefetch = 0 : i64, scratch_operands = 0 : i64, tpu.core_type = #tpu.core_type<tc>, window_params = [{transform_indices = @transform_0, window_bounds = array<i64: 9, 128, 5>}, {transform_indices = @transform_1, window_bounds = array<i64: 128, 4>}, {pipeline_mode = #tpu.pipeline_mode<synchronous>, transform_indices = @transform_2, window_bounds = array<i64: 5, 8>}, {pipeline_mode = #tpu.pipeline_mode<synchronous>, transform_indices = @transform_3, window_bounds = array<i64: 9, 8, 8>}, {pipeline_mode = #tpu.pipeline_mode<synchronous>, transform_indices = @transform_4, window_bounds = array<i64: 1, 8>}, {pipeline_mode = #tpu.pipeline_mode<synchronous>, transform_indices = @transform_5, window_bounds = array<i64: 8, 32>}, {pipeline_mode = #tpu.pipeline_mode<synchronous>, transform_indices = @transform_6, window_bounds = array<i64: 1, 32>}, {pipeline_mode = #tpu.pipeline_mode<synchronous>, transform_indices = @transform_7, window_bounds = array<i64: 4, 32>}, {transform_indices = @transform_8, window_bounds = array<i64: 128, 32>}]} {
    %c0 = arith.constant 0 : index
    %c0_0 = arith.constant 0 : index
    %c0_1 = arith.constant 0 : index
    %0 = vector.load %arg1[%c0, %c0_0, %c0_1] : memref<9x128x5xbf16, #tpu.memory_space<vmem>>, vector<9x128x5xbf16>
    %1 = vector.shape_cast %0 : vector<9x128x5xbf16> to vector<1152x5xbf16>
    %c0_2 = arith.constant 0 : index
    %c0_3 = arith.constant 0 : index
    %2 = vector.load %arg3[%c0_2, %c0_3] : memref<5x8xbf16, #tpu.memory_space<vmem>>, vector<5x8xbf16>
    %cst = arith.constant dense<0.000000e+00> : vector<1152x8xf32>
    %3 = tpu.matmul %1, %2, %cst {dimension_numbers = #tpu.dot_dimension_numbers<[1], [0], [0], [1], [0, 0, 1, 1], [], []>} : vector<1152x5xbf16>, vector<5x8xbf16>, vector<1152x8xf32> -> vector<1152x8xf32>
    %cst_4 = arith.constant 0.000000e+00 : f32
    %4 = vector.broadcast %cst_4 : f32 to vector<1152x8xf32>
    %5 = arith.maximumf %3, %4 : vector<1152x8xf32>
    %6 = arith.truncf %5 : vector<1152x8xf32> to vector<1152x8xbf16>
    %7 = vector.extract_strided_slice %6 {offsets = [0, 0], sizes = [128, 8], strides = [1, 1]} : vector<1152x8xbf16> to vector<128x8xbf16>
    %c0_5 = arith.constant 0 : index
    %c0_6 = arith.constant 0 : index
    %c0_7 = arith.constant 0 : index
    %8 = vector.load %arg4[%c0_5, %c0_6, %c0_7] : memref<9x8x8xbf16, #tpu.memory_space<vmem>>, vector<1x8x8xbf16>
    %9 = vector.shape_cast %8 : vector<1x8x8xbf16> to vector<8x8xbf16>
    %cst_8 = arith.constant dense<0.000000e+00> : vector<128x8xf32>
    %10 = tpu.matmul %7, %9, %cst_8 {dimension_numbers = #tpu.dot_dimension_numbers<[1], [0], [0], [1], [0, 0, 1, 1], [], []>} : vector<128x8xbf16>, vector<8x8xbf16>, vector<128x8xf32> -> vector<128x8xf32>
    %11 = vector.extract_strided_slice %6 {offsets = [128, 0], sizes = [128, 8], strides = [1, 1]} : vector<1152x8xbf16> to vector<128x8xbf16>
    %c1 = arith.constant 1 : index
    %c0_9 = arith.constant 0 : index
    %c0_10 = arith.constant 0 : index
    %12 = vector.load %arg4[%c1, %c0_9, %c0_10] : memref<9x8x8xbf16, #tpu.memory_space<vmem>>, vector<1x8x8xbf16>
    %13 = vector.shape_cast %12 : vector<1x8x8xbf16> to vector<8x8xbf16>
    %cst_11 = arith.constant dense<0.000000e+00> : vector<128x8xf32>
    %14 = tpu.matmul %11, %13, %cst_11 {dimension_numbers = #tpu.dot_dimension_numbers<[1], [0], [0], [1], [0, 0, 1, 1], [], []>} : vector<128x8xbf16>, vector<8x8xbf16>, vector<128x8xf32> -> vector<128x8xf32>
    %15 = arith.addf %10, %14 : vector<128x8xf32>
    %16 = vector.extract_strided_slice %6 {offsets = [256, 0], sizes = [128, 8], strides = [1, 1]} : vector<1152x8xbf16> to vector<128x8xbf16>
    %c2 = arith.constant 2 : index
    %c0_12 = arith.constant 0 : index
    %c0_13 = arith.constant 0 : index
    %17 = vector.load %arg4[%c2, %c0_12, %c0_13] : memref<9x8x8xbf16, #tpu.memory_space<vmem>>, vector<1x8x8xbf16>
    %18 = vector.shape_cast %17 : vector<1x8x8xbf16> to vector<8x8xbf16>
    %cst_14 = arith.constant dense<0.000000e+00> : vector<128x8xf32>
    %19 = tpu.matmul %16, %18, %cst_14 {dimension_numbers = #tpu.dot_dimension_numbers<[1], [0], [0], [1], [0, 0, 1, 1], [], []>} : vector<128x8xbf16>, vector<8x8xbf16>, vector<128x8xf32> -> vector<128x8xf32>
    %20 = arith.addf %15, %19 : vector<128x8xf32>
    %21 = vector.extract_strided_slice %6 {offsets = [384, 0], sizes = [128, 8], strides = [1, 1]} : vector<1152x8xbf16> to vector<128x8xbf16>
    %c3 = arith.constant 3 : index
    %c0_15 = arith.constant 0 : index
    %c0_16 = arith.constant 0 : index
    %22 = vector.load %arg4[%c3, %c0_15, %c0_16] : memref<9x8x8xbf16, #tpu.memory_space<vmem>>, vector<1x8x8xbf16>
    %23 = vector.shape_cast %22 : vector<1x8x8xbf16> to vector<8x8xbf16>
    %cst_17 = arith.constant dense<0.000000e+00> : vector<128x8xf32>
    %24 = tpu.matmul %21, %23, %cst_17 {dimension_numbers = #tpu.dot_dimension_numbers<[1], [0], [0], [1], [0, 0, 1, 1], [], []>} : vector<128x8xbf16>, vector<8x8xbf16>, vector<128x8xf32> -> vector<128x8xf32>
    %25 = arith.addf %20, %24 : vector<128x8xf32>
    %26 = vector.extract_strided_slice %6 {offsets = [512, 0], sizes = [128, 8], strides = [1, 1]} : vector<1152x8xbf16> to vector<128x8xbf16>
    %c4 = arith.constant 4 : index
    %c0_18 = arith.constant 0 : index
    %c0_19 = arith.constant 0 : index
    %27 = vector.load %arg4[%c4, %c0_18, %c0_19] : memref<9x8x8xbf16, #tpu.memory_space<vmem>>, vector<1x8x8xbf16>
    %28 = vector.shape_cast %27 : vector<1x8x8xbf16> to vector<8x8xbf16>
    %cst_20 = arith.constant dense<0.000000e+00> : vector<128x8xf32>
    %29 = tpu.matmul %26, %28, %cst_20 {dimension_numbers = #tpu.dot_dimension_numbers<[1], [0], [0], [1], [0, 0, 1, 1], [], []>} : vector<128x8xbf16>, vector<8x8xbf16>, vector<128x8xf32> -> vector<128x8xf32>
    %30 = arith.addf %25, %29 : vector<128x8xf32>
    %31 = vector.extract_strided_slice %6 {offsets = [640, 0], sizes = [128, 8], strides = [1, 1]} : vector<1152x8xbf16> to vector<128x8xbf16>
    %c5 = arith.constant 5 : index
    %c0_21 = arith.constant 0 : index
    %c0_22 = arith.constant 0 : index
    %32 = vector.load %arg4[%c5, %c0_21, %c0_22] : memref<9x8x8xbf16, #tpu.memory_space<vmem>>, vector<1x8x8xbf16>
    %33 = vector.shape_cast %32 : vector<1x8x8xbf16> to vector<8x8xbf16>
    %cst_23 = arith.constant dense<0.000000e+00> : vector<128x8xf32>
    %34 = tpu.matmul %31, %33, %cst_23 {dimension_numbers = #tpu.dot_dimension_numbers<[1], [0], [0], [1], [0, 0, 1, 1], [], []>} : vector<128x8xbf16>, vector<8x8xbf16>, vector<128x8xf32> -> vector<128x8xf32>
    %35 = arith.addf %30, %34 : vector<128x8xf32>
    %36 = vector.extract_strided_slice %6 {offsets = [768, 0], sizes = [128, 8], strides = [1, 1]} : vector<1152x8xbf16> to vector<128x8xbf16>
    %c6 = arith.constant 6 : index
    %c0_24 = arith.constant 0 : index
    %c0_25 = arith.constant 0 : index
    %37 = vector.load %arg4[%c6, %c0_24, %c0_25] : memref<9x8x8xbf16, #tpu.memory_space<vmem>>, vector<1x8x8xbf16>
    %38 = vector.shape_cast %37 : vector<1x8x8xbf16> to vector<8x8xbf16>
    %cst_26 = arith.constant dense<0.000000e+00> : vector<128x8xf32>
    %39 = tpu.matmul %36, %38, %cst_26 {dimension_numbers = #tpu.dot_dimension_numbers<[1], [0], [0], [1], [0, 0, 1, 1], [], []>} : vector<128x8xbf16>, vector<8x8xbf16>, vector<128x8xf32> -> vector<128x8xf32>
    %40 = arith.addf %35, %39 : vector<128x8xf32>
    %41 = vector.extract_strided_slice %6 {offsets = [896, 0], sizes = [128, 8], strides = [1, 1]} : vector<1152x8xbf16> to vector<128x8xbf16>
    %c7 = arith.constant 7 : index
    %c0_27 = arith.constant 0 : index
    %c0_28 = arith.constant 0 : index
    %42 = vector.load %arg4[%c7, %c0_27, %c0_28] : memref<9x8x8xbf16, #tpu.memory_space<vmem>>, vector<1x8x8xbf16>
    %43 = vector.shape_cast %42 : vector<1x8x8xbf16> to vector<8x8xbf16>
    %cst_29 = arith.constant dense<0.000000e+00> : vector<128x8xf32>
    %44 = tpu.matmul %41, %43, %cst_29 {dimension_numbers = #tpu.dot_dimension_numbers<[1], [0], [0], [1], [0, 0, 1, 1], [], []>} : vector<128x8xbf16>, vector<8x8xbf16>, vector<128x8xf32> -> vector<128x8xf32>
    %45 = arith.addf %40, %44 : vector<128x8xf32>
    %46 = vector.extract_strided_slice %6 {offsets = [1024, 0], sizes = [128, 8], strides = [1, 1]} : vector<1152x8xbf16> to vector<128x8xbf16>
    %c8 = arith.constant 8 : index
    %c0_30 = arith.constant 0 : index
    %c0_31 = arith.constant 0 : index
    %47 = vector.load %arg4[%c8, %c0_30, %c0_31] : memref<9x8x8xbf16, #tpu.memory_space<vmem>>, vector<1x8x8xbf16>
    %48 = vector.shape_cast %47 : vector<1x8x8xbf16> to vector<8x8xbf16>
    %cst_32 = arith.constant dense<0.000000e+00> : vector<128x8xf32>
    %49 = tpu.matmul %46, %48, %cst_32 {dimension_numbers = #tpu.dot_dimension_numbers<[1], [0], [0], [1], [0, 0, 1, 1], [], []>} : vector<128x8xbf16>, vector<8x8xbf16>, vector<128x8xf32> -> vector<128x8xf32>
    %50 = arith.addf %45, %49 : vector<128x8xf32>
    %c0_33 = arith.constant 0 : index
    %c0_34 = arith.constant 0 : index
    %51 = vector.load %arg5[%c0_33, %c0_34] : memref<1x8xf32, #tpu.memory_space<vmem>>, vector<1x8xf32>
    %52 = vector.broadcast %51 : vector<1x8xf32> to vector<128x8xf32>
    %53 = arith.addf %50, %52 : vector<128x8xf32>
    %cst_35 = arith.constant 0.000000e+00 : f32
    %54 = vector.broadcast %cst_35 : f32 to vector<128x8xf32>
    %55 = arith.maximumf %53, %54 : vector<128x8xf32>
    %56 = arith.truncf %55 : vector<128x8xf32> to vector<128x8xbf16>
    %c0_36 = arith.constant 0 : index
    %c0_37 = arith.constant 0 : index
    %57 = vector.load %arg6[%c0_36, %c0_37] : memref<8x32xbf16, #tpu.memory_space<vmem>>, vector<8x32xbf16>
    %cst_38 = arith.constant dense<0.000000e+00> : vector<128x32xf32>
    %58 = tpu.matmul %56, %57, %cst_38 {dimension_numbers = #tpu.dot_dimension_numbers<[1], [0], [0], [1], [0, 0, 1, 1], [], []>} : vector<128x8xbf16>, vector<8x32xbf16>, vector<128x32xf32> -> vector<128x32xf32>
    %c0_39 = arith.constant 0 : index
    %c0_40 = arith.constant 0 : index
    %59 = vector.load %arg7[%c0_39, %c0_40] : memref<1x32xf32, #tpu.memory_space<vmem>>, vector<1x32xf32>
    %60 = vector.broadcast %59 : vector<1x32xf32> to vector<128x32xf32>
    %61 = arith.addf %58, %60 : vector<128x32xf32>
    %c0_41 = arith.constant 0 : index
    %c0_42 = arith.constant 0 : index
    %62 = vector.load %arg2[%c0_41, %c0_42] : memref<128x4xbf16, #tpu.memory_space<vmem>>, vector<128x4xbf16>
    %c0_43 = arith.constant 0 : index
    %c0_44 = arith.constant 0 : index
    %63 = vector.load %arg8[%c0_43, %c0_44] : memref<4x32xbf16, #tpu.memory_space<vmem>>, vector<4x32xbf16>
    %cst_45 = arith.constant dense<0.000000e+00> : vector<128x32xf32>
    %64 = tpu.matmul %62, %63, %cst_45 {dimension_numbers = #tpu.dot_dimension_numbers<[1], [0], [0], [1], [0, 0, 1, 1], [], []>} : vector<128x4xbf16>, vector<4x32xbf16>, vector<128x32xf32> -> vector<128x32xf32>
    %65 = arith.addf %61, %64 : vector<128x32xf32>
    %cst_46 = arith.constant 0.000000e+00 : f32
    %66 = vector.broadcast %cst_46 : f32 to vector<128x32xf32>
    %67 = arith.maximumf %65, %66 : vector<128x32xf32>
    %c0_47 = arith.constant 0 : index
    %c0_48 = arith.constant 0 : index
    %68 = vector.load %arg9[%c0_47, %c0_48] : memref<128x32xf32, #tpu.memory_space<vmem>>, vector<128x32xf32>
    tpu.vector_store %arg9[%c0_47, %c0_48], %67 {strides = array<i32>} : memref<128x32xf32, #tpu.memory_space<vmem>>, vector<128x32xf32>,
    return
  }
  func.func @transform_0(%arg0: i32) -> (i32, i32, i32) {
    %c0_i32 = arith.constant 0 : i32
    %c0_i32_0 = arith.constant 0 : i32
    %c0_i32_1 = arith.constant 0 : i32
    return %c0_i32, %arg0, %c0_i32_0 : i32, i32, i32
  }
  func.func @transform_1(%arg0: i32) -> (i32, i32) {
    %c0_i32 = arith.constant 0 : i32
    %c0_i32_0 = arith.constant 0 : i32
    return %arg0, %c0_i32 : i32, i32
  }
  func.func @transform_2(%arg0: i32) -> (i32, i32) {
    %c0_i32 = arith.constant 0 : i32
    %c0_i32_0 = arith.constant 0 : i32
    %c0_i32_1 = arith.constant 0 : i32
    return %c0_i32, %c0_i32_0 : i32, i32
  }
  func.func @transform_3(%arg0: i32) -> (i32, i32, i32) {
    %c0_i32 = arith.constant 0 : i32
    %c0_i32_0 = arith.constant 0 : i32
    %c0_i32_1 = arith.constant 0 : i32
    %c0_i32_2 = arith.constant 0 : i32
    return %c0_i32, %c0_i32_0, %c0_i32_1 : i32, i32, i32
  }
  func.func @transform_4(%arg0: i32) -> (i32, i32) {
    %c0_i32 = arith.constant 0 : i32
    %c0_i32_0 = arith.constant 0 : i32
    %c0_i32_1 = arith.constant 0 : i32
    return %c0_i32, %c0_i32_0 : i32, i32
  }
  func.func @transform_5(%arg0: i32) -> (i32, i32) {
    %c0_i32 = arith.constant 0 : i32
    %c0_i32_0 = arith.constant 0 : i32
    %c0_i32_1 = arith.constant 0 : i32
    return %c0_i32, %c0_i32_0 : i32, i32
  }
  func.func @transform_6(%arg0: i32) -> (i32, i32) {
    %c0_i32 = arith.constant 0 : i32
    %c0_i32_0 = arith.constant 0 : i32
    %c0_i32_1 = arith.constant 0 : i32
    return %c0_i32, %c0_i32_0 : i32, i32
  }
  func.func @transform_7(%arg0: i32) -> (i32, i32) {
    %c0_i32 = arith.constant 0 : i32
    %c0_i32_0 = arith.constant 0 : i32
    %c0_i32_1 = arith.constant 0 : i32
    return %c0_i32, %c0_i32_0 : i32, i32
  }
  func.func @transform_8(%arg0: i32) -> (i32, i32) {
    %c0_i32 = arith.constant 0 : i32
    %c0_i32_0 = arith.constant 0 : i32
    return %arg0, %c0_i32 : i32, i32
  }
}

module attributes {stable_mosaic.version = 11 : i64} {
  func.func @_bottleneck_kernel(%arg0: i32, %arg1: memref<9x128x5xbf16, #tpu.memory_space<vmem>>, %arg2: memref<128x4xbf16, #tpu.memory_space<vmem>>, %arg3: memref<5x8xbf16, #tpu.memory_space<vmem>>, %arg4: memref<9x8x8xbf16, #tpu.memory_space<vmem>>, %arg5: memref<1x8xf32, #tpu.memory_space<vmem>>, %arg6: memref<8x32xbf16, #tpu.memory_space<vmem>>, %arg7: memref<1x32xf32, #tpu.memory_space<vmem>>, %arg8: memref<4x32xbf16, #tpu.memory_space<vmem>>, %arg9: memref<128x32xf32, #tpu.memory_space<vmem>>) attributes {dimension_semantics = [#tpu.dimension_semantics<parallel>], iteration_bounds = array<i64: 1>, scalar_prefetch = 0 : i64, scratch_operands = 0 : i64, tpu.core_type = #tpu.core_type<tc>, window_params = [{transform_indices = @transform_0, window_bounds = array<i64: 9, 128, 5>}, {transform_indices = @transform_1, window_bounds = array<i64: 128, 4>}, {pipeline_mode = #tpu.pipeline_mode<synchronous>, transform_indices = @transform_2, window_bounds = array<i64: 5, 8>}, {pipeline_mode = #tpu.pipeline_mode<synchronous>, transform_indices = @transform_3, window_bounds = array<i64: 9, 8, 8>}, {pipeline_mode = #tpu.pipeline_mode<synchronous>, transform_indices = @transform_4, window_bounds = array<i64: 1, 8>}, {pipeline_mode = #tpu.pipeline_mode<synchronous>, transform_indices = @transform_5, window_bounds = array<i64: 8, 32>}, {pipeline_mode = #tpu.pipeline_mode<synchronous>, transform_indices = @transform_6, window_bounds = array<i64: 1, 32>}, {pipeline_mode = #tpu.pipeline_mode<synchronous>, transform_indices = @transform_7, window_bounds = array<i64: 4, 32>}, {transform_indices = @transform_8, window_bounds = array<i64: 128, 32>}]} {
    %c0 = arith.constant 0 : index
    %c0_0 = arith.constant 0 : index
    %c0_1 = arith.constant 0 : index
    %0 = vector.load %arg1[%c0, %c0_0, %c0_1] : memref<9x128x5xbf16, #tpu.memory_space<vmem>>, vector<9x128x5xbf16>
    %1 = vector.shape_cast %0 : vector<9x128x5xbf16> to vector<1152x5xbf16>
    %c0_2 = arith.constant 0 : index
    %c0_3 = arith.constant 0 : index
    %2 = vector.load %arg3[%c0_2, %c0_3] : memref<5x8xbf16, #tpu.memory_space<vmem>>, vector<5x8xbf16>
    %cst = arith.constant dense<0.000000e+00> : vector<1152x8xf32>
    %3 = tpu.matmul %1, %2, %cst {dimension_numbers = #tpu.dot_dimension_numbers<[1], [0], [0], [1], [0, 0, 1, 1], [], []>} : vector<1152x5xbf16>, vector<5x8xbf16>, vector<1152x8xf32> -> vector<1152x8xf32>
    %cst_4 = arith.constant 0.000000e+00 : f32
    %4 = vector.broadcast %cst_4 : f32 to vector<1152x8xf32>
    %5 = arith.maximumf %3, %4 : vector<1152x8xf32>
    %6 = arith.truncf %5 : vector<1152x8xf32> to vector<1152x8xbf16>
    %7 = vector.extract_strided_slice %6 {offsets = [0, 0], sizes = [128, 8], strides = [1, 1]} : vector<1152x8xbf16> to vector<128x8xbf16>
    %c0_5 = arith.constant 0 : index
    %c0_6 = arith.constant 0 : index
    %c0_7 = arith.constant 0 : index
    %8 = vector.load %arg4[%c0_5, %c0_6, %c0_7] : memref<9x8x8xbf16, #tpu.memory_space<vmem>>, vector<1x8x8xbf16>
    %9 = vector.shape_cast %8 : vector<1x8x8xbf16> to vector<8x8xbf16>
    %cst_8 = arith.constant dense<0.000000e+00> : vector<128x8xf32>
    %10 = tpu.matmul %7, %9, %cst_8 {dimension_numbers = #tpu.dot_dimension_numbers<[1], [0], [0], [1], [0, 0, 1, 1], [], []>} : vector<128x8xbf16>, vector<8x8xbf16>, vector<128x8xf32> -> vector<128x8xf32>
    %11 = vector.extract_strided_slice %6 {offsets = [128, 0], sizes = [128, 8], strides = [1, 1]} : vector<1152x8xbf16> to vector<128x8xbf16>
    %c1 = arith.constant 1 : index
    %c0_9 = arith.constant 0 : index
    %c0_10 = arith.constant 0 : index
    %12 = vector.load %arg4[%c1, %c0_9, %c0_10] : memref<9x8x8xbf16, #tpu.memory_space<vmem>>, vector<1x8x8xbf16>
    %13 = vector.shape_cast %12 : vector<1x8x8xbf16> to vector<8x8xbf16>
    %cst_11 = arith.constant dense<0.000000e+00> : vector<128x8xf32>
    %14 = tpu.matmul %11, %13, %cst_11 {dimension_numbers = #tpu.dot_dimension_numbers<[1], [0], [0], [1], [0, 0, 1, 1], [], []>} : vector<128x8xbf16>, vector<8x8xbf16>, vector<128x8xf32> -> vector<128x8xf32>
    %15 = arith.addf %10, %14 : vector<128x8xf32>
    %16 = vector.extract_strided_slice %6 {offsets = [256, 0], sizes = [128, 8], strides = [1, 1]} : vector<1152x8xbf16> to vector<128x8xbf16>
    %c2 = arith.constant 2 : index
    %c0_12 = arith.constant 0 : index
    %c0_13 = arith.constant 0 : index
    %17 = vector.load %arg4[%c2, %c0_12, %c0_13] : memref<9x8x8xbf16, #tpu.memory_space<vmem>>, vector<1x8x8xbf16>
    %18 = vector.shape_cast %17 : vector<1x8x8xbf16> to vector<8x8xbf16>
    %cst_14 = arith.constant dense<0.000000e+00> : vector<128x8xf32>
    %19 = tpu.matmul %16, %18, %cst_14 {dimension_numbers = #tpu.dot_dimension_numbers<[1], [0], [0], [1], [0, 0, 1, 1], [], []>} : vector<128x8xbf16>, vector<8x8xbf16>, vector<128x8xf32> -> vector<128x8xf32>
    %20 = arith.addf %15, %19 : vector<128x8xf32>
    %21 = vector.extract_strided_slice %6 {offsets = [384, 0], sizes = [128, 8], strides = [1, 1]} : vector<1152x8xbf16> to vector<128x8xbf16>
    %c3 = arith.constant 3 : index
    %c0_15 = arith.constant 0 : index
    %c0_16 = arith.constant 0 : index
    %22 = vector.load %arg4[%c3, %c0_15, %c0_16] : memref<9x8x8xbf16, #tpu.memory_space<vmem>>, vector<1x8x8xbf16>
    %23 = vector.shape_cast %22 : vector<1x8x8xbf16> to vector<8x8xbf16>
    %cst_17 = arith.constant dense<0.000000e+00> : vector<128x8xf32>
    %24 = tpu.matmul %21, %23, %cst_17 {dimension_numbers = #tpu.dot_dimension_numbers<[1], [0], [0], [1], [0, 0, 1, 1], [], []>} : vector<128x8xbf16>, vector<8x8xbf16>, vector<128x8xf32> -> vector<128x8xf32>
    %25 = arith.addf %20, %24 : vector<128x8xf32>
    %26 = vector.extract_strided_slice %6 {offsets = [512, 0], sizes = [128, 8], strides = [1, 1]} : vector<1152x8xbf16> to vector<128x8xbf16>
    %c4 = arith.constant 4 : index
    %c0_18 = arith.constant 0 : index
    %c0_19 = arith.constant 0 : index
    %27 = vector.load %arg4[%c4, %c0_18, %c0_19] : memref<9x8x8xbf16, #tpu.memory_space<vmem>>, vector<1x8x8xbf16>
    %28 = vector.shape_cast %27 : vector<1x8x8xbf16> to vector<8x8xbf16>
    %cst_20 = arith.constant dense<0.000000e+00> : vector<128x8xf32>
    %29 = tpu.matmul %26, %28, %cst_20 {dimension_numbers = #tpu.dot_dimension_numbers<[1], [0], [0], [1], [0, 0, 1, 1], [], []>} : vector<128x8xbf16>, vector<8x8xbf16>, vector<128x8xf32> -> vector<128x8xf32>
    %30 = arith.addf %25, %29 : vector<128x8xf32>
    %31 = vector.extract_strided_slice %6 {offsets = [640, 0], sizes = [128, 8], strides = [1, 1]} : vector<1152x8xbf16> to vector<128x8xbf16>
    %c5 = arith.constant 5 : index
    %c0_21 = arith.constant 0 : index
    %c0_22 = arith.constant 0 : index
    %32 = vector.load %arg4[%c5, %c0_21, %c0_22] : memref<9x8x8xbf16, #tpu.memory_space<vmem>>, vector<1x8x8xbf16>
    %33 = vector.shape_cast %32 : vector<1x8x8xbf16> to vector<8x8xbf16>
    %cst_23 = arith.constant dense<0.000000e+00> : vector<128x8xf32>
    %34 = tpu.matmul %31, %33, %cst_23 {dimension_numbers = #tpu.dot_dimension_numbers<[1], [0], [0], [1], [0, 0, 1, 1], [], []>} : vector<128x8xbf16>, vector<8x8xbf16>, vector<128x8xf32> -> vector<128x8xf32>
    %35 = arith.addf %30, %34 : vector<128x8xf32>
    %36 = vector.extract_strided_slice %6 {offsets = [768, 0], sizes = [128, 8], strides = [1, 1]} : vector<1152x8xbf16> to vector<128x8xbf16>
    %c6 = arith.constant 6 : index
    %c0_24 = arith.constant 0 : index
    %c0_25 = arith.constant 0 : index
    %37 = vector.load %arg4[%c6, %c0_24, %c0_25] : memref<9x8x8xbf16, #tpu.memory_space<vmem>>, vector<1x8x8xbf16>
    %38 = vector.shape_cast %37 : vector<1x8x8xbf16> to vector<8x8xbf16>
    %cst_26 = arith.constant dense<0.000000e+00> : vector<128x8xf32>
    %39 = tpu.matmul %36, %38, %cst_26 {dimension_numbers = #tpu.dot_dimension_numbers<[1], [0], [0], [1], [0, 0, 1, 1], [], []>} : vector<128x8xbf16>, vector<8x8xbf16>, vector<128x8xf32> -> vector<128x8xf32>
    %40 = arith.addf %35, %39 : vector<128x8xf32>
    %41 = vector.extract_strided_slice %6 {offsets = [896, 0], sizes = [128, 8], strides = [1, 1]} : vector<1152x8xbf16> to vector<128x8xbf16>
    %c7 = arith.constant 7 : index
    %c0_27 = arith.constant 0 : index
    %c0_28 = arith.constant 0 : index
    %42 = vector.load %arg4[%c7, %c0_27, %c0_28] : memref<9x8x8xbf16, #tpu.memory_space<vmem>>, vector<1x8x8xbf16>
    %43 = vector.shape_cast %42 : vector<1x8x8xbf16> to vector<8x8xbf16>
    %cst_29 = arith.constant dense<0.000000e+00> : vector<128x8xf32>
    %44 = tpu.matmul %41, %43, %cst_29 {dimension_numbers = #tpu.dot_dimension_numbers<[1], [0], [0], [1], [0, 0, 1, 1], [], []>} : vector<128x8xbf16>, vector<8x8xbf16>, vector<128x8xf32> -> vector<128x8xf32>
    %45 = arith.addf %40, %44 : vector<128x8xf32>
    %46 = vector.extract_strided_slice %6 {offsets = [1024, 0], sizes = [128, 8], strides = [1, 1]} : vector<1152x8xbf16> to vector<128x8xbf16>
    %c8 = arith.constant 8 : index
    %c0_30 = arith.constant 0 : index
    %c0_31 = arith.constant 0 : index
    %47 = vector.load %arg4[%c8, %c0_30, %c0_31] : memref<9x8x8xbf16, #tpu.memory_space<vmem>>, vector<1x8x8xbf16>
    %48 = vector.shape_cast %47 : vector<1x8x8xbf16> to vector<8x8xbf16>
    %cst_32 = arith.constant dense<0.000000e+00> : vector<128x8xf32>
    %49 = tpu.matmul %46, %48, %cst_32 {dimension_numbers = #tpu.dot_dimension_numbers<[1], [0], [0], [1], [0, 0, 1, 1], [], []>} : vector<128x8xbf16>, vector<8x8xbf16>, vector<128x8xf32> -> vector<128x8xf32>
    %50 = arith.addf %45, %49 : vector<128x8xf32>
    %c0_33 = arith.constant 0 : index
    %c0_34 = arith.constant 0 : index
    %51 = vector.load %arg5[%c0_33, %c0_34] : memref<1x8xf32, #tpu.memory_space<vmem>>, vector<1x8xf32>
    %52 = vector.broadcast %51 : vector<1x8xf32> to vector<128x8xf32>
    %53 = arith.addf %50, %52 : vector<128x8xf32>
    %cst_35 = arith.constant 0.000000e+00 : f32
    %54 = vector.broadcast %cst_35 : f32 to vector<128x8xf32>
    %55 = arith.maximumf %53, %54 : vector<128x8xf32>
    %56 = arith.truncf %55 : vector<128x8xf32> to vector<128x8xbf16>
    %c0_36 = arith.constant 0 : index
    %c0_37 = arith.constant 0 : index
    %57 = vector.load %arg6[%c0_36, %c0_37] : memref<8x32xbf16, #tpu.memory_space<vmem>>, vector<8x32xbf16>
    %cst_38 = arith.constant dense<0.000000e+00> : vector<128x32xf32>
    %58 = tpu.matmul %56, %57, %cst_38 {dimension_numbers = #tpu.dot_dimension_numbers<[1], [0], [0], [1], [0, 0, 1, 1], [], []>} : vector<128x8xbf16>, vector<8x32xbf16>, vector<128x32xf32> -> vector<128x32xf32>
    %c0_39 = arith.constant 0 : index
    %c0_40 = arith.constant 0 : index
    %59 = vector.load %arg7[%c0_39, %c0_40] : memref<1x32xf32, #tpu.memory_space<vmem>>, vector<1x32xf32>
    %60 = vector.broadcast %59 : vector<1x32xf32> to vector<128x32xf32>
    %61 = arith.addf %58, %60 : vector<128x32xf32>
    %c0_41 = arith.constant 0 : index
    %c0_42 = arith.constant 0 : index
    %62 = vector.load %arg2[%c0_41, %c0_42] : memref<128x4xbf16, #tpu.memory_space<vmem>>, vector<128x4xbf16>
    %c0_43 = arith.constant 0 : index
    %c0_44 = arith.constant 0 : index
    %63 = vector.load %arg8[%c0_43, %c0_44] : memref<4x32xbf16, #tpu.memory_space<vmem>>, vector<4x32xbf16>
    %cst_45 = arith.constant dense<0.000000e+00> : vector<128x32xf32>
    %64 = tpu.matmul %62, %63, %cst_45 {dimension_numbers = #tpu.dot_dimension_numbers<[1], [0], [0], [1], [0, 0, 1, 1], [], []>} : vector<128x4xbf16>, vector<4x32xbf16>, vector<128x32xf32> -> vector<128x32xf32>
    %65 = arith.addf %61, %64 : vector<128x32xf32>
    %cst_46 = arith.constant 0.000000e+00 : f32
    %66 = vector.broadcast %cst_46 : f32 to vector<128x32xf32>
    %67 = arith.maximumf %65, %66 : vector<128x32xf32>
    %c0_47 = arith.constant 0 : index
    %c0_48 = arith.constant 0 : index
    %68 = vector.load %arg9[%c0_47, %c0_48] : memref<128x32xf32, #tpu.memory_space<vmem>>, vector<128x32xf32>
    tpu.vector_store %arg9[%c0_47, %c0_48], %67 {strides = array<i32>} : memref<128x32xf32, #tpu.memory_space<vmem>>, vector<128x32xf32>,
    return
  }
  func.func @transform_0(%arg0: i32) -> (i32, i32, i32) {
    %c0_i32 = arith.constant 0 : i32
    %c0_i32_0 = arith.constant 0 : i32
    %c0_i32_1 = arith.constant 0 : i32
    return %c0_i32, %arg0, %c0_i32_0 : i32, i32, i32
  }
  func.func @transform_1(%arg0: i32) -> (i32, i32) {
    %c0_i32 = arith.constant 0 : i32
    %c0_i32_0 = arith.constant 0 : i32
    return %arg0, %c0_i32 : i32, i32
  }
  func.func @transform_2(%arg0: i32) -> (i32, i32) {
    %c0_i32 = arith.constant 0 : i32
    %c0_i32_0 = arith.constant 0 : i32
    %c0_i32_1 = arith.constant 0 : i32
    return %c0_i32, %c0_i32_0 : i32, i32
  }
  func.func @transform_3(%arg0: i32) -> (i32, i32, i32) {
    %c0_i32 = arith.constant 0 : i32
    %c0_i32_0 = arith.constant 0 : i32
    %c0_i32_1 = arith.constant 0 : i32
    %c0_i32_2 = arith.constant 0 : i32
    return %c0_i32, %c0_i32_0, %c0_i32_1 : i32, i32, i32
  }
  func.func @transform_4(%arg0: i32) -> (i32, i32) {
    %c0_i32 = arith.constant 0 : i32
    %c0_i32_0 = arith.constant 0 : i32
    %c0_i32_1 = arith.constant 0 : i32
    return %c0_i32, %c0_i32_0 : i32, i32
  }
  func.func @transform_5(%arg0: i32) -> (i32, i32) {
    %c0_i32 = arith.constant 0 : i32
    %c0_i32_0 = arith.constant 0 : i32
    %c0_i32_1 = arith.constant 0 : i32
    return %c0_i32, %c0_i32_0 : i32, i32
  }
  func.func @transform_6(%arg0: i32) -> (i32, i32) {
    %c0_i32 = arith.constant 0 : i32
    %c0_i32_0 = arith.constant 0 : i32
    %c0_i32_1 = arith.constant 0 : i32
    return %c0_i32, %c0_i32_0 : i32, i32
  }
  func.func @transform_7(%arg0: i32) -> (i32, i32) {
    %c0_i32 = arith.constant 0 : i32
    %c0_i32_0 = arith.constant 0 : i32
    %c0_i32_1 = arith.constant 0 : i32
    return %c0_i32, %c0_i32_0 : i32, i32
  }
  func.func @transform_8(%arg0: i32) -> (i32, i32) {
    %c0_i32 = arith.constant 0 : i32
    %c0_i32_0 = arith.constant 0 : i32
    return %arg0, %c0_i32 : i32, i32
  }
}

</mosaic_0001>

<llo_original>
// kernel: bottleneck_forward.1
$region0: #{bottleneck_forward.1}
  #allocation0 [shape = 'u32[]', space=smem, size = 0x4, offset = 0x4, fixed_abs, tag = 'smem constant byte address 0x4 - core index']
  #allocation1 [shape = 'u32[144,128]{1,0:T(1,128)}', space=vmem, size = 0x12000, scoped, tag = 'internal scratch']
  %s0 = inlined_call_operand.vmem [shape: bf16[9,128,5], index: 0, kind: input, shape index: {}]
  %s1 = inlined_call_operand.vmem [shape: bf16[128,4], index: 1, kind: input, shape index: {}]
  %s2 = inlined_call_operand.vmem [shape: bf16[5,8], index: 2, kind: input, shape index: {}]
  %s3 = inlined_call_operand.vmem [shape: bf16[9,8,8], index: 3, kind: input, shape index: {}]
  %s4 = inlined_call_operand.vmem [shape: f32[1,8], index: 4, kind: input, shape index: {}]
  %s5 = inlined_call_operand.vmem [shape: bf16[8,32], index: 5, kind: input, shape index: {}]
  %s6 = inlined_call_operand.vmem [shape: f32[1,32], index: 6, kind: input, shape index: {}]
  %s7 = inlined_call_operand.vmem [shape: bf16[4,32], index: 7, kind: input, shape index: {}]
  %s8 = inlined_call_operand.hbm [shape: f32[128,32], index: 8, kind: output, shape index: {}]
  %s9 = sld [smem:[#allocation0]]
  $region42: #{bottleneck_forward.1} parent=0
    _
  %s11 = ssub.s32 1, %s9
  %s12 = scalar_select 0, %s11, %s9
  $region1: #{bottleneck_forward.1} parent=0
    #allocation2 [shape = 'u8[65536]{0}', space=vmem, size = 0x10000, scoped, tag = 'output window, operand 0, single buffered']
    #allocation3 [shape = 's32[1]{0}', space=sflag, size = 0x4, scoped, tag = 'scoped memory for bottleneck_forward.1']
    %13 = vsyncpa [#allocation3], 0
    // Predicated region
    $region2: #{bottleneck_forward.1} parent=1 // pred_check
      _
    $region3: #{bottleneck_forward.1} parent=1 // pred_check_branch
      %15 = sbr.rel (0) target = $region5
    $region4: #{bottleneck_forward.1} parent=1 // pred_region
      _
    $region5: #{bottleneck_forward.1} parent=1 // pred_fallthru
      _
    // Predicated region
    $region6: #{bottleneck_forward.1} parent=1 // pred_check
      _
    $region7: #{bottleneck_forward.1} parent=1 // pred_check_branch
      %17 = sbr.rel (0) target = $region9
    $region8: #{bottleneck_forward.1} parent=1 // pred_region
      _
    $region9: #{bottleneck_forward.1} parent=1 // pred_fallthru
      _
    // Predicated region
    $region10: #{bottleneck_forward.1} parent=1 // pred_check
      _
    $region11: #{bottleneck_forward.1} parent=1 // pred_check_branch
      %19 = sbr.rel (0) target = $region13
    $region12: #{bottleneck_forward.1} parent=1 // pred_region
      _
    $region13: #{bottleneck_forward.1} parent=1 // pred_fallthru
      _
    // Predicated region
    $region14: #{bottleneck_forward.1} parent=1 // pred_check
      _
    $region15: #{bottleneck_forward.1} parent=1 // pred_check_branch
      %21 = sbr.rel (0) target = $region17
    $region16: #{bottleneck_forward.1} parent=1 // pred_region
      _
    $region17: #{bottleneck_forward.1} parent=1 // pred_fallthru
      _
    // Predicated region
    $region18: #{bottleneck_forward.1} parent=1 // pred_check
      _
    $region19: #{bottleneck_forward.1} parent=1 // pred_check_branch
      %23 = sbr.rel (0) target = $region21
    $region20: #{bottleneck_forward.1} parent=1 // pred_region
      _
    $region21: #{bottleneck_forward.1} parent=1 // pred_fallthru
      _
    // Predicated region
    $region22: #{bottleneck_forward.1} parent=1 // pred_check
      _
    $region23: #{bottleneck_forward.1} parent=1 // pred_check_branch
      %25 = sbr.rel (0) target = $region25
    $region24: #{bottleneck_forward.1} parent=1 // pred_region
      _
    $region25: #{bottleneck_forward.1} parent=1 // pred_fallthru
      _
    // Predicated region
    $region26: #{bottleneck_forward.1} parent=1 // pred_check
      _
    $region27: #{bottleneck_forward.1} parent=1 // pred_check_branch
      %27 = sbr.rel (0) target = $region29
    $region28: #{bottleneck_forward.1} parent=1 // pred_region
      _
    $region29: #{bottleneck_forward.1} parent=1 // pred_fallthru
      _
    // Predicated region
    $region30: #{bottleneck_forward.1} parent=1 // pred_check
      _
    $region31: #{bottleneck_forward.1} parent=1 // pred_check_branch
      %29 = sbr.rel (0) target = $region33
    $region32: #{bottleneck_forward.1} parent=1 // pred_region
      _
    $region33: #{bottleneck_forward.1} parent=1 // pred_fallthru
      _
    %v31 = vld [vmem:[%s0] sm:$0xf]
    %v32 = vld [vmem:[%s0 + $0x4] sm:$0xf]
    %v33 = vld [vmem:[%s0 + $0x8] sm:$0xf]
    %v34 = vld [vmem:[%s0 + $0xc] sm:$0xf]
    %v35 = vld [vmem:[%s0 + $0x10] sm:$0xf]
    %v36 = vld [vmem:[%s0 + $0x14] sm:$0xf]
    %v37 = vld [vmem:[%s0 + $0x18] sm:$0xf]
    %v38 = vld [vmem:[%s0 + $0x1c] sm:$0xf]
    %v39 = vld [vmem:[%s0 + $0x20] sm:$0xf]
    %v40 = vld [vmem:[%s0 + $0x24] sm:$0xf]
    %v41 = vld [vmem:[%s0 + $0x28] sm:$0xf]
    %v42 = vld [vmem:[%s0 + $0x2c] sm:$0xf]
    %v43 = vld [vmem:[%s0 + $0x30] sm:$0xf]
    %v44 = vld [vmem:[%s0 + $0x34] sm:$0xf]
    %v45 = vld [vmem:[%s0 + $0x38] sm:$0xf]
    %v46 = vld [vmem:[%s0 + $0x3c] sm:$0xf]
    %v47 = vld [vmem:[%s0 + $0x40] sm:$0xf]
    %v48 = vld [vmem:[%s0 + $0x44] sm:$0xf]
    %v49 = vld [vmem:[%s0 + $0x48] sm:$0xf]
    %v50 = vld [vmem:[%s0 + $0x4c] sm:$0xf]
    %v51 = vld [vmem:[%s0 + $0x50] sm:$0xf]
    %v52 = vld [vmem:[%s0 + $0x54] sm:$0xf]
    %v53 = vld [vmem:[%s0 + $0x58] sm:$0xf]
    %v54 = vld [vmem:[%s0 + $0x5c] sm:$0xf]
    %v55 = vld [vmem:[%s0 + $0x60] sm:$0xf]
    %v56 = vld [vmem:[%s0 + $0x64] sm:$0xf]
    %v57 = vld [vmem:[%s0 + $0x68] sm:$0xf]
    %v58 = vld [vmem:[%s0 + $0x6c] sm:$0xf]
    %v59 = vld [vmem:[%s0 + $0x70] sm:$0xf]
    %v60 = vld [vmem:[%s0 + $0x74] sm:$0xf]
    %v61 = vld [vmem:[%s0 + $0x78] sm:$0xf]
    %v62 = vld [vmem:[%s0 + $0x7c] sm:$0xf]
    %v63 = vld [vmem:[%s0 + $0x80] sm:$0xf]
    %v64 = vld [vmem:[%s0 + $0x84] sm:$0xf]
    %v65 = vld [vmem:[%s0 + $0x88] sm:$0xf]
    %v66 = vld [vmem:[%s0 + $0x8c] sm:$0xf]
    %v67 = vld [vmem:[%s0 + $0x90] sm:$0xf]
    %v68 = vld [vmem:[%s0 + $0x94] sm:$0xf]
    %v69 = vld [vmem:[%s0 + $0x98] sm:$0xf]
    %v70 = vld [vmem:[%s0 + $0x9c] sm:$0xf]
    %v71 = vld [vmem:[%s0 + $0xa0] sm:$0xf]
    %v72 = vld [vmem:[%s0 + $0xa4] sm:$0xf]
    %v73 = vld [vmem:[%s0 + $0xa8] sm:$0xf]
    %v74 = vld [vmem:[%s0 + $0xac] sm:$0xf]
    %v75 = vld [vmem:[%s0 + $0xb0] sm:$0xf]
    %v76 = vld [vmem:[%s0 + $0xb4] sm:$0xf]
    %v77 = vld [vmem:[%s0 + $0xb8] sm:$0xf]
    %v78 = vld [vmem:[%s0 + $0xbc] sm:$0xf]
    %v79 = vld [vmem:[%s0 + $0xc0] sm:$0xf]
    %v80 = vld [vmem:[%s0 + $0xc4] sm:$0xf]
    %v81 = vld [vmem:[%s0 + $0xc8] sm:$0xf]
    %v82 = vld [vmem:[%s0 + $0xcc] sm:$0xf]
    %v83 = vld [vmem:[%s0 + $0xd0] sm:$0xf]
    %v84 = vld [vmem:[%s0 + $0xd4] sm:$0xf]
    %v85 = vld [vmem:[%s0 + $0xd8] sm:$0xf]
    %v86 = vld [vmem:[%s0 + $0xdc] sm:$0xf]
    %v87 = vld [vmem:[%s0 + $0xe0] sm:$0xf]
    %v88 = vld [vmem:[%s0 + $0xe4] sm:$0xf]
    %v89 = vld [vmem:[%s0 + $0xe8] sm:$0xf]
    %v90 = vld [vmem:[%s0 + $0xec] sm:$0xf]
    %v91 = vld [vmem:[%s0 + $0xf0] sm:$0xf]
    %v92 = vld [vmem:[%s0 + $0xf4] sm:$0xf]
    %v93 = vld [vmem:[%s0 + $0xf8] sm:$0xf]
    %v94 = vld [vmem:[%s0 + $0xfc] sm:$0xf]
    %v95 = vld [vmem:[%s0 + $0x100] sm:$0xf]
    %v96 = vld [vmem:[%s0 + $0x104] sm:$0xf]
    %v97 = vld [vmem:[%s0 + $0x108] sm:$0xf]
    %v98 = vld [vmem:[%s0 + $0x10c] sm:$0xf]
    %v99 = vld [vmem:[%s0 + $0x110] sm:$0xf]
    %v100 = vld [vmem:[%s0 + $0x114] sm:$0xf]
    %v101 = vld [vmem:[%s0 + $0x118] sm:$0xf]
    %v102 = vld [vmem:[%s0 + $0x11c] sm:$0xf]
    %v103 = vld [vmem:[%s0 + $0x120] sm:$0xf]
    %v104 = vld [vmem:[%s0 + $0x124] sm:$0xf]
    %v105 = vld [vmem:[%s0 + $0x128] sm:$0xf]
    %v106 = vld [vmem:[%s0 + $0x12c] sm:$0xf]
    %v107 = vld [vmem:[%s0 + $0x130] sm:$0xf]
    %v108 = vld [vmem:[%s0 + $0x134] sm:$0xf]
    %v109 = vld [vmem:[%s0 + $0x138] sm:$0xf]
    %v110 = vld [vmem:[%s0 + $0x13c] sm:$0xf]
    %v111 = vld [vmem:[%s0 + $0x140] sm:$0xf]
    %v112 = vld [vmem:[%s0 + $0x144] sm:$0xf]
    %v113 = vld [vmem:[%s0 + $0x148] sm:$0xf]
    %v114 = vld [vmem:[%s0 + $0x14c] sm:$0xf]
    %v115 = vld [vmem:[%s0 + $0x150] sm:$0xf]
    %v116 = vld [vmem:[%s0 + $0x154] sm:$0xf]
    %v117 = vld [vmem:[%s0 + $0x158] sm:$0xf]
    %v118 = vld [vmem:[%s0 + $0x15c] sm:$0xf]
    %v119 = vld [vmem:[%s0 + $0x160] sm:$0xf]
    %v120 = vld [vmem:[%s0 + $0x164] sm:$0xf]
    %v121 = vld [vmem:[%s0 + $0x168] sm:$0xf]
    %v122 = vld [vmem:[%s0 + $0x16c] sm:$0xf]
    %v123 = vld [vmem:[%s0 + $0x170] sm:$0xf]
    %v124 = vld [vmem:[%s0 + $0x174] sm:$0xf]
    %v125 = vld [vmem:[%s0 + $0x178] sm:$0xf]
    %v126 = vld [vmem:[%s0 + $0x17c] sm:$0xf]
    %v127 = vld [vmem:[%s0 + $0x180] sm:$0xf]
    %v128 = vld [vmem:[%s0 + $0x184] sm:$0xf]
    %v129 = vld [vmem:[%s0 + $0x188] sm:$0xf]
    %v130 = vld [vmem:[%s0 + $0x18c] sm:$0xf]
    %v131 = vld [vmem:[%s0 + $0x190] sm:$0xf]
    %v132 = vld [vmem:[%s0 + $0x194] sm:$0xf]
    %v133 = vld [vmem:[%s0 + $0x198] sm:$0xf]
    %v134 = vld [vmem:[%s0 + $0x19c] sm:$0xf]
    %v135 = vld [vmem:[%s0 + $0x1a0] sm:$0xf]
    %v136 = vld [vmem:[%s0 + $0x1a4] sm:$0xf]
    %v137 = vld [vmem:[%s0 + $0x1a8] sm:$0xf]
    %v138 = vld [vmem:[%s0 + $0x1ac] sm:$0xf]
    %v139 = vld [vmem:[%s0 + $0x1b0] sm:$0xf]
    %v140 = vld [vmem:[%s0 + $0x1b4] sm:$0xf]
    %v141 = vld [vmem:[%s0 + $0x1b8] sm:$0xf]
    %v142 = vld [vmem:[%s0 + $0x1bc] sm:$0xf]
    %v143 = vld [vmem:[%s0 + $0x1c0] sm:$0xf]
    %v144 = vld [vmem:[%s0 + $0x1c4] sm:$0xf]
    %v145 = vld [vmem:[%s0 + $0x1c8] sm:$0xf]
    %v146 = vld [vmem:[%s0 + $0x1cc] sm:$0xf]
    %v147 = vld [vmem:[%s0 + $0x1d0] sm:$0xf]
    %v148 = vld [vmem:[%s0 + $0x1d4] sm:$0xf]
    %v149 = vld [vmem:[%s0 + $0x1d8] sm:$0xf]
    %v150 = vld [vmem:[%s0 + $0x1dc] sm:$0xf]
    %v151 = vld [vmem:[%s0 + $0x1e0] sm:$0xf]
    %v152 = vld [vmem:[%s0 + $0x1e4] sm:$0xf]
    %v153 = vld [vmem:[%s0 + $0x1e8] sm:$0xf]
    %v154 = vld [vmem:[%s0 + $0x1ec] sm:$0xf]
    %v155 = vld [vmem:[%s0 + $0x1f0] sm:$0xf]
    %v156 = vld [vmem:[%s0 + $0x1f4] sm:$0xf]
    %v157 = vld [vmem:[%s0 + $0x1f8] sm:$0xf]
    %v158 = vld [vmem:[%s0 + $0x1fc] sm:$0xf]
    %v159 = vld [vmem:[%s0 + $0x200] sm:$0xf]
    %v160 = vld [vmem:[%s0 + $0x204] sm:$0xf]
    %v161 = vld [vmem:[%s0 + $0x208] sm:$0xf]
    %v162 = vld [vmem:[%s0 + $0x20c] sm:$0xf]
    %v163 = vld [vmem:[%s0 + $0x210] sm:$0xf]
    %v164 = vld [vmem:[%s0 + $0x214] sm:$0xf]
    %v165 = vld [vmem:[%s0 + $0x218] sm:$0xf]
    %v166 = vld [vmem:[%s0 + $0x21c] sm:$0xf]
    %v167 = vld [vmem:[%s0 + $0x220] sm:$0xf]
    %v168 = vld [vmem:[%s0 + $0x224] sm:$0xf]
    %v169 = vld [vmem:[%s0 + $0x228] sm:$0xf]
    %v170 = vld [vmem:[%s0 + $0x22c] sm:$0xf]
    %v171 = vld [vmem:[%s0 + $0x230] sm:$0xf]
    %v172 = vld [vmem:[%s0 + $0x234] sm:$0xf]
    %v173 = vld [vmem:[%s0 + $0x238] sm:$0xf]
    %v174 = vld [vmem:[%s0 + $0x23c] sm:$0xf]
    %v175 = vld [vmem:[%s2] sm:$0x7]
    %v320 = vunpack.c.l.b16 %v31
    %v321 = vunpack.c.l.b16 %v32
    %v322 = vunpack.c.l.b16 %v33
    %v323 = vunpack.c.l.b16 %v34
    %v324 = vunpack.c.l.b16 %v35
    %v325 = vunpack.c.l.b16 %v36
    %v326 = vunpack.c.l.b16 %v37
    %v327 = vunpack.c.l.b16 %v38
    %v328 = vunpack.c.l.b16 %v39
    %v329 = vunpack.c.l.b16 %v40
    %v330 = vunpack.c.l.b16 %v41
    %v331 = vunpack.c.l.b16 %v42
    %v332 = vunpack.c.l.b16 %v43
    %v333 = vunpack.c.l.b16 %v44
    %v334 = vunpack.c.l.b16 %v45
    %v335 = vunpack.c.l.b16 %v46
    %v336 = vunpack.c.l.b16 %v47
    %v337 = vunpack.c.l.b16 %v48
    %v338 = vunpack.c.l.b16 %v49
    %v339 = vunpack.c.l.b16 %v50
    %v340 = vunpack.c.l.b16 %v51
    %v341 = vunpack.c.l.b16 %v52
    %v342 = vunpack.c.l.b16 %v53
    %v343 = vunpack.c.l.b16 %v54
    %v344 = vunpack.c.l.b16 %v55
    %v345 = vunpack.c.l.b16 %v56
    %v346 = vunpack.c.l.b16 %v57
    %v347 = vunpack.c.l.b16 %v58
    %v348 = vunpack.c.l.b16 %v59
    %v349 = vunpack.c.l.b16 %v60
    %v350 = vunpack.c.l.b16 %v61
    %v351 = vunpack.c.l.b16 %v62
    %v352 = vunpack.c.l.b16 %v63
    %v353 = vunpack.c.l.b16 %v64
    %v354 = vunpack.c.l.b16 %v65
    %v355 = vunpack.c.l.b16 %v66
    %v356 = vunpack.c.l.b16 %v67
    %v357 = vunpack.c.l.b16 %v68
    %v358 = vunpack.c.l.b16 %v69
    %v359 = vunpack.c.l.b16 %v70
    %v360 = vunpack.c.l.b16 %v71
    %v361 = vunpack.c.l.b16 %v72
    %v362 = vunpack.c.l.b16 %v73
    %v363 = vunpack.c.l.b16 %v74
    %v364 = vunpack.c.l.b16 %v75
    %v365 = vunpack.c.l.b16 %v76
    %v366 = vunpack.c.l.b16 %v77
    %v367 = vunpack.c.l.b16 %v78
    %v368 = vunpack.c.l.b16 %v79
    %v369 = vunpack.c.l.b16 %v80
    %v370 = vunpack.c.l.b16 %v81
    %v371 = vunpack.c.l.b16 %v82
    %v372 = vunpack.c.l.b16 %v83
    %v373 = vunpack.c.l.b16 %v84
    %v374 = vunpack.c.l.b16 %v85
    %v375 = vunpack.c.l.b16 %v86
    %v376 = vunpack.c.l.b16 %v87
    %v377 = vunpack.c.l.b16 %v88
    %v378 = vunpack.c.l.b16 %v89
    %v379 = vunpack.c.l.b16 %v90
    %v380 = vunpack.c.l.b16 %v91
    %v381 = vunpack.c.l.b16 %v92
    %v382 = vunpack.c.l.b16 %v93
    %v383 = vunpack.c.l.b16 %v94
    %v384 = vunpack.c.l.b16 %v95
    %v385 = vunpack.c.l.b16 %v96
    %v386 = vunpack.c.l.b16 %v97
    %v387 = vunpack.c.l.b16 %v98
    %v388 = vunpack.c.l.b16 %v99
    %v389 = vunpack.c.l.b16 %v100
    %v390 = vunpack.c.l.b16 %v101
    %v391 = vunpack.c.l.b16 %v102
    %v392 = vunpack.c.l.b16 %v103
    %v393 = vunpack.c.l.b16 %v104
    %v394 = vunpack.c.l.b16 %v105
    %v395 = vunpack.c.l.b16 %v106
    %v396 = vunpack.c.l.b16 %v107
    %v397 = vunpack.c.l.b16 %v108
    %v398 = vunpack.c.l.b16 %v109
    %v399 = vunpack.c.l.b16 %v110
    %v400 = vunpack.c.l.b16 %v111
    %v401 = vunpack.c.l.b16 %v112
    %v402 = vunpack.c.l.b16 %v113
    %v403 = vunpack.c.l.b16 %v114
    %v404 = vunpack.c.l.b16 %v115
    %v405 = vunpack.c.l.b16 %v116
    %v406 = vunpack.c.l.b16 %v117
    %v407 = vunpack.c.l.b16 %v118
    %v408 = vunpack.c.l.b16 %v119
    %v409 = vunpack.c.l.b16 %v120
    %v410 = vunpack.c.l.b16 %v121
    %v411 = vunpack.c.l.b16 %v122
    %v412 = vunpack.c.l.b16 %v123
    %v413 = vunpack.c.l.b16 %v124
    %v414 = vunpack.c.l.b16 %v125
    %v415 = vunpack.c.l.b16 %v126
    %v416 = vunpack.c.l.b16 %v127
    %v417 = vunpack.c.l.b16 %v128
    %v418 = vunpack.c.l.b16 %v129
    %v419 = vunpack.c.l.b16 %v130
    %v420 = vunpack.c.l.b16 %v131
    %v421 = vunpack.c.l.b16 %v132
    %v422 = vunpack.c.l.b16 %v133
    %v423 = vunpack.c.l.b16 %v134
    %v424 = vunpack.c.l.b16 %v135
    %v425 = vunpack.c.l.b16 %v136
    %v426 = vunpack.c.l.b16 %v137
    %v427 = vunpack.c.l.b16 %v138
    %v428 = vunpack.c.l.b16 %v139
    %v429 = vunpack.c.l.b16 %v140
    %v430 = vunpack.c.l.b16 %v141
    %v431 = vunpack.c.l.b16 %v142
    %v432 = vunpack.c.l.b16 %v143
    %v433 = vunpack.c.l.b16 %v144
    %v434 = vunpack.c.l.b16 %v145
    %v435 = vunpack.c.l.b16 %v146
    %v436 = vunpack.c.l.b16 %v147
    %v437 = vunpack.c.l.b16 %v148
    %v438 = vunpack.c.l.b16 %v149
    %v439 = vunpack.c.l.b16 %v150
    %v440 = vunpack.c.l.b16 %v151
    %v441 = vunpack.c.l.b16 %v152
    %v442 = vunpack.c.l.b16 %v153
    %v443 = vunpack.c.l.b16 %v154
    %v444 = vunpack.c.l.b16 %v155
    %v445 = vunpack.c.l.b16 %v156
    %v446 = vunpack.c.l.b16 %v157
    %v447 = vunpack.c.l.b16 %v158
    %v448 = vunpack.c.l.b16 %v159
    %v449 = vunpack.c.l.b16 %v160
    %v450 = vunpack.c.l.b16 %v161
    %v451 = vunpack.c.l.b16 %v162
    %v452 = vunpack.c.l.b16 %v163
    %v453 = vunpack.c.l.b16 %v164
    %v454 = vunpack.c.l.b16 %v165
    %v455 = vunpack.c.l.b16 %v166
    %v456 = vunpack.c.l.b16 %v167
    %v457 = vunpack.c.l.b16 %v168
    %v458 = vunpack.c.l.b16 %v169
    %v459 = vunpack.c.l.b16 %v170
    %v460 = vunpack.c.l.b16 %v171
    %v461 = vunpack.c.l.b16 %v172
    %v462 = vunpack.c.l.b16 %v173
    %v463 = vunpack.c.l.b16 %v174
    %v464 = vpack.c.b16 %v321, %v320
    %v465 = vpack.c.b16 %v323, %v322
    %v466 = vpack.c.b16 %v325, %v324
    %v467 = vpack.c.b16 %v327, %v326
    %v468 = vpack.c.b16 %v329, %v328
    %v469 = vpack.c.b16 %v331, %v330
    %v470 = vpack.c.b16 %v333, %v332
    %v471 = vpack.c.b16 %v335, %v334
    %v472 = vpack.c.b16 %v337, %v336
    %v473 = vpack.c.b16 %v339, %v338
    %v474 = vpack.c.b16 %v341, %v340
    %v475 = vpack.c.b16 %v343, %v342
    %v476 = vpack.c.b16 %v345, %v344
    %v477 = vpack.c.b16 %v347, %v346
    %v478 = vpack.c.b16 %v349, %v348
    %v479 = vpack.c.b16 %v351, %v350
    %v480 = vpack.c.b16 %v353, %v352
    %v481 = vpack.c.b16 %v355, %v354
    %v482 = vpack.c.b16 %v357, %v356
    %v483 = vpack.c.b16 %v359, %v358
    %v484 = vpack.c.b16 %v361, %v360
    %v485 = vpack.c.b16 %v363, %v362
    %v486 = vpack.c.b16 %v365, %v364
    %v487 = vpack.c.b16 %v367, %v366
    %v488 = vpack.c.b16 %v369, %v368
    %v489 = vpack.c.b16 %v371, %v370
    %v490 = vpack.c.b16 %v373, %v372
    %v491 = vpack.c.b16 %v375, %v374
    %v492 = vpack.c.b16 %v377, %v376
    %v493 = vpack.c.b16 %v379, %v378
    %v494 = vpack.c.b16 %v381, %v380
    %v495 = vpack.c.b16 %v383, %v382
    %v496 = vpack.c.b16 %v385, %v384
    %v497 = vpack.c.b16 %v387, %v386
    %v498 = vpack.c.b16 %v389, %v388
    %v499 = vpack.c.b16 %v391, %v390
    %v500 = vpack.c.b16 %v393, %v392
    %v501 = vpack.c.b16 %v395, %v394
    %v502 = vpack.c.b16 %v397, %v396
    %v503 = vpack.c.b16 %v399, %v398
    %v504 = vpack.c.b16 %v401, %v400
    %v505 = vpack.c.b16 %v403, %v402
    %v506 = vpack.c.b16 %v405, %v404
    %v507 = vpack.c.b16 %v407, %v406
    %v508 = vpack.c.b16 %v409, %v408
    %v509 = vpack.c.b16 %v411, %v410
    %v510 = vpack.c.b16 %v413, %v412
    %v511 = vpack.c.b16 %v415, %v414
    %v512 = vpack.c.b16 %v417, %v416
    %v513 = vpack.c.b16 %v419, %v418
    %v514 = vpack.c.b16 %v421, %v420
    %v515 = vpack.c.b16 %v423, %v422
    %v516 = vpack.c.b16 %v425, %v424
    %v517 = vpack.c.b16 %v427, %v426
    %v518 = vpack.c.b16 %v429, %v428
    %v519 = vpack.c.b16 %v431, %v430
    %v520 = vpack.c.b16 %v433, %v432
    %v521 = vpack.c.b16 %v435, %v434
    %v522 = vpack.c.b16 %v437, %v436
    %v523 = vpack.c.b16 %v439, %v438
    %v524 = vpack.c.b16 %v441, %v440
    %v525 = vpack.c.b16 %v443, %v442
    %v526 = vpack.c.b16 %v445, %v444
    %v527 = vpack.c.b16 %v447, %v446
    %v528 = vpack.c.b16 %v449, %v448
    %v529 = vpack.c.b16 %v451, %v450
    %v530 = vpack.c.b16 %v453, %v452
    %v531 = vpack.c.b16 %v455, %v454
    %v532 = vpack.c.b16 %v457, %v456
    %v533 = vpack.c.b16 %v459, %v458
    %v534 = vpack.c.b16 %v461, %v460
    %v535 = vpack.c.b16 %v463, %v462
    %vm536 = vcmask 39936
    %v538 = vsel %vm536, %v464, 0
    %v541 = vsel %vm536, %v465, 0
    %v544 = vsel %vm536, %v466, 0
    %v547 = vsel %vm536, %v467, 0
    %v550 = vsel %vm536, %v468, 0
    %v553 = vsel %vm536, %v469, 0
    %v556 = vsel %vm536, %v470, 0
    %v559 = vsel %vm536, %v471, 0
    %v562 = vsel %vm536, %v472, 0
    %v565 = vsel %vm536, %v473, 0
    %v568 = vsel %vm536, %v474, 0
    %v571 = vsel %vm536, %v475, 0
    %v574 = vsel %vm536, %v476, 0
    %v577 = vsel %vm536, %v477, 0
    %v580 = vsel %vm536, %v478, 0
    %v583 = vsel %vm536, %v479, 0
    %v586 = vsel %vm536, %v480, 0
    %v589 = vsel %vm536, %v481, 0
    %v592 = vsel %vm536, %v482, 0
    %v595 = vsel %vm536, %v483, 0
    %v598 = vsel %vm536, %v484, 0
    %v601 = vsel %vm536, %v485, 0
    %v604 = vsel %vm536, %v486, 0
    %v607 = vsel %vm536, %v487, 0
    %v610 = vsel %vm536, %v488, 0
    %v613 = vsel %vm536, %v489, 0
    %v616 = vsel %vm536, %v490, 0
    %v619 = vsel %vm536, %v491, 0
    %v622 = vsel %vm536, %v492, 0
    %v625 = vsel %vm536, %v493, 0
    %v628 = vsel %vm536, %v494, 0
    %v631 = vsel %vm536, %v495, 0
    %v634 = vsel %vm536, %v496, 0
    %v637 = vsel %vm536, %v497, 0
    %v640 = vsel %vm536, %v498, 0
    %v643 = vsel %vm536, %v499, 0
    %v646 = vsel %vm536, %v500, 0
    %v649 = vsel %vm536, %v501, 0
    %v652 = vsel %vm536, %v502, 0
    %v655 = vsel %vm536, %v503, 0
    %v658 = vsel %vm536, %v504, 0
    %v661 = vsel %vm536, %v505, 0
    %v664 = vsel %vm536, %v506, 0
    %v667 = vsel %vm536, %v507, 0
    %v670 = vsel %vm536, %v508, 0
    %v673 = vsel %vm536, %v509, 0
    %v676 = vsel %vm536, %v510, 0
    %v679 = vsel %vm536, %v511, 0
    %v682 = vsel %vm536, %v512, 0
    %v685 = vsel %vm536, %v513, 0
    %v688 = vsel %vm536, %v514, 0
    %v691 = vsel %vm536, %v515, 0
    %v694 = vsel %vm536, %v516, 0
    %v697 = vsel %vm536, %v517, 0
    %v700 = vsel %vm536, %v518, 0
    %v703 = vsel %vm536, %v519, 0
    %v706 = vsel %vm536, %v520, 0
    %v709 = vsel %vm536, %v521, 0
    %v712 = vsel %vm536, %v522, 0
    %v715 = vsel %vm536, %v523, 0
    %v718 = vsel %vm536, %v524, 0
    %v721 = vsel %vm536, %v525, 0
    %v724 = vsel %vm536, %v526, 0
    %v727 = vsel %vm536, %v527, 0
    %v730 = vsel %vm536, %v528, 0
    %v733 = vsel %vm536, %v529, 0
    %v736 = vsel %vm536, %v530, 0
    %v739 = vsel %vm536, %v531, 0
    %v742 = vsel %vm536, %v532, 0
    %v745 = vsel %vm536, %v533, 0
    %v748 = vsel %vm536, %v534, 0
    %v751 = vsel %vm536, %v535, 0
    %vm753 = vcmask 1041408
    %vm754 = vcmask 1042432
    %v755 = vsel %vm753, 4294967295, 65535
    %v756 = vsel %vm754, %v755, 0
    %v758 = vand.u32 %v175, %v756
    %760 = vmatprep.subr.bf16.mxu0 0
    %761 = vmatpush1.bf16.msra.mxu0 %v758
    %762 = vmatprep.subr.bf16.mxu0 0
    %763 = vmatpush1.bf16.msra.mxu0 0
    %764 = vmatprep.subr.bf16.mxu0 0
    %765 = vmatpush1.bf16.msra.mxu0 0
    %766 = vmatprep.subr.bf16.mxu0 0
    %767 = vmatpush1.bf16.msra.mxu0 0
    %768 = vmatprep.subr.bf16.mxu0 0
    %769 = vmatpush1.bf16.msra.mxu0 0
    %770 = vmatprep.subr.bf16.mxu0 0
    %771 = vmatpush1.bf16.msra.mxu0 0
    %772 = vmatprep.subr.bf16.mxu0 0
    %773 = vmatpush1.bf16.msra.mxu0 0
    %774 = vmatprep.subr.bf16.mxu0 0
    %775 = vmatpush1.bf16.msra.mxu0 0
    %776 = vmatprep.subr.bf16.mxu0 0
    %777 = vmatpush1.bf16.msra.mxu0 0
    %778 = vmatprep.subr.bf16.mxu0 0
    %779 = vmatpush1.bf16.msra.mxu0 0
    %780 = vmatprep.subr.bf16.mxu0 0
    %781 = vmatpush1.bf16.msra.mxu0 0
    %782 = vmatprep.subr.bf16.mxu0 0
    %783 = vmatpush1.bf16.msra.mxu0 0
    %784 = vmatprep.subr.bf16.mxu0 0
    %785 = vmatpush1.bf16.msra.mxu0 0
    %786 = vmatprep.subr.bf16.mxu0 0
    %787 = vmatpush1.bf16.msra.mxu0 0
    %788 = vmatprep.subr.bf16.mxu0 0
    %789 = vmatpush1.bf16.msra.mxu0 0
    %790 = vmatprep.subr.bf16.mxu0 0
    %791 = vmatpush1.bf16.msra.mxu0 0
    %792 = vmatprep.mubr.bf16.mxu0 0
    %793 = vmatmul.mubr.bf16.gmra.mrb[0].mxu0 %v538
    %v794 = vpop.f32.mrb[0].mxu0
    %v795 = vadd.f32 0.0, %v794
    %v796 = vpop.f32.mrb[0].mxu0
    %v797 = vpop.f32.mrb[0].mxu0
    %v798 = vadd.f32 0.0, %v797
    %v799 = vpop.f32.mrb[0].mxu0
    %800 = vmatprep.mubr.bf16.mxu0 0
    %801 = vmatmul.mubr.bf16.gmra.mrb[0].mxu0 %v541
    %v802 = vpop.f32.mrb[0].mxu0
    %v803 = vadd.f32 0.0, %v802
    %v804 = vpop.f32.mrb[0].mxu0
    %v805 = vpop.f32.mrb[0].mxu0
    %v806 = vadd.f32 0.0, %v805
    %v807 = vpop.f32.mrb[0].mxu0
    %808 = vmatprep.mubr.bf16.mxu0 0
    %809 = vmatmul.mubr.bf16.gmra.mrb[0].mxu0 %v544
    %v810 = vpop.f32.mrb[0].mxu0
    %v811 = vadd.f32 0.0, %v810
    %v812 = vpop.f32.mrb[0].mxu0
    %v813 = vpop.f32.mrb[0].mxu0
    %v814 = vadd.f32 0.0, %v813
    %v815 = vpop.f32.mrb[0].mxu0
    %816 = vmatprep.mubr.bf16.mxu0 0
    %817 = vmatmul.mubr.bf16.gmra.mrb[0].mxu0 %v547
    %v818 = vpop.f32.mrb[0].mxu0
    %v819 = vadd.f32 0.0, %v818
    %v820 = vpop.f32.mrb[0].mxu0
    %v821 = vpop.f32.mrb[0].mxu0
    %v822 = vadd.f32 0.0, %v821
    %v823 = vpop.f32.mrb[0].mxu0
    %824 = vmatprep.mubr.bf16.mxu0 0
    %825 = vmatmul.mubr.bf16.gmra.mrb[0].mxu0 %v550
    %v826 = vpop.f32.mrb[0].mxu0
    %v827 = vadd.f32 0.0, %v826
    %v828 = vpop.f32.mrb[0].mxu0
    %v829 = vpop.f32.mrb[0].mxu0
    %v830 = vadd.f32 0.0, %v829
    %v831 = vpop.f32.mrb[0].mxu0
    %832 = vmatprep.mubr.bf16.mxu0 0
    %833 = vmatmul.mubr.bf16.gmra.mrb[0].mxu0 %v553
    %v834 = vpop.f32.mrb[0].mxu0
    %v835 = vadd.f32 0.0, %v834
    %v836 = vpop.f32.mrb[0].mxu0
    %v837 = vpop.f32.mrb[0].mxu0
    %v838 = vadd.f32 0.0, %v837
    %v839 = vpop.f32.mrb[0].mxu0
    %840 = vmatprep.mubr.bf16.mxu0 0
    %841 = vmatmul.mubr.bf16.gmra.mrb[0].mxu0 %v556
    %v842 = vpop.f32.mrb[0].mxu0
    %v843 = vadd.f32 0.0, %v842
    %v844 = vpop.f32.mrb[0].mxu0
    %v845 = vpop.f32.mrb[0].mxu0
    %v846 = vadd.f32 0.0, %v845
    %v847 = vpop.f32.mrb[0].mxu0
    %848 = vmatprep.mubr.bf16.mxu0 0
    %849 = vmatmul.mubr.bf16.gmra.mrb[0].mxu0 %v559
    %v850 = vpop.f32.mrb[0].mxu0
    %v851 = vadd.f32 0.0, %v850
    %v852 = vpop.f32.mrb[0].mxu0
    %v853 = vpop.f32.mrb[0].mxu0
    %v854 = vadd.f32 0.0, %v853
    %v855 = vpop.f32.mrb[0].mxu0
    %856 = vmatprep.mubr.bf16.mxu0 0
    %857 = vmatmul.mubr.bf16.gmra.mrb[0].mxu0 %v562
    %v858 = vpop.f32.mrb[0].mxu0
    %v859 = vadd.f32 0.0, %v858
    %v860 = vpop.f32.mrb[0].mxu0
    %v861 = vpop.f32.mrb[0].mxu0
    %v862 = vadd.f32 0.0, %v861
    %v863 = vpop.f32.mrb[0].mxu0
    %864 = vmatprep.mubr.bf16.mxu0 0
    %865 = vmatmul.mubr.bf16.gmra.mrb[0].mxu0 %v565
    %v866 = vpop.f32.mrb[0].mxu0
    %v867 = vadd.f32 0.0, %v866
    %v868 = vpop.f32.mrb[0].mxu0
    %v869 = vpop.f32.mrb[0].mxu0
    %v870 = vadd.f32 0.0, %v869
    %v871 = vpop.f32.mrb[0].mxu0
    %872 = vmatprep.mubr.bf16.mxu0 0
    %873 = vmatmul.mubr.bf16.gmra.mrb[0].mxu0 %v568
    %v874 = vpop.f32.mrb[0].mxu0
    %v875 = vadd.f32 0.0, %v874
    %v876 = vpop.f32.mrb[0].mxu0
    %v877 = vpop.f32.mrb[0].mxu0
    %v878 = vadd.f32 0.0, %v877
    %v879 = vpop.f32.mrb[0].mxu0
    %880 = vmatprep.mubr.bf16.mxu0 0
    %881 = vmatmul.mubr.bf16.gmra.mrb[0].mxu0 %v571
    %v882 = vpop.f32.mrb[0].mxu0
    %v883 = vadd.f32 0.0, %v882
    %v884 = vpop.f32.mrb[0].mxu0
    %v885 = vpop.f32.mrb[0].mxu0
    %v886 = vadd.f32 0.0, %v885
    %v887 = vpop.f32.mrb[0].mxu0
    %888 = vmatprep.mubr.bf16.mxu0 0
    %889 = vmatmul.mubr.bf16.gmra.mrb[0].mxu0 %v574
    %v890 = vpop.f32.mrb[0].mxu0
    %v891 = vadd.f32 0.0, %v890
    %v892 = vpop.f32.mrb[0].mxu0
    %v893 = vpop.f32.mrb[0].mxu0
    %v894 = vadd.f32 0.0, %v893
    %v895 = vpop.f32.mrb[0].mxu0
    %896 = vmatprep.mubr.bf16.mxu0 0
    %897 = vmatmul.mubr.bf16.gmra.mrb[0].mxu0 %v577
    %v898 = vpop.f32.mrb[0].mxu0
    %v899 = vadd.f32 0.0, %v898
    %v900 = vpop.f32.mrb[0].mxu0
    %v901 = vpop.f32.mrb[0].mxu0
    %v902 = vadd.f32 0.0, %v901
    %v903 = vpop.f32.mrb[0].mxu0
    %904 = vmatprep.mubr.bf16.mxu0 0
    %905 = vmatmul.mubr.bf16.gmra.mrb[0].mxu0 %v580
    %v906 = vpop.f32.mrb[0].mxu0
    %v907 = vadd.f32 0.0, %v906
    %v908 = vpop.f32.mrb[0].mxu0
    %v909 = vpop.f32.mrb[0].mxu0
    %v910 = vadd.f32 0.0, %v909
    %v911 = vpop.f32.mrb[0].mxu0
    %912 = vmatprep.mubr.bf16.mxu0 0
    %913 = vmatmul.mubr.bf16.gmra.mrb[0].mxu0 %v583
    %v914 = vpop.f32.mrb[0].mxu0
    %v915 = vadd.f32 0.0, %v914
    %v916 = vpop.f32.mrb[0].mxu0
    %v917 = vpop.f32.mrb[0].mxu0
    %v918 = vadd.f32 0.0, %v917
    %v919 = vpop.f32.mrb[0].mxu0
    %920 = vmatprep.mubr.bf16.mxu0 0
    %921 = vmatmul.mubr.bf16.gmra.mrb[0].mxu0 %v586
    %v922 = vpop.f32.mrb[0].mxu0
    %v923 = vadd.f32 0.0, %v922
    %v924 = vpop.f32.mrb[0].mxu0
    %v925 = vpop.f32.mrb[0].mxu0
    %v926 = vadd.f32 0.0, %v925
    %v927 = vpop.f32.mrb[0].mxu0
    %928 = vmatprep.mubr.bf16.mxu0 0
    %929 = vmatmul.mubr.bf16.gmra.mrb[0].mxu0 %v589
    %v930 = vpop.f32.mrb[0].mxu0
    %v931 = vadd.f32 0.0, %v930
    %v932 = vpop.f32.mrb[0].mxu0
    %v933 = vpop.f32.mrb[0].mxu0
    %v934 = vadd.f32 0.0, %v933
    %v935 = vpop.f32.mrb[0].mxu0
    %936 = vmatprep.mubr.bf16.mxu0 0
    %937 = vmatmul.mubr.bf16.gmra.mrb[0].mxu0 %v592
    %v938 = vpop.f32.mrb[0].mxu0
    %v939 = vadd.f32 0.0, %v938
    %v940 = vpop.f32.mrb[0].mxu0
    %v941 = vpop.f32.mrb[0].mxu0
    %v942 = vadd.f32 0.0, %v941
    %v943 = vpop.f32.mrb[0].mxu0
    %944 = vmatprep.mubr.bf16.mxu0 0
    %945 = vmatmul.mubr.bf16.gmra.mrb[0].mxu0 %v595
    %v946 = vpop.f32.mrb[0].mxu0
    %v947 = vadd.f32 0.0, %v946
    %v948 = vpop.f32.mrb[0].mxu0
    %v949 = vpop.f32.mrb[0].mxu0
    %v950 = vadd.f32 0.0, %v949
    %v951 = vpop.f32.mrb[0].mxu0
    %952 = vmatprep.mubr.bf16.mxu0 0
    %953 = vmatmul.mubr.bf16.gmra.mrb[0].mxu0 %v598
    %v954 = vpop.f32.mrb[0].mxu0
    %v955 = vadd.f32 0.0, %v954
    %v956 = vpop.f32.mrb[0].mxu0
    %v957 = vpop.f32.mrb[0].mxu0
    %v958 = vadd.f32 0.0, %v957
    %v959 = vpop.f32.mrb[0].mxu0
    %960 = vmatprep.mubr.bf16.mxu0 0
    %961 = vmatmul.mubr.bf16.gmra.mrb[0].mxu0 %v601
    %v962 = vpop.f32.mrb[0].mxu0
    %v963 = vadd.f32 0.0, %v962
    %v964 = vpop.f32.mrb[0].mxu0
    %v965 = vpop.f32.mrb[0].mxu0
    %v966 = vadd.f32 0.0, %v965
    %v967 = vpop.f32.mrb[0].mxu0
    %968 = vmatprep.mubr.bf16.mxu0 0
    %969 = vmatmul.mubr.bf16.gmra.mrb[0].mxu0 %v604
    %v970 = vpop.f32.mrb[0].mxu0
    %v971 = vadd.f32 0.0, %v970
    %v972 = vpop.f32.mrb[0].mxu0
    %v973 = vpop.f32.mrb[0].mxu0
    %v974 = vadd.f32 0.0, %v973
    %v975 = vpop.f32.mrb[0].mxu0
    %976 = vmatprep.mubr.bf16.mxu0 0
    %977 = vmatmul.mubr.bf16.gmra.mrb[0].mxu0 %v607
    %v978 = vpop.f32.mrb[0].mxu0
    %v979 = vadd.f32 0.0, %v978
    %v980 = vpop.f32.mrb[0].mxu0
    %v981 = vpop.f32.mrb[0].mxu0
    %v982 = vadd.f32 0.0, %v981
    %v983 = vpop.f32.mrb[0].mxu0
    %984 = vmatprep.mubr.bf16.mxu0 0
    %985 = vmatmul.mubr.bf16.gmra.mrb[0].mxu0 %v610
    %v986 = vpop.f32.mrb[0].mxu0
    %v987 = vadd.f32 0.0, %v986
    %v988 = vpop.f32.mrb[0].mxu0
    %v989 = vpop.f32.mrb[0].mxu0
    %v990 = vadd.f32 0.0, %v989
    %v991 = vpop.f32.mrb[0].mxu0
    %992 = vmatprep.mubr.bf16.mxu0 0
    %993 = vmatmul.mubr.bf16.gmra.mrb[0].mxu0 %v613
    %v994 = vpop.f32.mrb[0].mxu0
    %v995 = vadd.f32 0.0, %v994
    %v996 = vpop.f32.mrb[0].mxu0
    %v997 = vpop.f32.mrb[0].mxu0
    %v998 = vadd.f32 0.0, %v997
    %v999 = vpop.f32.mrb[0].mxu0
    %1000 = vmatprep.mubr.bf16.mxu0 0
    %1001 = vmatmul.mubr.bf16.gmra.mrb[0].mxu0 %v616
    %v1002 = vpop.f32.mrb[0].mxu0
    %v1003 = vadd.f32 0.0, %v1002
    %v1004 = vpop.f32.mrb[0].mxu0
    %v1005 = vpop.f32.mrb[0].mxu0
    %v1006 = vadd.f32 0.0, %v1005
    %v1007 = vpop.f32.mrb[0].mxu0
    %1008 = vmatprep.mubr.bf16.mxu0 0
    %1009 = vmatmul.mubr.bf16.gmra.mrb[0].mxu0 %v619
    %v1010 = vpop.f32.mrb[0].mxu0
    %v1011 = vadd.f32 0.0, %v1010
    %v1012 = vpop.f32.mrb[0].mxu0
    %v1013 = vpop.f32.mrb[0].mxu0
    %v1014 = vadd.f32 0.0, %v1013
    %v1015 = vpop.f32.mrb[0].mxu0
    %1016 = vmatprep.mubr.bf16.mxu0 0
    %1017 = vmatmul.mubr.bf16.gmra.mrb[0].mxu0 %v622
    %v1018 = vpop.f32.mrb[0].mxu0
    %v1019 = vadd.f32 0.0, %v1018
    %v1020 = vpop.f32.mrb[0].mxu0
    %v1021 = vpop.f32.mrb[0].mxu0
    %v1022 = vadd.f32 0.0, %v1021
    %v1023 = vpop.f32.mrb[0].mxu0
    %1024 = vmatprep.mubr.bf16.mxu0 0
    %1025 = vmatmul.mubr.bf16.gmra.mrb[0].mxu0 %v625
    %v1026 = vpop.f32.mrb[0].mxu0
    %v1027 = vadd.f32 0.0, %v1026
    %v1028 = vpop.f32.mrb[0].mxu0
    %v1029 = vpop.f32.mrb[0].mxu0
    %v1030 = vadd.f32 0.0, %v1029
    %v1031 = vpop.f32.mrb[0].mxu0
    %1032 = vmatprep.mubr.bf16.mxu0 0
    %1033 = vmatmul.mubr.bf16.gmra.mrb[0].mxu0 %v628
    %v1034 = vpop.f32.mrb[0].mxu0
    %v1035 = vadd.f32 0.0, %v1034
    %v1036 = vpop.f32.mrb[0].mxu0
    %v1037 = vpop.f32.mrb[0].mxu0
    %v1038 = vadd.f32 0.0, %v1037
    %v1039 = vpop.f32.mrb[0].mxu0
    %1040 = vmatprep.mubr.bf16.mxu0 0
    %1041 = vmatmul.mubr.bf16.gmra.mrb[0].mxu0 %v631
    %v1042 = vpop.f32.mrb[0].mxu0
    %v1043 = vadd.f32 0.0, %v1042
    %v1044 = vpop.f32.mrb[0].mxu0
    %v1045 = vpop.f32.mrb[0].mxu0
    %v1046 = vadd.f32 0.0, %v1045
    %v1047 = vpop.f32.mrb[0].mxu0
    %1048 = vmatprep.mubr.bf16.mxu0 0
    %1049 = vmatmul.mubr.bf16.gmra.mrb[0].mxu0 %v634
    %v1050 = vpop.f32.mrb[0].mxu0
    %v1051 = vadd.f32 0.0, %v1050
    %v1052 = vpop.f32.mrb[0].mxu0
    %v1053 = vpop.f32.mrb[0].mxu0
    %v1054 = vadd.f32 0.0, %v1053
    %v1055 = vpop.f32.mrb[0].mxu0
    %1056 = vmatprep.mubr.bf16.mxu0 0
    %1057 = vmatmul.mubr.bf16.gmra.mrb[0].mxu0 %v637
    %v1058 = vpop.f32.mrb[0].mxu0
    %v1059 = vadd.f32 0.0, %v1058
    %v1060 = vpop.f32.mrb[0].mxu0
    %v1061 = vpop.f32.mrb[0].mxu0
    %v1062 = vadd.f32 0.0, %v1061
    %v1063 = vpop.f32.mrb[0].mxu0
    %1064 = vmatprep.mubr.bf16.mxu0 0
    %1065 = vmatmul.mubr.bf16.gmra.mrb[0].mxu0 %v640
    %v1066 = vpop.f32.mrb[0].mxu0
    %v1067 = vadd.f32 0.0, %v1066
    %v1068 = vpop.f32.mrb[0].mxu0
    %v1069 = vpop.f32.mrb[0].mxu0
    %v1070 = vadd.f32 0.0, %v1069
    %v1071 = vpop.f32.mrb[0].mxu0
    %1072 = vmatprep.mubr.bf16.mxu0 0
    %1073 = vmatmul.mubr.bf16.gmra.mrb[0].mxu0 %v643
    %v1074 = vpop.f32.mrb[0].mxu0
    %v1075 = vadd.f32 0.0, %v1074
    %v1076 = vpop.f32.mrb[0].mxu0
    %v1077 = vpop.f32.mrb[0].mxu0
    %v1078 = vadd.f32 0.0, %v1077
    %v1079 = vpop.f32.mrb[0].mxu0
    %1080 = vmatprep.mubr.bf16.mxu0 0
    %1081 = vmatmul.mubr.bf16.gmra.mrb[0].mxu0 %v646
    %v1082 = vpop.f32.mrb[0].mxu0
    %v1083 = vadd.f32 0.0, %v1082
    %v1084 = vpop.f32.mrb[0].mxu0
    %v1085 = vpop.f32.mrb[0].mxu0
    %v1086 = vadd.f32 0.0, %v1085
    %v1087 = vpop.f32.mrb[0].mxu0
    %1088 = vmatprep.mubr.bf16.mxu0 0
    %1089 = vmatmul.mubr.bf16.gmra.mrb[0].mxu0 %v649
    %v1090 = vpop.f32.mrb[0].mxu0
    %v1091 = vadd.f32 0.0, %v1090
    %v1092 = vpop.f32.mrb[0].mxu0
    %v1093 = vpop.f32.mrb[0].mxu0
    %v1094 = vadd.f32 0.0, %v1093
    %v1095 = vpop.f32.mrb[0].mxu0
    %1096 = vmatprep.mubr.bf16.mxu0 0
    %1097 = vmatmul.mubr.bf16.gmra.mrb[0].mxu0 %v652
    %v1098 = vpop.f32.mrb[0].mxu0
    %v1099 = vadd.f32 0.0, %v1098
    %v1100 = vpop.f32.mrb[0].mxu0
    %v1101 = vpop.f32.mrb[0].mxu0
    %v1102 = vadd.f32 0.0, %v1101
    %v1103 = vpop.f32.mrb[0].mxu0
    %1104 = vmatprep.mubr.bf16.mxu0 0
    %1105 = vmatmul.mubr.bf16.gmra.mrb[0].mxu0 %v655
    %v1106 = vpop.f32.mrb[0].mxu0
    %v1107 = vadd.f32 0.0, %v1106
    %v1108 = vpop.f32.mrb[0].mxu0
    %v1109 = vpop.f32.mrb[0].mxu0
    %v1110 = vadd.f32 0.0, %v1109
    %v1111 = vpop.f32.mrb[0].mxu0
    %1112 = vmatprep.mubr.bf16.mxu0 0
    %1113 = vmatmul.mubr.bf16.gmra.mrb[0].mxu0 %v658
    %v1114 = vpop.f32.mrb[0].mxu0
    %v1115 = vadd.f32 0.0, %v1114
    %v1116 = vpop.f32.mrb[0].mxu0
    %v1117 = vpop.f32.mrb[0].mxu0
    %v1118 = vadd.f32 0.0, %v1117
    %v1119 = vpop.f32.mrb[0].mxu0
    %1120 = vmatprep.mubr.bf16.mxu0 0
    %1121 = vmatmul.mubr.bf16.gmra.mrb[0].mxu0 %v661
    %v1122 = vpop.f32.mrb[0].mxu0
    %v1123 = vadd.f32 0.0, %v1122
    %v1124 = vpop.f32.mrb[0].mxu0
    %v1125 = vpop.f32.mrb[0].mxu0
    %v1126 = vadd.f32 0.0, %v1125
    %v1127 = vpop.f32.mrb[0].mxu0
    %1128 = vmatprep.mubr.bf16.mxu0 0
    %1129 = vmatmul.mubr.bf16.gmra.mrb[0].mxu0 %v664
    %v1130 = vpop.f32.mrb[0].mxu0
    %v1131 = vadd.f32 0.0, %v1130
    %v1132 = vpop.f32.mrb[0].mxu0
    %v1133 = vpop.f32.mrb[0].mxu0
    %v1134 = vadd.f32 0.0, %v1133
    %v1135 = vpop.f32.mrb[0].mxu0
    %1136 = vmatprep.mubr.bf16.mxu0 0
    %1137 = vmatmul.mubr.bf16.gmra.mrb[0].mxu0 %v667
    %v1138 = vpop.f32.mrb[0].mxu0
    %v1139 = vadd.f32 0.0, %v1138
    %v1140 = vpop.f32.mrb[0].mxu0
    %v1141 = vpop.f32.mrb[0].mxu0
    %v1142 = vadd.f32 0.0, %v1141
    %v1143 = vpop.f32.mrb[0].mxu0
    %1144 = vmatprep.mubr.bf16.mxu0 0
    %1145 = vmatmul.mubr.bf16.gmra.mrb[0].mxu0 %v670
    %v1146 = vpop.f32.mrb[0].mxu0
    %v1147 = vadd.f32 0.0, %v1146
    %v1148 = vpop.f32.mrb[0].mxu0
    %v1149 = vpop.f32.mrb[0].mxu0
    %v1150 = vadd.f32 0.0, %v1149
    %v1151 = vpop.f32.mrb[0].mxu0
    %1152 = vmatprep.mubr.bf16.mxu0 0
    %1153 = vmatmul.mubr.bf16.gmra.mrb[0].mxu0 %v673
    %v1154 = vpop.f32.mrb[0].mxu0
    %v1155 = vadd.f32 0.0, %v1154
    %v1156 = vpop.f32.mrb[0].mxu0
    %v1157 = vpop.f32.mrb[0].mxu0
    %v1158 = vadd.f32 0.0, %v1157
    %v1159 = vpop.f32.mrb[0].mxu0
    %1160 = vmatprep.mubr.bf16.mxu0 0
    %1161 = vmatmul.mubr.bf16.gmra.mrb[0].mxu0 %v676
    %v1162 = vpop.f32.mrb[0].mxu0
    %v1163 = vadd.f32 0.0, %v1162
    %v1164 = vpop.f32.mrb[0].mxu0
    %v1165 = vpop.f32.mrb[0].mxu0
    %v1166 = vadd.f32 0.0, %v1165
    %v1167 = vpop.f32.mrb[0].mxu0
    %1168 = vmatprep.mubr.bf16.mxu0 0
    %1169 = vmatmul.mubr.bf16.gmra.mrb[0].mxu0 %v679
    %v1170 = vpop.f32.mrb[0].mxu0
    %v1171 = vadd.f32 0.0, %v1170
    %v1172 = vpop.f32.mrb[0].mxu0
    %v1173 = vpop.f32.mrb[0].mxu0
    %v1174 = vadd.f32 0.0, %v1173
    %v1175 = vpop.f32.mrb[0].mxu0
    %1176 = vmatprep.mubr.bf16.mxu0 0
    %1177 = vmatmul.mubr.bf16.gmra.mrb[0].mxu0 %v682
    %v1178 = vpop.f32.mrb[0].mxu0
    %v1179 = vadd.f32 0.0, %v1178
    %v1180 = vpop.f32.mrb[0].mxu0
    %v1181 = vpop.f32.mrb[0].mxu0
    %v1182 = vadd.f32 0.0, %v1181
    %v1183 = vpop.f32.mrb[0].mxu0
    %1184 = vmatprep.mubr.bf16.mxu0 0
    %1185 = vmatmul.mubr.bf16.gmra.mrb[0].mxu0 %v685
    %v1186 = vpop.f32.mrb[0].mxu0
    %v1187 = vadd.f32 0.0, %v1186
    %v1188 = vpop.f32.mrb[0].mxu0
    %v1189 = vpop.f32.mrb[0].mxu0
    %v1190 = vadd.f32 0.0, %v1189
    %v1191 = vpop.f32.mrb[0].mxu0
    %1192 = vmatprep.mubr.bf16.mxu0 0
    %1193 = vmatmul.mubr.bf16.gmra.mrb[0].mxu0 %v688
    %v1194 = vpop.f32.mrb[0].mxu0
    %v1195 = vadd.f32 0.0, %v1194
    %v1196 = vpop.f32.mrb[0].mxu0
    %v1197 = vpop.f32.mrb[0].mxu0
    %v1198 = vadd.f32 0.0, %v1197
    %v1199 = vpop.f32.mrb[0].mxu0
    %1200 = vmatprep.mubr.bf16.mxu0 0
    %1201 = vmatmul.mubr.bf16.gmra.mrb[0].mxu0 %v691
    %v1202 = vpop.f32.mrb[0].mxu0
    %v1203 = vadd.f32 0.0, %v1202
    %v1204 = vpop.f32.mrb[0].mxu0
    %v1205 = vpop.f32.mrb[0].mxu0
    %v1206 = vadd.f32 0.0, %v1205
    %v1207 = vpop.f32.mrb[0].mxu0
    %1208 = vmatprep.mubr.bf16.mxu0 0
    %1209 = vmatmul.mubr.bf16.gmra.mrb[0].mxu0 %v694
    %v1210 = vpop.f32.mrb[0].mxu0
    %v1211 = vadd.f32 0.0, %v1210
    %v1212 = vpop.f32.mrb[0].mxu0
    %v1213 = vpop.f32.mrb[0].mxu0
    %v1214 = vadd.f32 0.0, %v1213
    %v1215 = vpop.f32.mrb[0].mxu0
    %1216 = vmatprep.mubr.bf16.mxu0 0
    %1217 = vmatmul.mubr.bf16.gmra.mrb[0].mxu0 %v697
    %v1218 = vpop.f32.mrb[0].mxu0
    %v1219 = vadd.f32 0.0, %v1218
    %v1220 = vpop.f32.mrb[0].mxu0
    %v1221 = vpop.f32.mrb[0].mxu0
    %v1222 = vadd.f32 0.0, %v1221
    %v1223 = vpop.f32.mrb[0].mxu0
    %1224 = vmatprep.mubr.bf16.mxu0 0
    %1225 = vmatmul.mubr.bf16.gmra.mrb[0].mxu0 %v700
    %v1226 = vpop.f32.mrb[0].mxu0
    %v1227 = vadd.f32 0.0, %v1226
    %v1228 = vpop.f32.mrb[0].mxu0
    %v1229 = vpop.f32.mrb[0].mxu0
    %v1230 = vadd.f32 0.0, %v1229
    %v1231 = vpop.f32.mrb[0].mxu0
    %1232 = vmatprep.mubr.bf16.mxu0 0
    %1233 = vmatmul.mubr.bf16.gmra.mrb[0].mxu0 %v703
    %v1234 = vpop.f32.mrb[0].mxu0
    %v1235 = vadd.f32 0.0, %v1234
    %v1236 = vpop.f32.mrb[0].mxu0
    %v1237 = vpop.f32.mrb[0].mxu0
    %v1238 = vadd.f32 0.0, %v1237
    %v1239 = vpop.f32.mrb[0].mxu0
    %1240 = vmatprep.mubr.bf16.mxu0 0
    %1241 = vmatmul.mubr.bf16.gmra.mrb[0].mxu0 %v706
    %v1242 = vpop.f32.mrb[0].mxu0
    %v1243 = vadd.f32 0.0, %v1242
    %v1244 = vpop.f32.mrb[0].mxu0
    %v1245 = vpop.f32.mrb[0].mxu0
    %v1246 = vadd.f32 0.0, %v1245
    %v1247 = vpop.f32.mrb[0].mxu0
    %1248 = vmatprep.mubr.bf16.mxu0 0
    %1249 = vmatmul.mubr.bf16.gmra.mrb[0].mxu0 %v709
    %v1250 = vpop.f32.mrb[0].mxu0
    %v1251 = vadd.f32 0.0, %v1250
    %v1252 = vpop.f32.mrb[0].mxu0
    %v1253 = vpop.f32.mrb[0].mxu0
    %v1254 = vadd.f32 0.0, %v1253
    %v1255 = vpop.f32.mrb[0].mxu0
    %1256 = vmatprep.mubr.bf16.mxu0 0
    %1257 = vmatmul.mubr.bf16.gmra.mrb[0].mxu0 %v712
    %v1258 = vpop.f32.mrb[0].mxu0
    %v1259 = vadd.f32 0.0, %v1258
    %v1260 = vpop.f32.mrb[0].mxu0
    %v1261 = vpop.f32.mrb[0].mxu0
    %v1262 = vadd.f32 0.0, %v1261
    %v1263 = vpop.f32.mrb[0].mxu0
    %1264 = vmatprep.mubr.bf16.mxu0 0
    %1265 = vmatmul.mubr.bf16.gmra.mrb[0].mxu0 %v715
    %v1266 = vpop.f32.mrb[0].mxu0
    %v1267 = vadd.f32 0.0, %v1266
    %v1268 = vpop.f32.mrb[0].mxu0
    %v1269 = vpop.f32.mrb[0].mxu0
    %v1270 = vadd.f32 0.0, %v1269
    %v1271 = vpop.f32.mrb[0].mxu0
    %1272 = vmatprep.mubr.bf16.mxu0 0
    %1273 = vmatmul.mubr.bf16.gmra.mrb[0].mxu0 %v718
    %v1274 = vpop.f32.mrb[0].mxu0
    %v1275 = vadd.f32 0.0, %v1274
    %v1276 = vpop.f32.mrb[0].mxu0
    %v1277 = vpop.f32.mrb[0].mxu0
    %v1278 = vadd.f32 0.0, %v1277
    %v1279 = vpop.f32.mrb[0].mxu0
    %1280 = vmatprep.mubr.bf16.mxu0 0
    %1281 = vmatmul.mubr.bf16.gmra.mrb[0].mxu0 %v721
    %v1282 = vpop.f32.mrb[0].mxu0
    %v1283 = vadd.f32 0.0, %v1282
    %v1284 = vpop.f32.mrb[0].mxu0
    %v1285 = vpop.f32.mrb[0].mxu0
    %v1286 = vadd.f32 0.0, %v1285
    %v1287 = vpop.f32.mrb[0].mxu0
    %1288 = vmatprep.mubr.bf16.mxu0 0
    %1289 = vmatmul.mubr.bf16.gmra.mrb[0].mxu0 %v724
    %v1290 = vpop.f32.mrb[0].mxu0
    %v1291 = vadd.f32 0.0, %v1290
    %v1292 = vpop.f32.mrb[0].mxu0
    %v1293 = vpop.f32.mrb[0].mxu0
    %v1294 = vadd.f32 0.0, %v1293
    %v1295 = vpop.f32.mrb[0].mxu0
    %1296 = vmatprep.mubr.bf16.mxu0 0
    %1297 = vmatmul.mubr.bf16.gmra.mrb[0].mxu0 %v727
    %v1298 = vpop.f32.mrb[0].mxu0
    %v1299 = vadd.f32 0.0, %v1298
    %v1300 = vpop.f32.mrb[0].mxu0
    %v1301 = vpop.f32.mrb[0].mxu0
    %v1302 = vadd.f32 0.0, %v1301
    %v1303 = vpop.f32.mrb[0].mxu0
    %1304 = vmatprep.mubr.bf16.mxu0 0
    %1305 = vmatmul.mubr.bf16.gmra.mrb[0].mxu0 %v730
    %v1306 = vpop.f32.mrb[0].mxu0
    %v1307 = vadd.f32 0.0, %v1306
    %v1308 = vpop.f32.mrb[0].mxu0
    %v1309 = vpop.f32.mrb[0].mxu0
    %v1310 = vadd.f32 0.0, %v1309
    %v1311 = vpop.f32.mrb[0].mxu0
    %1312 = vmatprep.mubr.bf16.mxu0 0
    %1313 = vmatmul.mubr.bf16.gmra.mrb[0].mxu0 %v733
    %v1314 = vpop.f32.mrb[0].mxu0
    %v1315 = vadd.f32 0.0, %v1314
    %v1316 = vpop.f32.mrb[0].mxu0
    %v1317 = vpop.f32.mrb[0].mxu0
    %v1318 = vadd.f32 0.0, %v1317
    %v1319 = vpop.f32.mrb[0].mxu0
    %1320 = vmatprep.mubr.bf16.mxu0 0
    %1321 = vmatmul.mubr.bf16.gmra.mrb[0].mxu0 %v736
    %v1322 = vpop.f32.mrb[0].mxu0
    %v1323 = vadd.f32 0.0, %v1322
    %v1324 = vpop.f32.mrb[0].mxu0
    %v1325 = vpop.f32.mrb[0].mxu0
    %v1326 = vadd.f32 0.0, %v1325
    %v1327 = vpop.f32.mrb[0].mxu0
    %1328 = vmatprep.mubr.bf16.mxu0 0
    %1329 = vmatmul.mubr.bf16.gmra.mrb[0].mxu0 %v739
    %v1330 = vpop.f32.mrb[0].mxu0
    %v1331 = vadd.f32 0.0, %v1330
    %v1332 = vpop.f32.mrb[0].mxu0
    %v1333 = vpop.f32.mrb[0].mxu0
    %v1334 = vadd.f32 0.0, %v1333
    %v1335 = vpop.f32.mrb[0].mxu0
    %1336 = vmatprep.mubr.bf16.mxu0 0
    %1337 = vmatmul.mubr.bf16.gmra.mrb[0].mxu0 %v742
    %v1338 = vpop.f32.mrb[0].mxu0
    %v1339 = vadd.f32 0.0, %v1338
    %v1340 = vpop.f32.mrb[0].mxu0
    %v1341 = vpop.f32.mrb[0].mxu0
    %v1342 = vadd.f32 0.0, %v1341
    %v1343 = vpop.f32.mrb[0].mxu0
    %1344 = vmatprep.mubr.bf16.mxu0 0
    %1345 = vmatmul.mubr.bf16.gmra.mrb[0].mxu0 %v745
    %v1346 = vpop.f32.mrb[0].mxu0
    %v1347 = vadd.f32 0.0, %v1346
    %v1348 = vpop.f32.mrb[0].mxu0
    %v1349 = vpop.f32.mrb[0].mxu0
    %v1350 = vadd.f32 0.0, %v1349
    %v1351 = vpop.f32.mrb[0].mxu0
    %1352 = vmatprep.mubr.bf16.mxu0 0
    %1353 = vmatmul.mubr.bf16.gmra.mrb[0].mxu0 %v748
    %v1354 = vpop.f32.mrb[0].mxu0
    %v1355 = vadd.f32 0.0, %v1354
    %v1356 = vpop.f32.mrb[0].mxu0
    %v1357 = vpop.f32.mrb[0].mxu0
    %v1358 = vadd.f32 0.0, %v1357
    %v1359 = vpop.f32.mrb[0].mxu0
    %1360 = vmatprep.mubr.bf16.mxu0 0
    %1361 = vmatmul.mubr.bf16.gmra.mrb[0].mxu0 %v751
    %v1362 = vpop.f32.mrb[0].mxu0
    %v1363 = vadd.f32 0.0, %v1362
    %v1364 = vpop.f32.mrb[0].mxu0
    %v1365 = vpop.f32.mrb[0].mxu0
    %v1366 = vadd.f32 0.0, %v1365
    %v1367 = vpop.f32.mrb[0].mxu0
    %1368 = vdwg.mxu0
    %v1369 = vmax.f32 %v795, 0.0
    %v1370 = vmax.f32 %v798, 0.0
    %v1371 = vmax.f32 %v803, 0.0
    %v1372 = vmax.f32 %v806, 0.0
    %v1373 = vmax.f32 %v811, 0.0
    %v1374 = vmax.f32 %v814, 0.0
    %v1375 = vmax.f32 %v819, 0.0
    %v1376 = vmax.f32 %v822, 0.0
    %v1377 = vmax.f32 %v827, 0.0
    %v1378 = vmax.f32 %v830, 0.0
    %v1379 = vmax.f32 %v835, 0.0
    %v1380 = vmax.f32 %v838, 0.0
    %v1381 = vmax.f32 %v843, 0.0
    %v1382 = vmax.f32 %v846, 0.0
    %v1383 = vmax.f32 %v851, 0.0
    %v1384 = vmax.f32 %v854, 0.0
    %v1385 = vmax.f32 %v859, 0.0
    %v1386 = vmax.f32 %v862, 0.0
    %v1387 = vmax.f32 %v867, 0.0
    %v1388 = vmax.f32 %v870, 0.0
    %v1389 = vmax.f32 %v875, 0.0
    %v1390 = vmax.f32 %v878, 0.0
    %v1391 = vmax.f32 %v883, 0.0
    %v1392 = vmax.f32 %v886, 0.0
    %v1393 = vmax.f32 %v891, 0.0
    %v1394 = vmax.f32 %v894, 0.0
    %v1395 = vmax.f32 %v899, 0.0
    %v1396 = vmax.f32 %v902, 0.0
    %v1397 = vmax.f32 %v907, 0.0
    %v1398 = vmax.f32 %v910, 0.0
    %v1399 = vmax.f32 %v915, 0.0
    %v1400 = vmax.f32 %v918, 0.0
    %v1401 = vmax.f32 %v923, 0.0
    %v1402 = vmax.f32 %v926, 0.0
    %v1403 = vmax.f32 %v931, 0.0
    %v1404 = vmax.f32 %v934, 0.0
    %v1405 = vmax.f32 %v939, 0.0
    %v1406 = vmax.f32 %v942, 0.0
    %v1407 = vmax.f32 %v947, 0.0
    %v1408 = vmax.f32 %v950, 0.0
    %v1409 = vmax.f32 %v955, 0.0
    %v1410 = vmax.f32 %v958, 0.0
    %v1411 = vmax.f32 %v963, 0.0
    %v1412 = vmax.f32 %v966, 0.0
    %v1413 = vmax.f32 %v971, 0.0
    %v1414 = vmax.f32 %v974, 0.0
    %v1415 = vmax.f32 %v979, 0.0
    %v1416 = vmax.f32 %v982, 0.0
    %v1417 = vmax.f32 %v987, 0.0
    %v1418 = vmax.f32 %v990, 0.0
    %v1419 = vmax.f32 %v995, 0.0
    %v1420 = vmax.f32 %v998, 0.0
    %v1421 = vmax.f32 %v1003, 0.0
    %v1422 = vmax.f32 %v1006, 0.0
    %v1423 = vmax.f32 %v1011, 0.0
    %v1424 = vmax.f32 %v1014, 0.0
    %v1425 = vmax.f32 %v1019, 0.0
    %v1426 = vmax.f32 %v1022, 0.0
    %v1427 = vmax.f32 %v1027, 0.0
    %v1428 = vmax.f32 %v1030, 0.0
    %v1429 = vmax.f32 %v1035, 0.0
    %v1430 = vmax.f32 %v1038, 0.0
    %v1431 = vmax.f32 %v1043, 0.0
    %v1432 = vmax.f32 %v1046, 0.0
    %v1433 = vmax.f32 %v1051, 0.0
    %v1434 = vmax.f32 %v1054, 0.0
    %v1435 = vmax.f32 %v1059, 0.0
    %v1436 = vmax.f32 %v1062, 0.0
    %v1437 = vmax.f32 %v1067, 0.0
    %v1438 = vmax.f32 %v1070, 0.0
    %v1439 = vmax.f32 %v1075, 0.0
    %v1440 = vmax.f32 %v1078, 0.0
    %v1441 = vmax.f32 %v1083, 0.0
    %v1442 = vmax.f32 %v1086, 0.0
    %v1443 = vmax.f32 %v1091, 0.0
    %v1444 = vmax.f32 %v1094, 0.0
    %v1445 = vmax.f32 %v1099, 0.0
    %v1446 = vmax.f32 %v1102, 0.0
    %v1447 = vmax.f32 %v1107, 0.0
    %v1448 = vmax.f32 %v1110, 0.0
    %v1449 = vmax.f32 %v1115, 0.0
    %v1450 = vmax.f32 %v1118, 0.0
    %v1451 = vmax.f32 %v1123, 0.0
    %v1452 = vmax.f32 %v1126, 0.0
    %v1453 = vmax.f32 %v1131, 0.0
    %v1454 = vmax.f32 %v1134, 0.0
    %v1455 = vmax.f32 %v1139, 0.0
    %v1456 = vmax.f32 %v1142, 0.0
    %v1457 = vmax.f32 %v1147, 0.0
    %v1458 = vmax.f32 %v1150, 0.0
    %v1459 = vmax.f32 %v1155, 0.0
    %v1460 = vmax.f32 %v1158, 0.0
    %v1461 = vmax.f32 %v1163, 0.0
    %v1462 = vmax.f32 %v1166, 0.0
    %v1463 = vmax.f32 %v1171, 0.0
    %v1464 = vmax.f32 %v1174, 0.0
    %v1465 = vmax.f32 %v1179, 0.0
    %v1466 = vmax.f32 %v1182, 0.0
    %v1467 = vmax.f32 %v1187, 0.0
    %v1468 = vmax.f32 %v1190, 0.0
    %v1469 = vmax.f32 %v1195, 0.0
    %v1470 = vmax.f32 %v1198, 0.0
    %v1471 = vmax.f32 %v1203, 0.0
    %v1472 = vmax.f32 %v1206, 0.0
    %v1473 = vmax.f32 %v1211, 0.0
    %v1474 = vmax.f32 %v1214, 0.0
    %v1475 = vmax.f32 %v1219, 0.0
    %v1476 = vmax.f32 %v1222, 0.0
    %v1477 = vmax.f32 %v1227, 0.0
    %v1478 = vmax.f32 %v1230, 0.0
    %v1479 = vmax.f32 %v1235, 0.0
    %v1480 = vmax.f32 %v1238, 0.0
    %v1481 = vmax.f32 %v1243, 0.0
    %v1482 = vmax.f32 %v1246, 0.0
    %v1483 = vmax.f32 %v1251, 0.0
    %v1484 = vmax.f32 %v1254, 0.0
    %v1485 = vmax.f32 %v1259, 0.0
    %v1486 = vmax.f32 %v1262, 0.0
    %v1487 = vmax.f32 %v1267, 0.0
    %v1488 = vmax.f32 %v1270, 0.0
    %v1489 = vmax.f32 %v1275, 0.0
    %v1490 = vmax.f32 %v1278, 0.0
    %v1491 = vmax.f32 %v1283, 0.0
    %v1492 = vmax.f32 %v1286, 0.0
    %v1493 = vmax.f32 %v1291, 0.0
    %v1494 = vmax.f32 %v1294, 0.0
    %v1495 = vmax.f32 %v1299, 0.0
    %v1496 = vmax.f32 %v1302, 0.0
    %v1497 = vmax.f32 %v1307, 0.0
    %v1498 = vmax.f32 %v1310, 0.0
    %v1499 = vmax.f32 %v1315, 0.0
    %v1500 = vmax.f32 %v1318, 0.0
    %v1501 = vmax.f32 %v1323, 0.0
    %v1502 = vmax.f32 %v1326, 0.0
    %v1503 = vmax.f32 %v1331, 0.0
    %v1504 = vmax.f32 %v1334, 0.0
    %v1505 = vmax.f32 %v1339, 0.0
    %v1506 = vmax.f32 %v1342, 0.0
    %v1507 = vmax.f32 %v1347, 0.0
    %v1508 = vmax.f32 %v1350, 0.0
    %v1509 = vmax.f32 %v1355, 0.0
    %v1510 = vmax.f32 %v1358, 0.0
    %v1511 = vmax.f32 %v1363, 0.0
    %v1512 = vmax.f32 %v1366, 0.0
    %v1513 = vpack.c.bf16 %v1370, %v1369
    %v1514 = vpack.c.bf16 %v1372, %v1371
    %v1515 = vpack.c.bf16 %v1374, %v1373
    %v1516 = vpack.c.bf16 %v1376, %v1375
    %v1517 = vpack.c.bf16 %v1378, %v1377
    %v1518 = vpack.c.bf16 %v1380, %v1379
    %v1519 = vpack.c.bf16 %v1382, %v1381
    %v1520 = vpack.c.bf16 %v1384, %v1383
    %v1521 = vpack.c.bf16 %v1386, %v1385
    %v1522 = vpack.c.bf16 %v1388, %v1387
    %v1523 = vpack.c.bf16 %v1390, %v1389
    %v1524 = vpack.c.bf16 %v1392, %v1391
    %v1525 = vpack.c.bf16 %v1394, %v1393
    %v1526 = vpack.c.bf16 %v1396, %v1395
    %v1527 = vpack.c.bf16 %v1398, %v1397
    %v1528 = vpack.c.bf16 %v1400, %v1399
    %v1529 = vpack.c.bf16 %v1402, %v1401
    %v1530 = vpack.c.bf16 %v1404, %v1403
    %v1531 = vpack.c.bf16 %v1406, %v1405
    %v1532 = vpack.c.bf16 %v1408, %v1407
    %v1533 = vpack.c.bf16 %v1410, %v1409
    %v1534 = vpack.c.bf16 %v1412, %v1411
    %v1535 = vpack.c.bf16 %v1414, %v1413
    %v1536 = vpack.c.bf16 %v1416, %v1415
    %v1537 = vpack.c.bf16 %v1418, %v1417
    %v1538 = vpack.c.bf16 %v1420, %v1419
    %v1539 = vpack.c.bf16 %v1422, %v1421
    %v1540 = vpack.c.bf16 %v1424, %v1423
    %v1541 = vpack.c.bf16 %v1426, %v1425
    %v1542 = vpack.c.bf16 %v1428, %v1427
    %v1543 = vpack.c.bf16 %v1430, %v1429
    %v1544 = vpack.c.bf16 %v1432, %v1431
    %v1545 = vpack.c.bf16 %v1434, %v1433
    %v1546 = vpack.c.bf16 %v1436, %v1435
    %v1547 = vpack.c.bf16 %v1438, %v1437
    %v1548 = vpack.c.bf16 %v1440, %v1439
    %v1549 = vpack.c.bf16 %v1442, %v1441
    %v1550 = vpack.c.bf16 %v1444, %v1443
    %v1551 = vpack.c.bf16 %v1446, %v1445
    %v1552 = vpack.c.bf16 %v1448, %v1447
    %v1553 = vpack.c.bf16 %v1450, %v1449
    %v1554 = vpack.c.bf16 %v1452, %v1451
    %v1555 = vpack.c.bf16 %v1454, %v1453
    %v1556 = vpack.c.bf16 %v1456, %v1455
    %v1557 = vpack.c.bf16 %v1458, %v1457
    %v1558 = vpack.c.bf16 %v1460, %v1459
    %v1559 = vpack.c.bf16 %v1462, %v1461
    %v1560 = vpack.c.bf16 %v1464, %v1463
    %v1561 = vpack.c.bf16 %v1466, %v1465
    %v1562 = vpack.c.bf16 %v1468, %v1467
    %v1563 = vpack.c.bf16 %v1470, %v1469
    %v1564 = vpack.c.bf16 %v1472, %v1471
    %v1565 = vpack.c.bf16 %v1474, %v1473
    %v1566 = vpack.c.bf16 %v1476, %v1475
    %v1567 = vpack.c.bf16 %v1478, %v1477
    %v1568 = vpack.c.bf16 %v1480, %v1479
    %v1569 = vpack.c.bf16 %v1482, %v1481
    %v1570 = vpack.c.bf16 %v1484, %v1483
    %v1571 = vpack.c.bf16 %v1486, %v1485
    %v1572 = vpack.c.bf16 %v1488, %v1487
    %v1573 = vpack.c.bf16 %v1490, %v1489
    %v1574 = vpack.c.bf16 %v1492, %v1491
    %v1575 = vpack.c.bf16 %v1494, %v1493
    %v1576 = vpack.c.bf16 %v1496, %v1495
    %v1577 = vpack.c.bf16 %v1498, %v1497
    %v1578 = vpack.c.bf16 %v1500, %v1499
    %v1579 = vpack.c.bf16 %v1502, %v1501
    %v1580 = vpack.c.bf16 %v1504, %v1503
    %v1581 = vpack.c.bf16 %v1506, %v1505
    %v1582 = vpack.c.bf16 %v1508, %v1507
    %v1583 = vpack.c.bf16 %v1510, %v1509
    %v1584 = vpack.c.bf16 %v1512, %v1511
    %v1585 = vld [vmem:[%s3] sm:$0xf]
    %s1586 = scalar_lea.vmem %s3, 4
    %v1587 = vld [vmem:[%s1586] sm:$0xf]
    %vm1588 = vcmask 64512
    %v1590 = vsel %vm1588, %v1521, 0
    %v1593 = vsel %vm1588, %v1522, 0
    %v1596 = vsel %vm1588, %v1523, 0
    %v1599 = vsel %vm1588, %v1524, 0
    %v1602 = vsel %vm1588, %v1525, 0
    %v1605 = vsel %vm1588, %v1526, 0
    %v1608 = vsel %vm1588, %v1527, 0
    %v1611 = vsel %vm1588, %v1528, 0
    %vm1613 = vcmask 1043456
    %v1615 = vsel %vm1613, %v1587, 0
    %1617 = vmatprep.subr.bf16.mxu0 0
    %1618 = vmatpush1.bf16.msra.mxu0 %v1615
    %1619 = vmatprep.subr.bf16.mxu0 0
    %1620 = vmatpush1.bf16.msra.mxu0 0
    %1621 = vmatprep.subr.bf16.mxu0 0
    %1622 = vmatpush1.bf16.msra.mxu0 0
    %1623 = vmatprep.subr.bf16.mxu0 0
    %1624 = vmatpush1.bf16.msra.mxu0 0
    %1625 = vmatprep.subr.bf16.mxu0 0
    %1626 = vmatpush1.bf16.msra.mxu0 0
    %1627 = vmatprep.subr.bf16.mxu0 0
    %1628 = vmatpush1.bf16.msra.mxu0 0
    %1629 = vmatprep.subr.bf16.mxu0 0
    %1630 = vmatpush1.bf16.msra.mxu0 0
    %1631 = vmatprep.subr.bf16.mxu0 0
    %1632 = vmatpush1.bf16.msra.mxu0 0
    %1633 = vmatprep.subr.bf16.mxu0 0
    %1634 = vmatpush1.bf16.msra.mxu0 0
    %1635 = vmatprep.subr.bf16.mxu0 0
    %1636 = vmatpush1.bf16.msra.mxu0 0
    %1637 = vmatprep.subr.bf16.mxu0 0
    %1638 = vmatpush1.bf16.msra.mxu0 0
    %1639 = vmatprep.subr.bf16.mxu0 0
    %1640 = vmatpush1.bf16.msra.mxu0 0
    %1641 = vmatprep.subr.bf16.mxu0 0
    %1642 = vmatpush1.bf16.msra.mxu0 0
    %1643 = vmatprep.subr.bf16.mxu0 0
    %1644 = vmatpush1.bf16.msra.mxu0 0
    %1645 = vmatprep.subr.bf16.mxu0 0
    %1646 = vmatpush1.bf16.msra.mxu0 0
    %1647 = vmatprep.subr.bf16.mxu0 0
    %1648 = vmatpush1.bf16.msra.mxu0 0
    %1649 = vmatprep.mubr.bf16.mxu0 0
    %1650 = vmatmul.mubr.bf16.gmra.mrb[0].mxu0 %v1590
    %v1651 = vpop.f32.mrb[0].mxu0
    %v1652 = vadd.f32 0.0, %v1651
    %v1653 = vpop.f32.mrb[0].mxu0
    %v1654 = vpop.f32.mrb[0].mxu0
    %v1655 = vadd.f32 0.0, %v1654
    %v1656 = vpop.f32.mrb[0].mxu0
    %1657 = vmatprep.mubr.bf16.mxu0 0
    %1658 = vmatmul.mubr.bf16.gmra.mrb[0].mxu0 %v1593
    %v1659 = vpop.f32.mrb[0].mxu0
    %v1660 = vadd.f32 0.0, %v1659
    %v1661 = vpop.f32.mrb[0].mxu0
    %v1662 = vpop.f32.mrb[0].mxu0
    %v1663 = vadd.f32 0.0, %v1662
    %v1664 = vpop.f32.mrb[0].mxu0
    %1665 = vmatprep.mubr.bf16.mxu0 0
    %1666 = vmatmul.mubr.bf16.gmra.mrb[0].mxu0 %v1596
    %v1667 = vpop.f32.mrb[0].mxu0
    %v1668 = vadd.f32 0.0, %v1667
    %v1669 = vpop.f32.mrb[0].mxu0
    %v1670 = vpop.f32.mrb[0].mxu0
    %v1671 = vadd.f32 0.0, %v1670
    %v1672 = vpop.f32.mrb[0].mxu0
    %1673 = vmatprep.mubr.bf16.mxu0 0
    %1674 = vmatmul.mubr.bf16.gmra.mrb[0].mxu0 %v1599
    %v1675 = vpop.f32.mrb[0].mxu0
    %v1676 = vadd.f32 0.0, %v1675
    %v1677 = vpop.f32.mrb[0].mxu0
    %v1678 = vpop.f32.mrb[0].mxu0
    %v1679 = vadd.f32 0.0, %v1678
    %v1680 = vpop.f32.mrb[0].mxu0
    %1681 = vmatprep.mubr.bf16.mxu0 0
    %1682 = vmatmul.mubr.bf16.gmra.mrb[0].mxu0 %v1602
    %v1683 = vpop.f32.mrb[0].mxu0
    %v1684 = vadd.f32 0.0, %v1683
    %v1685 = vpop.f32.mrb[0].mxu0
    %v1686 = vpop.f32.mrb[0].mxu0
    %v1687 = vadd.f32 0.0, %v1686
    %v1688 = vpop.f32.mrb[0].mxu0
    %1689 = vmatprep.mubr.bf16.mxu0 0
    %1690 = vmatmul.mubr.bf16.gmra.mrb[0].mxu0 %v1605
    %v1691 = vpop.f32.mrb[0].mxu0
    %v1692 = vadd.f32 0.0, %v1691
    %v1693 = vpop.f32.mrb[0].mxu0
    %v1694 = vpop.f32.mrb[0].mxu0
    %v1695 = vadd.f32 0.0, %v1694
    %v1696 = vpop.f32.mrb[0].mxu0
    %1697 = vmatprep.mubr.bf16.mxu0 0
    %1698 = vmatmul.mubr.bf16.gmra.mrb[0].mxu0 %v1608
    %v1699 = vpop.f32.mrb[0].mxu0
    %v1700 = vadd.f32 0.0, %v1699
    %v1701 = vpop.f32.mrb[0].mxu0
    %v1702 = vpop.f32.mrb[0].mxu0
    %v1703 = vadd.f32 0.0, %v1702
    %v1704 = vpop.f32.mrb[0].mxu0
    %1705 = vmatprep.mubr.bf16.mxu0 0
    %1706 = vmatmul.mubr.bf16.gmra.mrb[0].mxu0 %v1611
    %v1707 = vpop.f32.mrb[0].mxu0
    %v1708 = vadd.f32 0.0, %v1707
    %v1709 = vpop.f32.mrb[0].mxu0
    %v1710 = vpop.f32.mrb[0].mxu0
    %v1711 = vadd.f32 0.0, %v1710
    %v1712 = vpop.f32.mrb[0].mxu0
    %1713 = vdwg.mxu0
    %v1715 = vsel %vm1588, %v1513, 0
    %v1718 = vsel %vm1588, %v1514, 0
    %v1721 = vsel %vm1588, %v1515, 0
    %v1724 = vsel %vm1588, %v1516, 0
    %v1727 = vsel %vm1588, %v1517, 0
    %v1730 = vsel %vm1588, %v1518, 0
    %v1733 = vsel %vm1588, %v1519, 0
    %v1736 = vsel %vm1588, %v1520, 0
    %v1739 = vsel %vm1613, %v1585, 0
    %1741 = vmatprep.subr.bf16.mxu0 0
    %1742 = vmatpush1.bf16.msra.mxu0 %v1739
    %1743 = vmatprep.subr.bf16.mxu0 0
    %1744 = vmatpush1.bf16.msra.mxu0 0
    %1745 = vmatprep.subr.bf16.mxu0 0
    %1746 = vmatpush1.bf16.msra.mxu0 0
    %1747 = vmatprep.subr.bf16.mxu0 0
    %1748 = vmatpush1.bf16.msra.mxu0 0
    %1749 = vmatprep.subr.bf16.mxu0 0
    %1750 = vmatpush1.bf16.msra.mxu0 0
    %1751 = vmatprep.subr.bf16.mxu0 0
    %1752 = vmatpush1.bf16.msra.mxu0 0
    %1753 = vmatprep.subr.bf16.mxu0 0
    %1754 = vmatpush1.bf16.msra.mxu0 0
    %1755 = vmatprep.subr.bf16.mxu0 0
    %1756 = vmatpush1.bf16.msra.mxu0 0
    %1757 = vmatprep.subr.bf16.mxu0 0
    %1758 = vmatpush1.bf16.msra.mxu0 0
    %1759 = vmatprep.subr.bf16.mxu0 0
    %1760 = vmatpush1.bf16.msra.mxu0 0
    %1761 = vmatprep.subr.bf16.mxu0 0
    %1762 = vmatpush1.bf16.msra.mxu0 0
    %1763 = vmatprep.subr.bf16.mxu0 0
    %1764 = vmatpush1.bf16.msra.mxu0 0
    %1765 = vmatprep.subr.bf16.mxu0 0
    %1766 = vmatpush1.bf16.msra.mxu0 0
    %1767 = vmatprep.subr.bf16.mxu0 0
    %1768 = vmatpush1.bf16.msra.mxu0 0
    %1769 = vmatprep.subr.bf16.mxu0 0
    %1770 = vmatpush1.bf16.msra.mxu0 0
    %1771 = vmatprep.subr.bf16.mxu0 0
    %1772 = vmatpush1.bf16.msra.mxu0 0
    %1773 = vmatprep.mubr.bf16.mxu0 0
    %1774 = vmatmul.mubr.bf16.gmra.mrb[0].mxu0 %v1715
    %v1775 = vpop.f32.mrb[0].mxu0
    %v1776 = vadd.f32 %v1652, %v1775
    %v1777 = vpop.f32.mrb[0].mxu0
    %v1778 = vpop.f32.mrb[0].mxu0
    %v1779 = vadd.f32 %v1655, %v1778
    %v1780 = vpop.f32.mrb[0].mxu0
    %1781 = vmatprep.mubr.bf16.mxu0 0
    %1782 = vmatmul.mubr.bf16.gmra.mrb[0].mxu0 %v1718
    %v1783 = vpop.f32.mrb[0].mxu0
    %v1784 = vadd.f32 %v1660, %v1783
    %v1785 = vpop.f32.mrb[0].mxu0
    %v1786 = vpop.f32.mrb[0].mxu0
    %v1787 = vadd.f32 %v1663, %v1786
    %v1788 = vpop.f32.mrb[0].mxu0
    %1789 = vmatprep.mubr.bf16.mxu0 0
    %1790 = vmatmul.mubr.bf16.gmra.mrb[0].mxu0 %v1721
    %v1791 = vpop.f32.mrb[0].mxu0
    %v1792 = vadd.f32 %v1668, %v1791
    %v1793 = vpop.f32.mrb[0].mxu0
    %v1794 = vpop.f32.mrb[0].mxu0
    %v1795 = vadd.f32 %v1671, %v1794
    %v1796 = vpop.f32.mrb[0].mxu0
    %1797 = vmatprep.mubr.bf16.mxu0 0
    %1798 = vmatmul.mubr.bf16.gmra.mrb[0].mxu0 %v1724
    %v1799 = vpop.f32.mrb[0].mxu0
    %v1800 = vadd.f32 %v1676, %v1799
    %v1801 = vpop.f32.mrb[0].mxu0
    %v1802 = vpop.f32.mrb[0].mxu0
    %v1803 = vadd.f32 %v1679, %v1802
    %v1804 = vpop.f32.mrb[0].mxu0
    %1805 = vmatprep.mubr.bf16.mxu0 0
    %1806 = vmatmul.mubr.bf16.gmra.mrb[0].mxu0 %v1727
    %v1807 = vpop.f32.mrb[0].mxu0
    %v1808 = vadd.f32 %v1684, %v1807
    %v1809 = vpop.f32.mrb[0].mxu0
    %v1810 = vpop.f32.mrb[0].mxu0
    %v1811 = vadd.f32 %v1687, %v1810
    %v1812 = vpop.f32.mrb[0].mxu0
    %1813 = vmatprep.mubr.bf16.mxu0 0
    %1814 = vmatmul.mubr.bf16.gmra.mrb[0].mxu0 %v1730
    %v1815 = vpop.f32.mrb[0].mxu0
    %v1816 = vadd.f32 %v1692, %v1815
    %v1817 = vpop.f32.mrb[0].mxu0
    %v1818 = vpop.f32.mrb[0].mxu0
    %v1819 = vadd.f32 %v1695, %v1818
    %v1820 = vpop.f32.mrb[0].mxu0
    %1821 = vmatprep.mubr.bf16.mxu0 0
    %1822 = vmatmul.mubr.bf16.gmra.mrb[0].mxu0 %v1733
    %v1823 = vpop.f32.mrb[0].mxu0
    %v1824 = vadd.f32 %v1700, %v1823
    %v1825 = vpop.f32.mrb[0].mxu0
    %v1826 = vpop.f32.mrb[0].mxu0
    %v1827 = vadd.f32 %v1703, %v1826
    %v1828 = vpop.f32.mrb[0].mxu0
    %1829 = vmatprep.mubr.bf16.mxu0 0
    %1830 = vmatmul.mubr.bf16.gmra.mrb[0].mxu0 %v1736
    %v1831 = vpop.f32.mrb[0].mxu0
    %v1832 = vadd.f32 %v1708, %v1831
    %v1833 = vpop.f32.mrb[0].mxu0
    %v1834 = vpop.f32.mrb[0].mxu0
    %v1835 = vadd.f32 %v1711, %v1834
    %v1836 = vpop.f32.mrb[0].mxu0
    %1837 = vdwg.mxu0
    %s1838 = scalar_lea.vmem %s3, 8
    %v1839 = vld [vmem:[%s1838] sm:$0xf]
    %v1841 = vsel %vm1588, %v1529, 0
    %v1844 = vsel %vm1588, %v1530, 0
    %v1847 = vsel %vm1588, %v1531, 0
    %v1850 = vsel %vm1588, %v1532, 0
    %v1853 = vsel %vm1588, %v1533, 0
    %v1856 = vsel %vm1588, %v1534, 0
    %v1859 = vsel %vm1588, %v1535, 0
    %v1862 = vsel %vm1588, %v1536, 0
    %v1865 = vsel %vm1613, %v1839, 0
    %1867 = vmatprep.subr.bf16.mxu0 0
    %1868 = vmatpush1.bf16.msra.mxu0 %v1865
    %1869 = vmatprep.subr.bf16.mxu0 0
    %1870 = vmatpush1.bf16.msra.mxu0 0
    %1871 = vmatprep.subr.bf16.mxu0 0
    %1872 = vmatpush1.bf16.msra.mxu0 0
    %1873 = vmatprep.subr.bf16.mxu0 0
    %1874 = vmatpush1.bf16.msra.mxu0 0
    %1875 = vmatprep.subr.bf16.mxu0 0
    %1876 = vmatpush1.bf16.msra.mxu0 0
    %1877 = vmatprep.subr.bf16.mxu0 0
    %1878 = vmatpush1.bf16.msra.mxu0 0
    %1879 = vmatprep.subr.bf16.mxu0 0
    %1880 = vmatpush1.bf16.msra.mxu0 0
    %1881 = vmatprep.subr.bf16.mxu0 0
    %1882 = vmatpush1.bf16.msra.mxu0 0
    %1883 = vmatprep.subr.bf16.mxu0 0
    %1884 = vmatpush1.bf16.msra.mxu0 0
    %1885 = vmatprep.subr.bf16.mxu0 0
    %1886 = vmatpush1.bf16.msra.mxu0 0
    %1887 = vmatprep.subr.bf16.mxu0 0
    %1888 = vmatpush1.bf16.msra.mxu0 0
    %1889 = vmatprep.subr.bf16.mxu0 0
    %1890 = vmatpush1.bf16.msra.mxu0 0
    %1891 = vmatprep.subr.bf16.mxu0 0
    %1892 = vmatpush1.bf16.msra.mxu0 0
    %1893 = vmatprep.subr.bf16.mxu0 0
    %1894 = vmatpush1.bf16.msra.mxu0 0
    %1895 = vmatprep.subr.bf16.mxu0 0
    %1896 = vmatpush1.bf16.msra.mxu0 0
    %1897 = vmatprep.subr.bf16.mxu0 0
    %1898 = vmatpush1.bf16.msra.mxu0 0
    %1899 = vmatprep.mubr.bf16.mxu0 0
    %1900 = vmatmul.mubr.bf16.gmra.mrb[0].mxu0 %v1841
    %v1901 = vpop.f32.mrb[0].mxu0
    %v1902 = vadd.f32 0.0, %v1901
    %v1903 = vpop.f32.mrb[0].mxu0
    %v1904 = vpop.f32.mrb[0].mxu0
    %v1905 = vadd.f32 0.0, %v1904
    %v1906 = vpop.f32.mrb[0].mxu0
    %1907 = vmatprep.mubr.bf16.mxu0 0
    %1908 = vmatmul.mubr.bf16.gmra.mrb[0].mxu0 %v1844
    %v1909 = vpop.f32.mrb[0].mxu0
    %v1910 = vadd.f32 0.0, %v1909
    %v1911 = vpop.f32.mrb[0].mxu0
    %v1912 = vpop.f32.mrb[0].mxu0
    %v1913 = vadd.f32 0.0, %v1912
    %v1914 = vpop.f32.mrb[0].mxu0
    %1915 = vmatprep.mubr.bf16.mxu0 0
    %1916 = vmatmul.mubr.bf16.gmra.mrb[0].mxu0 %v1847
    %v1917 = vpop.f32.mrb[0].mxu0
    %v1918 = vadd.f32 0.0, %v1917
    %v1919 = vpop.f32.mrb[0].mxu0
    %v1920 = vpop.f32.mrb[0].mxu0
    %v1921 = vadd.f32 0.0, %v1920
    %v1922 = vpop.f32.mrb[0].mxu0
    %1923 = vmatprep.mubr.bf16.mxu0 0
    %1924 = vmatmul.mubr.bf16.gmra.mrb[0].mxu0 %v1850
    %v1925 = vpop.f32.mrb[0].mxu0
    %v1926 = vadd.f32 0.0, %v1925
    %v1927 = vpop.f32.mrb[0].mxu0
    %v1928 = vpop.f32.mrb[0].mxu0
    %v1929 = vadd.f32 0.0, %v1928
    %v1930 = vpop.f32.mrb[0].mxu0
    %1931 = vmatprep.mubr.bf16.mxu0 0
    %1932 = vmatmul.mubr.bf16.gmra.mrb[0].mxu0 %v1853
    %v1933 = vpop.f32.mrb[0].mxu0
    %v1934 = vadd.f32 0.0, %v1933
    %v1935 = vpop.f32.mrb[0].mxu0
    %v1936 = vpop.f32.mrb[0].mxu0
    %v1937 = vadd.f32 0.0, %v1936
    %v1938 = vpop.f32.mrb[0].mxu0
    %1939 = vmatprep.mubr.bf16.mxu0 0
    %1940 = vmatmul.mubr.bf16.gmra.mrb[0].mxu0 %v1856
    %v1941 = vpop.f32.mrb[0].mxu0
    %v1942 = vadd.f32 0.0, %v1941
    %v1943 = vpop.f32.mrb[0].mxu0
    %v1944 = vpop.f32.mrb[0].mxu0
    %v1945 = vadd.f32 0.0, %v1944
    %v1946 = vpop.f32.mrb[0].mxu0
    %1947 = vmatprep.mubr.bf16.mxu0 0
    %1948 = vmatmul.mubr.bf16.gmra.mrb[0].mxu0 %v1859
    %v1949 = vpop.f32.mrb[0].mxu0
    %v1950 = vadd.f32 0.0, %v1949
    %v1951 = vpop.f32.mrb[0].mxu0
    %v1952 = vpop.f32.mrb[0].mxu0
    %v1953 = vadd.f32 0.0, %v1952
    %v1954 = vpop.f32.mrb[0].mxu0
    %1955 = vmatprep.mubr.bf16.mxu0 0
    %1956 = vmatmul.mubr.bf16.gmra.mrb[0].mxu0 %v1862
    %v1957 = vpop.f32.mrb[0].mxu0
    %v1958 = vadd.f32 0.0, %v1957
    %v1959 = vpop.f32.mrb[0].mxu0
    %v1960 = vpop.f32.mrb[0].mxu0
    %v1961 = vadd.f32 0.0, %v1960
    %v1962 = vpop.f32.mrb[0].mxu0
    %1963 = vdwg.mxu0
    %v1964 = vadd.f32 %v1776, %v1902
    %v1965 = vadd.f32 %v1779, %v1905
    %v1966 = vadd.f32 %v1784, %v1910
    %v1967 = vadd.f32 %v1787, %v1913
    %v1968 = vadd.f32 %v1792, %v1918
    %v1969 = vadd.f32 %v1795, %v1921
    %v1970 = vadd.f32 %v1800, %v1926
    %v1971 = vadd.f32 %v1803, %v1929
    %v1972 = vadd.f32 %v1808, %v1934
    %v1973 = vadd.f32 %v1811, %v1937
    %v1974 = vadd.f32 %v1816, %v1942
    %v1975 = vadd.f32 %v1819, %v1945
    %v1976 = vadd.f32 %v1824, %v1950
    %v1977 = vadd.f32 %v1827, %v1953
    %v1978 = vadd.f32 %v1832, %v1958
    %v1979 = vadd.f32 %v1835, %v1961
    %s1980 = scalar_lea.vmem %s3, 12
    %v1981 = vld [vmem:[%s1980] sm:$0xf]
    %v1983 = vsel %vm1588, %v1537, 0
    %v1986 = vsel %vm1588, %v1538, 0
    %v1989 = vsel %vm1588, %v1539, 0
    %v1992 = vsel %vm1588, %v1540, 0
    %v1995 = vsel %vm1588, %v1541, 0
    %v1998 = vsel %vm1588, %v1542, 0
    %v2001 = vsel %vm1588, %v1543, 0
    %v2004 = vsel %vm1588, %v1544, 0
    %v2007 = vsel %vm1613, %v1981, 0
    %2009 = vmatprep.subr.bf16.mxu0 0
    %2010 = vmatpush1.bf16.msra.mxu0 %v2007
    %2011 = vmatprep.subr.bf16.mxu0 0
    %2012 = vmatpush1.bf16.msra.mxu0 0
    %2013 = vmatprep.subr.bf16.mxu0 0
    %2014 = vmatpush1.bf16.msra.mxu0 0
    %2015 = vmatprep.subr.bf16.mxu0 0
    %2016 = vmatpush1.bf16.msra.mxu0 0
    %2017 = vmatprep.subr.bf16.mxu0 0
    %2018 = vmatpush1.bf16.msra.mxu0 0
    %2019 = vmatprep.subr.bf16.mxu0 0
    %2020 = vmatpush1.bf16.msra.mxu0 0
    %2021 = vmatprep.subr.bf16.mxu0 0
    %2022 = vmatpush1.bf16.msra.mxu0 0
    %2023 = vmatprep.subr.bf16.mxu0 0
    %2024 = vmatpush1.bf16.msra.mxu0 0
    %2025 = vmatprep.subr.bf16.mxu0 0
    %2026 = vmatpush1.bf16.msra.mxu0 0
    %2027 = vmatprep.subr.bf16.mxu0 0
    %2028 = vmatpush1.bf16.msra.mxu0 0
    %2029 = vmatprep.subr.bf16.mxu0 0
    %2030 = vmatpush1.bf16.msra.mxu0 0
    %2031 = vmatprep.subr.bf16.mxu0 0
    %2032 = vmatpush1.bf16.msra.mxu0 0
    %2033 = vmatprep.subr.bf16.mxu0 0
    %2034 = vmatpush1.bf16.msra.mxu0 0
    %2035 = vmatprep.subr.bf16.mxu0 0
    %2036 = vmatpush1.bf16.msra.mxu0 0
    %2037 = vmatprep.subr.bf16.mxu0 0
    %2038 = vmatpush1.bf16.msra.mxu0 0
    %2039 = vmatprep.subr.bf16.mxu0 0
    %2040 = vmatpush1.bf16.msra.mxu0 0
    %2041 = vmatprep.mubr.bf16.mxu0 0
    %2042 = vmatmul.mubr.bf16.gmra.mrb[0].mxu0 %v1983
    %v2043 = vpop.f32.mrb[0].mxu0
    %v2044 = vadd.f32 0.0, %v2043
    %v2045 = vpop.f32.mrb[0].mxu0
    %v2046 = vpop.f32.mrb[0].mxu0
    %v2047 = vadd.f32 0.0, %v2046
    %v2048 = vpop.f32.mrb[0].mxu0
    %2049 = vmatprep.mubr.bf16.mxu0 0
    %2050 = vmatmul.mubr.bf16.gmra.mrb[0].mxu0 %v1986
    %v2051 = vpop.f32.mrb[0].mxu0
    %v2052 = vadd.f32 0.0, %v2051
    %v2053 = vpop.f32.mrb[0].mxu0
    %v2054 = vpop.f32.mrb[0].mxu0
    %v2055 = vadd.f32 0.0, %v2054
    %v2056 = vpop.f32.mrb[0].mxu0
    %2057 = vmatprep.mubr.bf16.mxu0 0
    %2058 = vmatmul.mubr.bf16.gmra.mrb[0].mxu0 %v1989
    %v2059 = vpop.f32.mrb[0].mxu0
    %v2060 = vadd.f32 0.0, %v2059
    %v2061 = vpop.f32.mrb[0].mxu0
    %v2062 = vpop.f32.mrb[0].mxu0
    %v2063 = vadd.f32 0.0, %v2062
    %v2064 = vpop.f32.mrb[0].mxu0
    %2065 = vmatprep.mubr.bf16.mxu0 0
    %2066 = vmatmul.mubr.bf16.gmra.mrb[0].mxu0 %v1992
    %v2067 = vpop.f32.mrb[0].mxu0
    %v2068 = vadd.f32 0.0, %v2067
    %v2069 = vpop.f32.mrb[0].mxu0
    %v2070 = vpop.f32.mrb[0].mxu0
    %v2071 = vadd.f32 0.0, %v2070
    %v2072 = vpop.f32.mrb[0].mxu0
    %2073 = vmatprep.mubr.bf16.mxu0 0
    %2074 = vmatmul.mubr.bf16.gmra.mrb[0].mxu0 %v1995
    %v2075 = vpop.f32.mrb[0].mxu0
    %v2076 = vadd.f32 0.0, %v2075
    %v2077 = vpop.f32.mrb[0].mxu0
    %v2078 = vpop.f32.mrb[0].mxu0
    %v2079 = vadd.f32 0.0, %v2078
    %v2080 = vpop.f32.mrb[0].mxu0
    %2081 = vmatprep.mubr.bf16.mxu0 0
    %2082 = vmatmul.mubr.bf16.gmra.mrb[0].mxu0 %v1998
    %v2083 = vpop.f32.mrb[0].mxu0
    %v2084 = vadd.f32 0.0, %v2083
    %v2085 = vpop.f32.mrb[0].mxu0
    %v2086 = vpop.f32.mrb[0].mxu0
    %v2087 = vadd.f32 0.0, %v2086
    %v2088 = vpop.f32.mrb[0].mxu0
    %2089 = vmatprep.mubr.bf16.mxu0 0
    %2090 = vmatmul.mubr.bf16.gmra.mrb[0].mxu0 %v2001
    %v2091 = vpop.f32.mrb[0].mxu0
    %v2092 = vadd.f32 0.0, %v2091
    %v2093 = vpop.f32.mrb[0].mxu0
    %v2094 = vpop.f32.mrb[0].mxu0
    %v2095 = vadd.f32 0.0, %v2094
    %v2096 = vpop.f32.mrb[0].mxu0
    %2097 = vmatprep.mubr.bf16.mxu0 0
    %2098 = vmatmul.mubr.bf16.gmra.mrb[0].mxu0 %v2004
    %v2099 = vpop.f32.mrb[0].mxu0
    %v2100 = vadd.f32 0.0, %v2099
    %v2101 = vpop.f32.mrb[0].mxu0
    %v2102 = vpop.f32.mrb[0].mxu0
    %v2103 = vadd.f32 0.0, %v2102
    %v2104 = vpop.f32.mrb[0].mxu0
    %2105 = vdwg.mxu0
    %v2106 = vadd.f32 %v1964, %v2044
    %v2107 = vadd.f32 %v1965, %v2047
    %v2108 = vadd.f32 %v1966, %v2052
    %v2109 = vadd.f32 %v1967, %v2055
    %v2110 = vadd.f32 %v1968, %v2060
    %v2111 = vadd.f32 %v1969, %v2063
    %v2112 = vadd.f32 %v1970, %v2068
    %v2113 = vadd.f32 %v1971, %v2071
    %v2114 = vadd.f32 %v1972, %v2076
    %v2115 = vadd.f32 %v1973, %v2079
    %v2116 = vadd.f32 %v1974, %v2084
    %v2117 = vadd.f32 %v1975, %v2087
    %v2118 = vadd.f32 %v1976, %v2092
    %v2119 = vadd.f32 %v1977, %v2095
    %v2120 = vadd.f32 %v1978, %v2100
    %v2121 = vadd.f32 %v1979, %v2103
    %s2122 = scalar_lea.vmem %s3, 16
    %v2123 = vld [vmem:[%s2122] sm:$0xf]
    %v2125 = vsel %vm1588, %v1545, 0
    %v2128 = vsel %vm1588, %v1546, 0
    %v2131 = vsel %vm1588, %v1547, 0
    %v2134 = vsel %vm1588, %v1548, 0
    %v2137 = vsel %vm1588, %v1549, 0
    %v2140 = vsel %vm1588, %v1550, 0
    %v2143 = vsel %vm1588, %v1551, 0
    %v2146 = vsel %vm1588, %v1552, 0
    %v2149 = vsel %vm1613, %v2123, 0
    %2151 = vmatprep.subr.bf16.mxu0 0
    %2152 = vmatpush1.bf16.msra.mxu0 %v2149
    %2153 = vmatprep.subr.bf16.mxu0 0
    %2154 = vmatpush1.bf16.msra.mxu0 0
    %2155 = vmatprep.subr.bf16.mxu0 0
    %2156 = vmatpush1.bf16.msra.mxu0 0
    %2157 = vmatprep.subr.bf16.mxu0 0
    %2158 = vmatpush1.bf16.msra.mxu0 0
    %2159 = vmatprep.subr.bf16.mxu0 0
    %2160 = vmatpush1.bf16.msra.mxu0 0
    %2161 = vmatprep.subr.bf16.mxu0 0
    %2162 = vmatpush1.bf16.msra.mxu0 0
    %2163 = vmatprep.subr.bf16.mxu0 0
    %2164 = vmatpush1.bf16.msra.mxu0 0
    %2165 = vmatprep.subr.bf16.mxu0 0
    %2166 = vmatpush1.bf16.msra.mxu0 0
    %2167 = vmatprep.subr.bf16.mxu0 0
    %2168 = vmatpush1.bf16.msra.mxu0 0
    %2169 = vmatprep.subr.bf16.mxu0 0
    %2170 = vmatpush1.bf16.msra.mxu0 0
    %2171 = vmatprep.subr.bf16.mxu0 0
    %2172 = vmatpush1.bf16.msra.mxu0 0
    %2173 = vmatprep.subr.bf16.mxu0 0
    %2174 = vmatpush1.bf16.msra.mxu0 0
    %2175 = vmatprep.subr.bf16.mxu0 0
    %2176 = vmatpush1.bf16.msra.mxu0 0
    %2177 = vmatprep.subr.bf16.mxu0 0
    %2178 = vmatpush1.bf16.msra.mxu0 0
    %2179 = vmatprep.subr.bf16.mxu0 0
    %2180 = vmatpush1.bf16.msra.mxu0 0
    %2181 = vmatprep.subr.bf16.mxu0 0
    %2182 = vmatpush1.bf16.msra.mxu0 0
    %2183 = vmatprep.mubr.bf16.mxu0 0
    %2184 = vmatmul.mubr.bf16.gmra.mrb[0].mxu0 %v2125
    %v2185 = vpop.f32.mrb[0].mxu0
    %v2186 = vadd.f32 0.0, %v2185
    %v2187 = vpop.f32.mrb[0].mxu0
    %v2188 = vpop.f32.mrb[0].mxu0
    %v2189 = vadd.f32 0.0, %v2188
    %v2190 = vpop.f32.mrb[0].mxu0
    %2191 = vmatprep.mubr.bf16.mxu0 0
    %2192 = vmatmul.mubr.bf16.gmra.mrb[0].mxu0 %v2128
    %v2193 = vpop.f32.mrb[0].mxu0
    %v2194 = vadd.f32 0.0, %v2193
    %v2195 = vpop.f32.mrb[0].mxu0
    %v2196 = vpop.f32.mrb[0].mxu0
    %v2197 = vadd.f32 0.0, %v2196
    %v2198 = vpop.f32.mrb[0].mxu0
    %2199 = vmatprep.mubr.bf16.mxu0 0
    %2200 = vmatmul.mubr.bf16.gmra.mrb[0].mxu0 %v2131
    %v2201 = vpop.f32.mrb[0].mxu0
    %v2202 = vadd.f32 0.0, %v2201
    %v2203 = vpop.f32.mrb[0].mxu0
    %v2204 = vpop.f32.mrb[0].mxu0
    %v2205 = vadd.f32 0.0, %v2204
    %v2206 = vpop.f32.mrb[0].mxu0
    %2207 = vmatprep.mubr.bf16.mxu0 0
    %2208 = vmatmul.mubr.bf16.gmra.mrb[0].mxu0 %v2134
    %v2209 = vpop.f32.mrb[0].mxu0
    %v2210 = vadd.f32 0.0, %v2209
    %v2211 = vpop.f32.mrb[0].mxu0
    %v2212 = vpop.f32.mrb[0].mxu0
    %v2213 = vadd.f32 0.0, %v2212
    %v2214 = vpop.f32.mrb[0].mxu0
    %2215 = vmatprep.mubr.bf16.mxu0 0
    %2216 = vmatmul.mubr.bf16.gmra.mrb[0].mxu0 %v2137
    %v2217 = vpop.f32.mrb[0].mxu0
    %v2218 = vadd.f32 0.0, %v2217
    %v2219 = vpop.f32.mrb[0].mxu0
    %v2220 = vpop.f32.mrb[0].mxu0
    %v2221 = vadd.f32 0.0, %v2220
    %v2222 = vpop.f32.mrb[0].mxu0
    %2223 = vmatprep.mubr.bf16.mxu0 0
    %2224 = vmatmul.mubr.bf16.gmra.mrb[0].mxu0 %v2140
    %v2225 = vpop.f32.mrb[0].mxu0
    %v2226 = vadd.f32 0.0, %v2225
    %v2227 = vpop.f32.mrb[0].mxu0
    %v2228 = vpop.f32.mrb[0].mxu0
    %v2229 = vadd.f32 0.0, %v2228
    %v2230 = vpop.f32.mrb[0].mxu0
    %2231 = vmatprep.mubr.bf16.mxu0 0
    %2232 = vmatmul.mubr.bf16.gmra.mrb[0].mxu0 %v2143
    %v2233 = vpop.f32.mrb[0].mxu0
    %v2234 = vadd.f32 0.0, %v2233
    %v2235 = vpop.f32.mrb[0].mxu0
    %v2236 = vpop.f32.mrb[0].mxu0
    %v2237 = vadd.f32 0.0, %v2236
    %v2238 = vpop.f32.mrb[0].mxu0
    %2239 = vmatprep.mubr.bf16.mxu0 0
    %2240 = vmatmul.mubr.bf16.gmra.mrb[0].mxu0 %v2146
    %v2241 = vpop.f32.mrb[0].mxu0
    %v2242 = vadd.f32 0.0, %v2241
    %v2243 = vpop.f32.mrb[0].mxu0
    %v2244 = vpop.f32.mrb[0].mxu0
    %v2245 = vadd.f32 0.0, %v2244
    %v2246 = vpop.f32.mrb[0].mxu0
    %2247 = vdwg.mxu0
    %v2248 = vadd.f32 %v2106, %v2186
    %v2249 = vadd.f32 %v2107, %v2189
    %v2250 = vadd.f32 %v2108, %v2194
    %v2251 = vadd.f32 %v2109, %v2197
    %v2252 = vadd.f32 %v2110, %v2202
    %v2253 = vadd.f32 %v2111, %v2205
    %v2254 = vadd.f32 %v2112, %v2210
    %v2255 = vadd.f32 %v2113, %v2213
    %v2256 = vadd.f32 %v2114, %v2218
    %v2257 = vadd.f32 %v2115, %v2221
    %v2258 = vadd.f32 %v2116, %v2226
    %v2259 = vadd.f32 %v2117, %v2229
    %v2260 = vadd.f32 %v2118, %v2234
    %v2261 = vadd.f32 %v2119, %v2237
    %v2262 = vadd.f32 %v2120, %v2242
    %v2263 = vadd.f32 %v2121, %v2245
    %s2264 = scalar_lea.vmem %s3, 20
    %v2265 = vld [vmem:[%s2264] sm:$0xf]
    %v2267 = vsel %vm1588, %v1553, 0
    %v2270 = vsel %vm1588, %v1554, 0
    %v2273 = vsel %vm1588, %v1555, 0
    %v2276 = vsel %vm1588, %v1556, 0
    %v2279 = vsel %vm1588, %v1557, 0
    %v2282 = vsel %vm1588, %v1558, 0
    %v2285 = vsel %vm1588, %v1559, 0
    %v2288 = vsel %vm1588, %v1560, 0
    %v2291 = vsel %vm1613, %v2265, 0
    %2293 = vmatprep.subr.bf16.mxu0 0
    %2294 = vmatpush1.bf16.msra.mxu0 %v2291
    %2295 = vmatprep.subr.bf16.mxu0 0
    %2296 = vmatpush1.bf16.msra.mxu0 0
    %2297 = vmatprep.subr.bf16.mxu0 0
    %2298 = vmatpush1.bf16.msra.mxu0 0
    %2299 = vmatprep.subr.bf16.mxu0 0
    %2300 = vmatpush1.bf16.msra.mxu0 0
    %2301 = vmatprep.subr.bf16.mxu0 0
    %2302 = vmatpush1.bf16.msra.mxu0 0
    %2303 = vmatprep.subr.bf16.mxu0 0
    %2304 = vmatpush1.bf16.msra.mxu0 0
    %2305 = vmatprep.subr.bf16.mxu0 0
    %2306 = vmatpush1.bf16.msra.mxu0 0
    %2307 = vmatprep.subr.bf16.mxu0 0
    %2308 = vmatpush1.bf16.msra.mxu0 0
    %2309 = vmatprep.subr.bf16.mxu0 0
    %2310 = vmatpush1.bf16.msra.mxu0 0
    %2311 = vmatprep.subr.bf16.mxu0 0
    %2312 = vmatpush1.bf16.msra.mxu0 0
    %2313 = vmatprep.subr.bf16.mxu0 0
    %2314 = vmatpush1.bf16.msra.mxu0 0
    %2315 = vmatprep.subr.bf16.mxu0 0
    %2316 = vmatpush1.bf16.msra.mxu0 0
    %2317 = vmatprep.subr.bf16.mxu0 0
    %2318 = vmatpush1.bf16.msra.mxu0 0
    %2319 = vmatprep.subr.bf16.mxu0 0
    %2320 = vmatpush1.bf16.msra.mxu0 0
    %2321 = vmatprep.subr.bf16.mxu0 0
    %2322 = vmatpush1.bf16.msra.mxu0 0
    %2323 = vmatprep.subr.bf16.mxu0 0
    %2324 = vmatpush1.bf16.msra.mxu0 0
    %2325 = vmatprep.mubr.bf16.mxu0 0
    %2326 = vmatmul.mubr.bf16.gmra.mrb[0].mxu0 %v2267
    %v2327 = vpop.f32.mrb[0].mxu0
    %v2328 = vadd.f32 0.0, %v2327
    %v2329 = vpop.f32.mrb[0].mxu0
    %v2330 = vpop.f32.mrb[0].mxu0
    %v2331 = vadd.f32 0.0, %v2330
    %v2332 = vpop.f32.mrb[0].mxu0
    %2333 = vmatprep.mubr.bf16.mxu0 0
    %2334 = vmatmul.mubr.bf16.gmra.mrb[0].mxu0 %v2270
    %v2335 = vpop.f32.mrb[0].mxu0
    %v2336 = vadd.f32 0.0, %v2335
    %v2337 = vpop.f32.mrb[0].mxu0
    %v2338 = vpop.f32.mrb[0].mxu0
    %v2339 = vadd.f32 0.0, %v2338
    %v2340 = vpop.f32.mrb[0].mxu0
    %2341 = vmatprep.mubr.bf16.mxu0 0
    %2342 = vmatmul.mubr.bf16.gmra.mrb[0].mxu0 %v2273
    %v2343 = vpop.f32.mrb[0].mxu0
    %v2344 = vadd.f32 0.0, %v2343
    %v2345 = vpop.f32.mrb[0].mxu0
    %v2346 = vpop.f32.mrb[0].mxu0
    %v2347 = vadd.f32 0.0, %v2346
    %v2348 = vpop.f32.mrb[0].mxu0
    %2349 = vmatprep.mubr.bf16.mxu0 0
    %2350 = vmatmul.mubr.bf16.gmra.mrb[0].mxu0 %v2276
    %v2351 = vpop.f32.mrb[0].mxu0
    %v2352 = vadd.f32 0.0, %v2351
    %v2353 = vpop.f32.mrb[0].mxu0
    %v2354 = vpop.f32.mrb[0].mxu0
    %v2355 = vadd.f32 0.0, %v2354
    %v2356 = vpop.f32.mrb[0].mxu0
    %2357 = vmatprep.mubr.bf16.mxu0 0
    %2358 = vmatmul.mubr.bf16.gmra.mrb[0].mxu0 %v2279
    %v2359 = vpop.f32.mrb[0].mxu0
    %v2360 = vadd.f32 0.0, %v2359
    %v2361 = vpop.f32.mrb[0].mxu0
    %v2362 = vpop.f32.mrb[0].mxu0
    %v2363 = vadd.f32 0.0, %v2362
    %v2364 = vpop.f32.mrb[0].mxu0
    %2365 = vmatprep.mubr.bf16.mxu0 0
    %2366 = vmatmul.mubr.bf16.gmra.mrb[0].mxu0 %v2282
    %v2367 = vpop.f32.mrb[0].mxu0
    %v2368 = vadd.f32 0.0, %v2367
    %v2369 = vpop.f32.mrb[0].mxu0
    %v2370 = vpop.f32.mrb[0].mxu0
    %v2371 = vadd.f32 0.0, %v2370
    %v2372 = vpop.f32.mrb[0].mxu0
    %2373 = vmatprep.mubr.bf16.mxu0 0
    %2374 = vmatmul.mubr.bf16.gmra.mrb[0].mxu0 %v2285
    %v2375 = vpop.f32.mrb[0].mxu0
    %v2376 = vadd.f32 0.0, %v2375
    %v2377 = vpop.f32.mrb[0].mxu0
    %v2378 = vpop.f32.mrb[0].mxu0
    %v2379 = vadd.f32 0.0, %v2378
    %v2380 = vpop.f32.mrb[0].mxu0
    %2381 = vmatprep.mubr.bf16.mxu0 0
    %2382 = vmatmul.mubr.bf16.gmra.mrb[0].mxu0 %v2288
    %v2383 = vpop.f32.mrb[0].mxu0
    %v2384 = vadd.f32 0.0, %v2383
    %v2385 = vpop.f32.mrb[0].mxu0
    %v2386 = vpop.f32.mrb[0].mxu0
    %v2387 = vadd.f32 0.0, %v2386
    %v2388 = vpop.f32.mrb[0].mxu0
    %2389 = vdwg.mxu0
    %v2390 = vadd.f32 %v2248, %v2328
    %v2391 = vadd.f32 %v2249, %v2331
    %v2392 = vadd.f32 %v2250, %v2336
    %v2393 = vadd.f32 %v2251, %v2339
    %v2394 = vadd.f32 %v2252, %v2344
    %v2395 = vadd.f32 %v2253, %v2347
    %v2396 = vadd.f32 %v2254, %v2352
    %v2397 = vadd.f32 %v2255, %v2355
    %v2398 = vadd.f32 %v2256, %v2360
    %v2399 = vadd.f32 %v2257, %v2363
    %v2400 = vadd.f32 %v2258, %v2368
    %v2401 = vadd.f32 %v2259, %v2371
    %v2402 = vadd.f32 %v2260, %v2376
    %v2403 = vadd.f32 %v2261, %v2379
    %v2404 = vadd.f32 %v2262, %v2384
    %v2405 = vadd.f32 %v2263, %v2387
    %s2406 = scalar_lea.vmem %s3, 24
    %v2407 = vld [vmem:[%s2406] sm:$0xf]
    %v2409 = vsel %vm1588, %v1561, 0
    %v2412 = vsel %vm1588, %v1562, 0
    %v2415 = vsel %vm1588, %v1563, 0
    %v2418 = vsel %vm1588, %v1564, 0
    %v2421 = vsel %vm1588, %v1565, 0
    %v2424 = vsel %vm1588, %v1566, 0
    %v2427 = vsel %vm1588, %v1567, 0
    %v2430 = vsel %vm1588, %v1568, 0
    %v2433 = vsel %vm1613, %v2407, 0
    %2435 = vmatprep.subr.bf16.mxu0 0
    %2436 = vmatpush1.bf16.msra.mxu0 %v2433
    %2437 = vmatprep.subr.bf16.mxu0 0
    %2438 = vmatpush1.bf16.msra.mxu0 0
    %2439 = vmatprep.subr.bf16.mxu0 0
    %2440 = vmatpush1.bf16.msra.mxu0 0
    %2441 = vmatprep.subr.bf16.mxu0 0
    %2442 = vmatpush1.bf16.msra.mxu0 0
    %2443 = vmatprep.subr.bf16.mxu0 0
    %2444 = vmatpush1.bf16.msra.mxu0 0
    %2445 = vmatprep.subr.bf16.mxu0 0
    %2446 = vmatpush1.bf16.msra.mxu0 0
    %2447 = vmatprep.subr.bf16.mxu0 0
    %2448 = vmatpush1.bf16.msra.mxu0 0
    %2449 = vmatprep.subr.bf16.mxu0 0
    %2450 = vmatpush1.bf16.msra.mxu0 0
    %2451 = vmatprep.subr.bf16.mxu0 0
    %2452 = vmatpush1.bf16.msra.mxu0 0
    %2453 = vmatprep.subr.bf16.mxu0 0
    %2454 = vmatpush1.bf16.msra.mxu0 0
    %2455 = vmatprep.subr.bf16.mxu0 0
    %2456 = vmatpush1.bf16.msra.mxu0 0
    %2457 = vmatprep.subr.bf16.mxu0 0
    %2458 = vmatpush1.bf16.msra.mxu0 0
    %2459 = vmatprep.subr.bf16.mxu0 0
    %2460 = vmatpush1.bf16.msra.mxu0 0
    %2461 = vmatprep.subr.bf16.mxu0 0
    %2462 = vmatpush1.bf16.msra.mxu0 0
    %2463 = vmatprep.subr.bf16.mxu0 0
    %2464 = vmatpush1.bf16.msra.mxu0 0
    %2465 = vmatprep.subr.bf16.mxu0 0
    %2466 = vmatpush1.bf16.msra.mxu0 0
    %2467 = vmatprep.mubr.bf16.mxu0 0
    %2468 = vmatmul.mubr.bf16.gmra.mrb[0].mxu0 %v2409
    %v2469 = vpop.f32.mrb[0].mxu0
    %v2470 = vadd.f32 0.0, %v2469
    %v2471 = vpop.f32.mrb[0].mxu0
    %v2472 = vpop.f32.mrb[0].mxu0
    %v2473 = vadd.f32 0.0, %v2472
    %v2474 = vpop.f32.mrb[0].mxu0
    %2475 = vmatprep.mubr.bf16.mxu0 0
    %2476 = vmatmul.mubr.bf16.gmra.mrb[0].mxu0 %v2412
    %v2477 = vpop.f32.mrb[0].mxu0
    %v2478 = vadd.f32 0.0, %v2477
    %v2479 = vpop.f32.mrb[0].mxu0
    %v2480 = vpop.f32.mrb[0].mxu0
    %v2481 = vadd.f32 0.0, %v2480
    %v2482 = vpop.f32.mrb[0].mxu0
    %2483 = vmatprep.mubr.bf16.mxu0 0
    %2484 = vmatmul.mubr.bf16.gmra.mrb[0].mxu0 %v2415
    %v2485 = vpop.f32.mrb[0].mxu0
    %v2486 = vadd.f32 0.0, %v2485
    %v2487 = vpop.f32.mrb[0].mxu0
    %v2488 = vpop.f32.mrb[0].mxu0
    %v2489 = vadd.f32 0.0, %v2488
    %v2490 = vpop.f32.mrb[0].mxu0
    %2491 = vmatprep.mubr.bf16.mxu0 0
    %2492 = vmatmul.mubr.bf16.gmra.mrb[0].mxu0 %v2418
    %v2493 = vpop.f32.mrb[0].mxu0
    %v2494 = vadd.f32 0.0, %v2493
    %v2495 = vpop.f32.mrb[0].mxu0
    %v2496 = vpop.f32.mrb[0].mxu0
    %v2497 = vadd.f32 0.0, %v2496
    %v2498 = vpop.f32.mrb[0].mxu0
    %2499 = vmatprep.mubr.bf16.mxu0 0
    %2500 = vmatmul.mubr.bf16.gmra.mrb[0].mxu0 %v2421
    %v2501 = vpop.f32.mrb[0].mxu0
    %v2502 = vadd.f32 0.0, %v2501
    %v2503 = vpop.f32.mrb[0].mxu0
    %v2504 = vpop.f32.mrb[0].mxu0
    %v2505 = vadd.f32 0.0, %v2504
    %v2506 = vpop.f32.mrb[0].mxu0
    %2507 = vmatprep.mubr.bf16.mxu0 0
    %2508 = vmatmul.mubr.bf16.gmra.mrb[0].mxu0 %v2424
    %v2509 = vpop.f32.mrb[0].mxu0
    %v2510 = vadd.f32 0.0, %v2509
    %v2511 = vpop.f32.mrb[0].mxu0
    %v2512 = vpop.f32.mrb[0].mxu0
    %v2513 = vadd.f32 0.0, %v2512
    %v2514 = vpop.f32.mrb[0].mxu0
    %2515 = vmatprep.mubr.bf16.mxu0 0
    %2516 = vmatmul.mubr.bf16.gmra.mrb[0].mxu0 %v2427
    %v2517 = vpop.f32.mrb[0].mxu0
    %v2518 = vadd.f32 0.0, %v2517
    %v2519 = vpop.f32.mrb[0].mxu0
    %v2520 = vpop.f32.mrb[0].mxu0
    %v2521 = vadd.f32 0.0, %v2520
    %v2522 = vpop.f32.mrb[0].mxu0
    %2523 = vmatprep.mubr.bf16.mxu0 0
    %2524 = vmatmul.mubr.bf16.gmra.mrb[0].mxu0 %v2430
    %v2525 = vpop.f32.mrb[0].mxu0
    %v2526 = vadd.f32 0.0, %v2525
    %v2527 = vpop.f32.mrb[0].mxu0
    %v2528 = vpop.f32.mrb[0].mxu0
    %v2529 = vadd.f32 0.0, %v2528
    %v2530 = vpop.f32.mrb[0].mxu0
    %2531 = vdwg.mxu0
    %v2532 = vadd.f32 %v2390, %v2470
    %v2533 = vadd.f32 %v2391, %v2473
    %v2534 = vadd.f32 %v2392, %v2478
    %v2535 = vadd.f32 %v2393, %v2481
    %v2536 = vadd.f32 %v2394, %v2486
    %v2537 = vadd.f32 %v2395, %v2489
    %v2538 = vadd.f32 %v2396, %v2494
    %v2539 = vadd.f32 %v2397, %v2497
    %v2540 = vadd.f32 %v2398, %v2502
    %v2541 = vadd.f32 %v2399, %v2505
    %v2542 = vadd.f32 %v2400, %v2510
    %v2543 = vadd.f32 %v2401, %v2513
    %v2544 = vadd.f32 %v2402, %v2518
    %v2545 = vadd.f32 %v2403, %v2521
    %v2546 = vadd.f32 %v2404, %v2526
    %v2547 = vadd.f32 %v2405, %v2529
    %s2548 = scalar_lea.vmem %s3, 28
    %v2549 = vld [vmem:[%s2548] sm:$0xf]
    %v2551 = vsel %vm1588, %v1569, 0
    %v2554 = vsel %vm1588, %v1570, 0
    %v2557 = vsel %vm1588, %v1571, 0
    %v2560 = vsel %vm1588, %v1572, 0
    %v2563 = vsel %vm1588, %v1573, 0
    %v2566 = vsel %vm1588, %v1574, 0
    %v2569 = vsel %vm1588, %v1575, 0
    %v2572 = vsel %vm1588, %v1576, 0
    %v2575 = vsel %vm1613, %v2549, 0
    %2577 = vmatprep.subr.bf16.mxu0 0
    %2578 = vmatpush1.bf16.msra.mxu0 %v2575
    %2579 = vmatprep.subr.bf16.mxu0 0
    %2580 = vmatpush1.bf16.msra.mxu0 0
    %2581 = vmatprep.subr.bf16.mxu0 0
    %2582 = vmatpush1.bf16.msra.mxu0 0
    %2583 = vmatprep.subr.bf16.mxu0 0
    %2584 = vmatpush1.bf16.msra.mxu0 0
    %2585 = vmatprep.subr.bf16.mxu0 0
    %2586 = vmatpush1.bf16.msra.mxu0 0
    %2587 = vmatprep.subr.bf16.mxu0 0
    %2588 = vmatpush1.bf16.msra.mxu0 0
    %2589 = vmatprep.subr.bf16.mxu0 0
    %2590 = vmatpush1.bf16.msra.mxu0 0
    %2591 = vmatprep.subr.bf16.mxu0 0
    %2592 = vmatpush1.bf16.msra.mxu0 0
    %2593 = vmatprep.subr.bf16.mxu0 0
    %2594 = vmatpush1.bf16.msra.mxu0 0
    %2595 = vmatprep.subr.bf16.mxu0 0
    %2596 = vmatpush1.bf16.msra.mxu0 0
    %2597 = vmatprep.subr.bf16.mxu0 0
    %2598 = vmatpush1.bf16.msra.mxu0 0
    %2599 = vmatprep.subr.bf16.mxu0 0
    %2600 = vmatpush1.bf16.msra.mxu0 0
    %2601 = vmatprep.subr.bf16.mxu0 0
    %2602 = vmatpush1.bf16.msra.mxu0 0
    %2603 = vmatprep.subr.bf16.mxu0 0
    %2604 = vmatpush1.bf16.msra.mxu0 0
    %2605 = vmatprep.subr.bf16.mxu0 0
    %2606 = vmatpush1.bf16.msra.mxu0 0
    %2607 = vmatprep.subr.bf16.mxu0 0
    %2608 = vmatpush1.bf16.msra.mxu0 0
    %2609 = vmatprep.mubr.bf16.mxu0 0
    %2610 = vmatmul.mubr.bf16.gmra.mrb[0].mxu0 %v2551
    %v2611 = vpop.f32.mrb[0].mxu0
    %v2612 = vadd.f32 0.0, %v2611
    %v2613 = vpop.f32.mrb[0].mxu0
    %v2614 = vpop.f32.mrb[0].mxu0
    %v2615 = vadd.f32 0.0, %v2614
    %v2616 = vpop.f32.mrb[0].mxu0
    %2617 = vmatprep.mubr.bf16.mxu0 0
    %2618 = vmatmul.mubr.bf16.gmra.mrb[0].mxu0 %v2554
    %v2619 = vpop.f32.mrb[0].mxu0
    %v2620 = vadd.f32 0.0, %v2619
    %v2621 = vpop.f32.mrb[0].mxu0
    %v2622 = vpop.f32.mrb[0].mxu0
    %v2623 = vadd.f32 0.0, %v2622
    %v2624 = vpop.f32.mrb[0].mxu0
    %2625 = vmatprep.mubr.bf16.mxu0 0
    %2626 = vmatmul.mubr.bf16.gmra.mrb[0].mxu0 %v2557
    %v2627 = vpop.f32.mrb[0].mxu0
    %v2628 = vadd.f32 0.0, %v2627
    %v2629 = vpop.f32.mrb[0].mxu0
    %v2630 = vpop.f32.mrb[0].mxu0
    %v2631 = vadd.f32 0.0, %v2630
    %v2632 = vpop.f32.mrb[0].mxu0
    %2633 = vmatprep.mubr.bf16.mxu0 0
    %2634 = vmatmul.mubr.bf16.gmra.mrb[0].mxu0 %v2560
    %v2635 = vpop.f32.mrb[0].mxu0
    %v2636 = vadd.f32 0.0, %v2635
    %v2637 = vpop.f32.mrb[0].mxu0
    %v2638 = vpop.f32.mrb[0].mxu0
    %v2639 = vadd.f32 0.0, %v2638
    %v2640 = vpop.f32.mrb[0].mxu0
    %2641 = vmatprep.mubr.bf16.mxu0 0
    %2642 = vmatmul.mubr.bf16.gmra.mrb[0].mxu0 %v2563
    %v2643 = vpop.f32.mrb[0].mxu0
    %v2644 = vadd.f32 0.0, %v2643
    %v2645 = vpop.f32.mrb[0].mxu0
    %v2646 = vpop.f32.mrb[0].mxu0
    %v2647 = vadd.f32 0.0, %v2646
    %v2648 = vpop.f32.mrb[0].mxu0
    %2649 = vmatprep.mubr.bf16.mxu0 0
    %2650 = vmatmul.mubr.bf16.gmra.mrb[0].mxu0 %v2566
    %v2651 = vpop.f32.mrb[0].mxu0
    %v2652 = vadd.f32 0.0, %v2651
    %v2653 = vpop.f32.mrb[0].mxu0
    %v2654 = vpop.f32.mrb[0].mxu0
    %v2655 = vadd.f32 0.0, %v2654
    %v2656 = vpop.f32.mrb[0].mxu0
    %2657 = vmatprep.mubr.bf16.mxu0 0
    %2658 = vmatmul.mubr.bf16.gmra.mrb[0].mxu0 %v2569
    %v2659 = vpop.f32.mrb[0].mxu0
    %v2660 = vadd.f32 0.0, %v2659
    %v2661 = vpop.f32.mrb[0].mxu0
    %v2662 = vpop.f32.mrb[0].mxu0
    %v2663 = vadd.f32 0.0, %v2662
    %v2664 = vpop.f32.mrb[0].mxu0
    %2665 = vmatprep.mubr.bf16.mxu0 0
    %2666 = vmatmul.mubr.bf16.gmra.mrb[0].mxu0 %v2572
    %v2667 = vpop.f32.mrb[0].mxu0
    %v2668 = vadd.f32 0.0, %v2667
    %v2669 = vpop.f32.mrb[0].mxu0
    %v2670 = vpop.f32.mrb[0].mxu0
    %v2671 = vadd.f32 0.0, %v2670
    %v2672 = vpop.f32.mrb[0].mxu0
    %2673 = vdwg.mxu0
    %v2674 = vadd.f32 %v2532, %v2612
    %v2675 = vadd.f32 %v2533, %v2615
    %v2676 = vadd.f32 %v2534, %v2620
    %v2677 = vadd.f32 %v2535, %v2623
    %v2678 = vadd.f32 %v2536, %v2628
    %v2679 = vadd.f32 %v2537, %v2631
    %v2680 = vadd.f32 %v2538, %v2636
    %v2681 = vadd.f32 %v2539, %v2639
    %v2682 = vadd.f32 %v2540, %v2644
    %v2683 = vadd.f32 %v2541, %v2647
    %v2684 = vadd.f32 %v2542, %v2652
    %v2685 = vadd.f32 %v2543, %v2655
    %v2686 = vadd.f32 %v2544, %v2660
    %v2687 = vadd.f32 %v2545, %v2663
    %v2688 = vadd.f32 %v2546, %v2668
    %v2689 = vadd.f32 %v2547, %v2671
    %s2690 = scalar_lea.vmem %s3, 32
    %v2691 = vld [vmem:[%s2690] sm:$0xf]
    %v2693 = vsel %vm1588, %v1577, 0
    %v2696 = vsel %vm1588, %v1578, 0
    %v2699 = vsel %vm1588, %v1579, 0
    %v2702 = vsel %vm1588, %v1580, 0
    %v2705 = vsel %vm1588, %v1581, 0
    %v2708 = vsel %vm1588, %v1582, 0
    %v2711 = vsel %vm1588, %v1583, 0
    %v2714 = vsel %vm1588, %v1584, 0
    %v2717 = vsel %vm1613, %v2691, 0
    %2719 = vmatprep.subr.bf16.mxu0 0
    %2720 = vmatpush1.bf16.msra.mxu0 %v2717
    %2721 = vmatprep.subr.bf16.mxu0 0
    %2722 = vmatpush1.bf16.msra.mxu0 0
    %2723 = vmatprep.subr.bf16.mxu0 0
    %2724 = vmatpush1.bf16.msra.mxu0 0
    %2725 = vmatprep.subr.bf16.mxu0 0
    %2726 = vmatpush1.bf16.msra.mxu0 0
    %2727 = vmatprep.subr.bf16.mxu0 0
    %2728 = vmatpush1.bf16.msra.mxu0 0
    %2729 = vmatprep.subr.bf16.mxu0 0
    %2730 = vmatpush1.bf16.msra.mxu0 0
    %2731 = vmatprep.subr.bf16.mxu0 0
    %2732 = vmatpush1.bf16.msra.mxu0 0
    %2733 = vmatprep.subr.bf16.mxu0 0
    %2734 = vmatpush1.bf16.msra.mxu0 0
    %2735 = vmatprep.subr.bf16.mxu0 0
    %2736 = vmatpush1.bf16.msra.mxu0 0
    %2737 = vmatprep.subr.bf16.mxu0 0
    %2738 = vmatpush1.bf16.msra.mxu0 0
    %2739 = vmatprep.subr.bf16.mxu0 0
    %2740 = vmatpush1.bf16.msra.mxu0 0
    %2741 = vmatprep.subr.bf16.mxu0 0
    %2742 = vmatpush1.bf16.msra.mxu0 0
    %2743 = vmatprep.subr.bf16.mxu0 0
    %2744 = vmatpush1.bf16.msra.mxu0 0
    %2745 = vmatprep.subr.bf16.mxu0 0
    %2746 = vmatpush1.bf16.msra.mxu0 0
    %2747 = vmatprep.subr.bf16.mxu0 0
    %2748 = vmatpush1.bf16.msra.mxu0 0
    %2749 = vmatprep.subr.bf16.mxu0 0
    %2750 = vmatpush1.bf16.msra.mxu0 0
    %2751 = vmatprep.mubr.bf16.mxu0 0
    %2752 = vmatmul.mubr.bf16.gmra.mrb[0].mxu0 %v2693
    %v2753 = vpop.f32.mrb[0].mxu0
    %v2754 = vadd.f32 0.0, %v2753
    %v2755 = vpop.f32.mrb[0].mxu0
    %v2756 = vpop.f32.mrb[0].mxu0
    %v2757 = vadd.f32 0.0, %v2756
    %v2758 = vpop.f32.mrb[0].mxu0
    %2759 = vmatprep.mubr.bf16.mxu0 0
    %2760 = vmatmul.mubr.bf16.gmra.mrb[0].mxu0 %v2696
    %v2761 = vpop.f32.mrb[0].mxu0
    %v2762 = vadd.f32 0.0, %v2761
    %v2763 = vpop.f32.mrb[0].mxu0
    %v2764 = vpop.f32.mrb[0].mxu0
    %v2765 = vadd.f32 0.0, %v2764
    %v2766 = vpop.f32.mrb[0].mxu0
    %2767 = vmatprep.mubr.bf16.mxu0 0
    %2768 = vmatmul.mubr.bf16.gmra.mrb[0].mxu0 %v2699
    %v2769 = vpop.f32.mrb[0].mxu0
    %v2770 = vadd.f32 0.0, %v2769
    %v2771 = vpop.f32.mrb[0].mxu0
    %v2772 = vpop.f32.mrb[0].mxu0
    %v2773 = vadd.f32 0.0, %v2772
    %v2774 = vpop.f32.mrb[0].mxu0
    %2775 = vmatprep.mubr.bf16.mxu0 0
    %2776 = vmatmul.mubr.bf16.gmra.mrb[0].mxu0 %v2702
    %v2777 = vpop.f32.mrb[0].mxu0
    %v2778 = vadd.f32 0.0, %v2777
    %v2779 = vpop.f32.mrb[0].mxu0
    %v2780 = vpop.f32.mrb[0].mxu0
    %v2781 = vadd.f32 0.0, %v2780
    %v2782 = vpop.f32.mrb[0].mxu0
    %2783 = vmatprep.mubr.bf16.mxu0 0
    %2784 = vmatmul.mubr.bf16.gmra.mrb[0].mxu0 %v2705
    %v2785 = vpop.f32.mrb[0].mxu0
    %v2786 = vadd.f32 0.0, %v2785
    %v2787 = vpop.f32.mrb[0].mxu0
    %v2788 = vpop.f32.mrb[0].mxu0
    %v2789 = vadd.f32 0.0, %v2788
    %v2790 = vpop.f32.mrb[0].mxu0
    %2791 = vmatprep.mubr.bf16.mxu0 0
    %2792 = vmatmul.mubr.bf16.gmra.mrb[0].mxu0 %v2708
    %v2793 = vpop.f32.mrb[0].mxu0
    %v2794 = vadd.f32 0.0, %v2793
    %v2795 = vpop.f32.mrb[0].mxu0
    %v2796 = vpop.f32.mrb[0].mxu0
    %v2797 = vadd.f32 0.0, %v2796
    %v2798 = vpop.f32.mrb[0].mxu0
    %2799 = vmatprep.mubr.bf16.mxu0 0
    %2800 = vmatmul.mubr.bf16.gmra.mrb[0].mxu0 %v2711
    %v2801 = vpop.f32.mrb[0].mxu0
    %v2802 = vadd.f32 0.0, %v2801
    %v2803 = vpop.f32.mrb[0].mxu0
    %v2804 = vpop.f32.mrb[0].mxu0
    %v2805 = vadd.f32 0.0, %v2804
    %v2806 = vpop.f32.mrb[0].mxu0
    %2807 = vmatprep.mubr.bf16.mxu0 0
    %2808 = vmatmul.mubr.bf16.gmra.mrb[0].mxu0 %v2714
    %v2809 = vpop.f32.mrb[0].mxu0
    %v2810 = vadd.f32 0.0, %v2809
    %v2811 = vpop.f32.mrb[0].mxu0
    %v2812 = vpop.f32.mrb[0].mxu0
    %v2813 = vadd.f32 0.0, %v2812
    %v2814 = vpop.f32.mrb[0].mxu0
    %2815 = vdwg.mxu0
    %v2816 = vadd.f32 %v2674, %v2754
    %v2817 = vadd.f32 %v2675, %v2757
    %v2818 = vadd.f32 %v2676, %v2762
    %v2819 = vadd.f32 %v2677, %v2765
    %v2820 = vadd.f32 %v2678, %v2770
    %v2821 = vadd.f32 %v2679, %v2773
    %v2822 = vadd.f32 %v2680, %v2778
    %v2823 = vadd.f32 %v2681, %v2781
    %v2824 = vadd.f32 %v2682, %v2786
    %v2825 = vadd.f32 %v2683, %v2789
    %v2826 = vadd.f32 %v2684, %v2794
    %v2827 = vadd.f32 %v2685, %v2797
    %v2828 = vadd.f32 %v2686, %v2802
    %v2829 = vadd.f32 %v2687, %v2805
    %v2830 = vadd.f32 %v2688, %v2810
    %v2831 = vadd.f32 %v2689, %v2813
    %v2832 = vld [vmem:[%s4] sm:$0x1]
    %v2834 = vlaneseq
    %v2835 = vshrl.u32 %v2834, 7
    %v2836 = vsub.s32 0, %v2835
    %v2837 = vrot.slane %v2832, %v2836
    %v2839 = vadd.f32 %v2816, %v2837
    %v2840 = vadd.f32 %v2817, %v2837
    %v2841 = vadd.f32 %v2818, %v2837
    %v2842 = vadd.f32 %v2819, %v2837
    %v2843 = vadd.f32 %v2820, %v2837
    %v2844 = vadd.f32 %v2821, %v2837
    %v2845 = vadd.f32 %v2822, %v2837
    %v2846 = vadd.f32 %v2823, %v2837
    %v2847 = vadd.f32 %v2824, %v2837
    %v2848 = vadd.f32 %v2825, %v2837
    %v2849 = vadd.f32 %v2826, %v2837
    %v2850 = vadd.f32 %v2827, %v2837
    %v2851 = vadd.f32 %v2828, %v2837
    %v2852 = vadd.f32 %v2829, %v2837
    %v2853 = vadd.f32 %v2830, %v2837
    %v2854 = vadd.f32 %v2831, %v2837
    %v2855 = vmax.f32 %v2839, 0.0
    %v2856 = vmax.f32 %v2840, 0.0
    %v2857 = vmax.f32 %v2841, 0.0
    %v2858 = vmax.f32 %v2842, 0.0
    %v2859 = vmax.f32 %v2843, 0.0
    %v2860 = vmax.f32 %v2844, 0.0
    %v2861 = vmax.f32 %v2845, 0.0
    %v2862 = vmax.f32 %v2846, 0.0
    %v2863 = vmax.f32 %v2847, 0.0
    %v2864 = vmax.f32 %v2848, 0.0
    %v2865 = vmax.f32 %v2849, 0.0
    %v2866 = vmax.f32 %v2850, 0.0
    %v2867 = vmax.f32 %v2851, 0.0
    %v2868 = vmax.f32 %v2852, 0.0
    %v2869 = vmax.f32 %v2853, 0.0
    %v2870 = vmax.f32 %v2854, 0.0
    %v2871 = vpack.c.bf16 %v2856, %v2855
    %v2872 = vpack.c.bf16 %v2858, %v2857
    %v2873 = vpack.c.bf16 %v2860, %v2859
    %v2874 = vpack.c.bf16 %v2862, %v2861
    %v2875 = vpack.c.bf16 %v2864, %v2863
    %v2876 = vpack.c.bf16 %v2866, %v2865
    %v2877 = vpack.c.bf16 %v2868, %v2867
    %v2878 = vpack.c.bf16 %v2870, %v2869
    %v2879 = vld [vmem:[%s5] sm:$0xf]
    %v2880 = vld [vmem:[%s6] sm:$0x1]
    %v2882 = vlaneseq
    %v2883 = vshrl.u32 %v2882, 7
    %v2884 = vsub.s32 0, %v2883
    %v2885 = vrot.slane %v2880, %v2884
    %v2888 = vsel %vm1588, %v2871, 0
    %v2891 = vsel %vm1588, %v2872, 0
    %v2894 = vsel %vm1588, %v2873, 0
    %v2897 = vsel %vm1588, %v2874, 0
    %v2900 = vsel %vm1588, %v2875, 0
    %v2903 = vsel %vm1588, %v2876, 0
    %v2906 = vsel %vm1588, %v2877, 0
    %v2909 = vsel %vm1588, %v2878, 0
    %v2912 = vsel %vm1613, %v2879, 0
    %2914 = vmatprep.subr.bf16.mxu0 0
    %2915 = vmatpush1.bf16.msra.mxu0 %v2912
    %2916 = vmatprep.subr.bf16.mxu0 0
    %2917 = vmatpush1.bf16.msra.mxu0 0
    %2918 = vmatprep.subr.bf16.mxu0 0
    %2919 = vmatpush1.bf16.msra.mxu0 0
    %2920 = vmatprep.subr.bf16.mxu0 0
    %2921 = vmatpush1.bf16.msra.mxu0 0
    %2922 = vmatprep.subr.bf16.mxu0 0
    %2923 = vmatpush1.bf16.msra.mxu0 0
    %2924 = vmatprep.subr.bf16.mxu0 0
    %2925 = vmatpush1.bf16.msra.mxu0 0
    %2926 = vmatprep.subr.bf16.mxu0 0
    %2927 = vmatpush1.bf16.msra.mxu0 0
    %2928 = vmatprep.subr.bf16.mxu0 0
    %2929 = vmatpush1.bf16.msra.mxu0 0
    %2930 = vmatprep.subr.bf16.mxu0 0
    %2931 = vmatpush1.bf16.msra.mxu0 0
    %2932 = vmatprep.subr.bf16.mxu0 0
    %2933 = vmatpush1.bf16.msra.mxu0 0
    %2934 = vmatprep.subr.bf16.mxu0 0
    %2935 = vmatpush1.bf16.msra.mxu0 0
    %2936 = vmatprep.subr.bf16.mxu0 0
    %2937 = vmatpush1.bf16.msra.mxu0 0
    %2938 = vmatprep.subr.bf16.mxu0 0
    %2939 = vmatpush1.bf16.msra.mxu0 0
    %2940 = vmatprep.subr.bf16.mxu0 0
    %2941 = vmatpush1.bf16.msra.mxu0 0
    %2942 = vmatprep.subr.bf16.mxu0 0
    %2943 = vmatpush1.bf16.msra.mxu0 0
    %2944 = vmatprep.subr.bf16.mxu0 0
    %2945 = vmatpush1.bf16.msra.mxu0 0
    %2946 = vmatprep.mubr.bf16.mxu0 0
    %2947 = vmatmul.mubr.bf16.gmra.mrb[0].mxu0 %v2888
    %v2948 = vpop.f32.mrb[0].mxu0
    %v2949 = vadd.f32 %v2885, %v2948
    %v2950 = vpop.f32.mrb[0].mxu0
    %v2951 = vpop.f32.mrb[0].mxu0
    %v2952 = vadd.f32 %v2885, %v2951
    %v2953 = vpop.f32.mrb[0].mxu0
    %2954 = vmatprep.mubr.bf16.mxu0 0
    %2955 = vmatmul.mubr.bf16.gmra.mrb[0].mxu0 %v2891
    %v2956 = vpop.f32.mrb[0].mxu0
    %v2957 = vadd.f32 %v2885, %v2956
    %v2958 = vpop.f32.mrb[0].mxu0
    %v2959 = vpop.f32.mrb[0].mxu0
    %v2960 = vadd.f32 %v2885, %v2959
    %v2961 = vpop.f32.mrb[0].mxu0
    %2962 = vmatprep.mubr.bf16.mxu0 0
    %2963 = vmatmul.mubr.bf16.gmra.mrb[0].mxu0 %v2894
    %v2964 = vpop.f32.mrb[0].mxu0
    %v2965 = vadd.f32 %v2885, %v2964
    %v2966 = vpop.f32.mrb[0].mxu0
    %v2967 = vpop.f32.mrb[0].mxu0
    %v2968 = vadd.f32 %v2885, %v2967
    %v2969 = vpop.f32.mrb[0].mxu0
    %2970 = vmatprep.mubr.bf16.mxu0 0
    %2971 = vmatmul.mubr.bf16.gmra.mrb[0].mxu0 %v2897
    %v2972 = vpop.f32.mrb[0].mxu0
    %v2973 = vadd.f32 %v2885, %v2972
    %v2974 = vpop.f32.mrb[0].mxu0
    %v2975 = vpop.f32.mrb[0].mxu0
    %v2976 = vadd.f32 %v2885, %v2975
    %v2977 = vpop.f32.mrb[0].mxu0
    %2978 = vmatprep.mubr.bf16.mxu0 0
    %2979 = vmatmul.mubr.bf16.gmra.mrb[0].mxu0 %v2900
    %v2980 = vpop.f32.mrb[0].mxu0
    %v2981 = vadd.f32 %v2885, %v2980
    %v2982 = vpop.f32.mrb[0].mxu0
    %v2983 = vpop.f32.mrb[0].mxu0
    %v2984 = vadd.f32 %v2885, %v2983
    %v2985 = vpop.f32.mrb[0].mxu0
    %2986 = vmatprep.mubr.bf16.mxu0 0
    %2987 = vmatmul.mubr.bf16.gmra.mrb[0].mxu0 %v2903
    %v2988 = vpop.f32.mrb[0].mxu0
    %v2989 = vadd.f32 %v2885, %v2988
    %v2990 = vpop.f32.mrb[0].mxu0
    %v2991 = vpop.f32.mrb[0].mxu0
    %v2992 = vadd.f32 %v2885, %v2991
    %v2993 = vpop.f32.mrb[0].mxu0
    %2994 = vmatprep.mubr.bf16.mxu0 0
    %2995 = vmatmul.mubr.bf16.gmra.mrb[0].mxu0 %v2906
    %v2996 = vpop.f32.mrb[0].mxu0
    %v2997 = vadd.f32 %v2885, %v2996
    %v2998 = vpop.f32.mrb[0].mxu0
    %v2999 = vpop.f32.mrb[0].mxu0
    %v3000 = vadd.f32 %v2885, %v2999
    %v3001 = vpop.f32.mrb[0].mxu0
    %3002 = vmatprep.mubr.bf16.mxu0 0
    %3003 = vmatmul.mubr.bf16.gmra.mrb[0].mxu0 %v2909
    %v3004 = vpop.f32.mrb[0].mxu0
    %v3005 = vadd.f32 %v2885, %v3004
    %v3006 = vpop.f32.mrb[0].mxu0
    %v3007 = vpop.f32.mrb[0].mxu0
    %v3008 = vadd.f32 %v2885, %v3007
    %v3009 = vpop.f32.mrb[0].mxu0
    %3010 = vdwg.mxu0
    %v3011 = vld [vmem:[%s1] sm:$0xf]
    %v3012 = vld [vmem:[%s1 + $0x4] sm:$0xf]
    %v3013 = vld [vmem:[%s1 + $0x8] sm:$0xf]
    %v3014 = vld [vmem:[%s1 + $0xc] sm:$0xf]
    %v3015 = vld [vmem:[%s1 + $0x10] sm:$0xf]
    %v3016 = vld [vmem:[%s1 + $0x14] sm:$0xf]
    %v3017 = vld [vmem:[%s1 + $0x18] sm:$0xf]
    %v3018 = vld [vmem:[%s1 + $0x1c] sm:$0xf]
    %v3019 = vld [vmem:[%s1 + $0x20] sm:$0xf]
    %v3020 = vld [vmem:[%s1 + $0x24] sm:$0xf]
    %v3021 = vld [vmem:[%s1 + $0x28] sm:$0xf]
    %v3022 = vld [vmem:[%s1 + $0x2c] sm:$0xf]
    %v3023 = vld [vmem:[%s1 + $0x30] sm:$0xf]
    %v3024 = vld [vmem:[%s1 + $0x34] sm:$0xf]
    %v3025 = vld [vmem:[%s1 + $0x38] sm:$0xf]
    %v3026 = vld [vmem:[%s1 + $0x3c] sm:$0xf]
    %v3027 = vld [vmem:[%s7] sm:$0x3]
    %v3044 = vunpack.c.l.b16 %v3011
    %v3045 = vunpack.c.l.b16 %v3012
    %v3046 = vunpack.c.l.b16 %v3013
    %v3047 = vunpack.c.l.b16 %v3014
    %v3048 = vunpack.c.l.b16 %v3015
    %v3049 = vunpack.c.l.b16 %v3016
    %v3050 = vunpack.c.l.b16 %v3017
    %v3051 = vunpack.c.l.b16 %v3018
    %v3052 = vunpack.c.l.b16 %v3019
    %v3053 = vunpack.c.l.b16 %v3020
    %v3054 = vunpack.c.l.b16 %v3021
    %v3055 = vunpack.c.l.b16 %v3022
    %v3056 = vunpack.c.l.b16 %v3023
    %v3057 = vunpack.c.l.b16 %v3024
    %v3058 = vunpack.c.l.b16 %v3025
    %v3059 = vunpack.c.l.b16 %v3026
    %v3060 = vpack.c.b16 %v3045, %v3044
    %v3061 = vpack.c.b16 %v3047, %v3046
    %v3062 = vpack.c.b16 %v3049, %v3048
    %v3063 = vpack.c.b16 %v3051, %v3050
    %v3064 = vpack.c.b16 %v3053, %v3052
    %v3065 = vpack.c.b16 %v3055, %v3054
    %v3066 = vpack.c.b16 %v3057, %v3056
    %v3067 = vpack.c.b16 %v3059, %v3058
    %vm3068 = vcmask 31744
    %v3070 = vsel %vm3068, %v3060, 0
    %v3073 = vsel %vm3068, %v3061, 0
    %v3076 = vsel %vm3068, %v3062, 0
    %v3079 = vsel %vm3068, %v3063, 0
    %v3082 = vsel %vm3068, %v3064, 0
    %v3085 = vsel %vm3068, %v3065, 0
    %v3088 = vsel %vm3068, %v3066, 0
    %v3091 = vsel %vm3068, %v3067, 0
    %v3094 = vsel %vm753, %v3027, 0
    %3096 = vmatprep.subr.bf16.mxu0 0
    %3097 = vmatpush1.bf16.msra.mxu0 %v3094
    %3098 = vmatprep.subr.bf16.mxu0 0
    %3099 = vmatpush1.bf16.msra.mxu0 0
    %3100 = vmatprep.subr.bf16.mxu0 0
    %3101 = vmatpush1.bf16.msra.mxu0 0
    %3102 = vmatprep.subr.bf16.mxu0 0
    %3103 = vmatpush1.bf16.msra.mxu0 0
    %3104 = vmatprep.subr.bf16.mxu0 0
    %3105 = vmatpush1.bf16.msra.mxu0 0
    %3106 = vmatprep.subr.bf16.mxu0 0
    %3107 = vmatpush1.bf16.msra.mxu0 0
    %3108 = vmatprep.subr.bf16.mxu0 0
    %3109 = vmatpush1.bf16.msra.mxu0 0
    %3110 = vmatprep.subr.bf16.mxu0 0
    %3111 = vmatpush1.bf16.msra.mxu0 0
    %3112 = vmatprep.subr.bf16.mxu0 0
    %3113 = vmatpush1.bf16.msra.mxu0 0
    %3114 = vmatprep.subr.bf16.mxu0 0
    %3115 = vmatpush1.bf16.msra.mxu0 0
    %3116 = vmatprep.subr.bf16.mxu0 0
    %3117 = vmatpush1.bf16.msra.mxu0 0
    %3118 = vmatprep.subr.bf16.mxu0 0
    %3119 = vmatpush1.bf16.msra.mxu0 0
    %3120 = vmatprep.subr.bf16.mxu0 0
    %3121 = vmatpush1.bf16.msra.mxu0 0
    %3122 = vmatprep.subr.bf16.mxu0 0
    %3123 = vmatpush1.bf16.msra.mxu0 0
    %3124 = vmatprep.subr.bf16.mxu0 0
    %3125 = vmatpush1.bf16.msra.mxu0 0
    %3126 = vmatprep.subr.bf16.mxu0 0
    %3127 = vmatpush1.bf16.msra.mxu0 0
    %3128 = vmatprep.mubr.bf16.mxu0 0
    %3129 = vmatmul.mubr.bf16.gmra.mrb[0].mxu0 %v3070
    %v3130 = vpop.f32.mrb[0].mxu0
    %v3131 = vadd.f32 0.0, %v3130
    %v3132 = vpop.f32.mrb[0].mxu0
    %v3133 = vpop.f32.mrb[0].mxu0
    %v3134 = vadd.f32 0.0, %v3133
    %v3135 = vpop.f32.mrb[0].mxu0
    %3136 = vmatprep.mubr.bf16.mxu0 0
    %3137 = vmatmul.mubr.bf16.gmra.mrb[0].mxu0 %v3073
    %v3138 = vpop.f32.mrb[0].mxu0
    %v3139 = vadd.f32 0.0, %v3138
    %v3140 = vpop.f32.mrb[0].mxu0
    %v3141 = vpop.f32.mrb[0].mxu0
    %v3142 = vadd.f32 0.0, %v3141
    %v3143 = vpop.f32.mrb[0].mxu0
    %3144 = vmatprep.mubr.bf16.mxu0 0
    %3145 = vmatmul.mubr.bf16.gmra.mrb[0].mxu0 %v3076
    %v3146 = vpop.f32.mrb[0].mxu0
    %v3147 = vadd.f32 0.0, %v3146
    %v3148 = vpop.f32.mrb[0].mxu0
    %v3149 = vpop.f32.mrb[0].mxu0
    %v3150 = vadd.f32 0.0, %v3149
    %v3151 = vpop.f32.mrb[0].mxu0
    %3152 = vmatprep.mubr.bf16.mxu0 0
    %3153 = vmatmul.mubr.bf16.gmra.mrb[0].mxu0 %v3079
    %v3154 = vpop.f32.mrb[0].mxu0
    %v3155 = vadd.f32 0.0, %v3154
    %v3156 = vpop.f32.mrb[0].mxu0
    %v3157 = vpop.f32.mrb[0].mxu0
    %v3158 = vadd.f32 0.0, %v3157
    %v3159 = vpop.f32.mrb[0].mxu0
    %3160 = vmatprep.mubr.bf16.mxu0 0
    %3161 = vmatmul.mubr.bf16.gmra.mrb[0].mxu0 %v3082
    %v3162 = vpop.f32.mrb[0].mxu0
    %v3163 = vadd.f32 0.0, %v3162
    %v3164 = vpop.f32.mrb[0].mxu0
    %v3165 = vpop.f32.mrb[0].mxu0
    %v3166 = vadd.f32 0.0, %v3165
    %v3167 = vpop.f32.mrb[0].mxu0
    %3168 = vmatprep.mubr.bf16.mxu0 0
    %3169 = vmatmul.mubr.bf16.gmra.mrb[0].mxu0 %v3085
    %v3170 = vpop.f32.mrb[0].mxu0
    %v3171 = vadd.f32 0.0, %v3170
    %v3172 = vpop.f32.mrb[0].mxu0
    %v3173 = vpop.f32.mrb[0].mxu0
    %v3174 = vadd.f32 0.0, %v3173
    %v3175 = vpop.f32.mrb[0].mxu0
    %3176 = vmatprep.mubr.bf16.mxu0 0
    %3177 = vmatmul.mubr.bf16.gmra.mrb[0].mxu0 %v3088
    %v3178 = vpop.f32.mrb[0].mxu0
    %v3179 = vadd.f32 0.0, %v3178
    %v3180 = vpop.f32.mrb[0].mxu0
    %v3181 = vpop.f32.mrb[0].mxu0
    %v3182 = vadd.f32 0.0, %v3181
    %v3183 = vpop.f32.mrb[0].mxu0
    %3184 = vmatprep.mubr.bf16.mxu0 0
    %3185 = vmatmul.mubr.bf16.gmra.mrb[0].mxu0 %v3091
    %v3186 = vpop.f32.mrb[0].mxu0
    %v3187 = vadd.f32 0.0, %v3186
    %v3188 = vpop.f32.mrb[0].mxu0
    %v3189 = vpop.f32.mrb[0].mxu0
    %v3190 = vadd.f32 0.0, %v3189
    %v3191 = vpop.f32.mrb[0].mxu0
    %3192 = vdwg.mxu0
    %v3193 = vadd.f32 %v2949, %v3131
    %v3194 = vadd.f32 %v2952, %v3134
    %v3195 = vadd.f32 %v2957, %v3139
    %v3196 = vadd.f32 %v2960, %v3142
    %v3197 = vadd.f32 %v2965, %v3147
    %v3198 = vadd.f32 %v2968, %v3150
    %v3199 = vadd.f32 %v2973, %v3155
    %v3200 = vadd.f32 %v2976, %v3158
    %v3201 = vadd.f32 %v2981, %v3163
    %v3202 = vadd.f32 %v2984, %v3166
    %v3203 = vadd.f32 %v2989, %v3171
    %v3204 = vadd.f32 %v2992, %v3174
    %v3205 = vadd.f32 %v2997, %v3179
    %v3206 = vadd.f32 %v3000, %v3182
    %v3207 = vadd.f32 %v3005, %v3187
    %v3208 = vadd.f32 %v3008, %v3190
    %v3209 = vmax.f32 %v3193, 0.0
    %v3210 = vmax.f32 %v3194, 0.0
    %v3211 = vmax.f32 %v3195, 0.0
    %v3212 = vmax.f32 %v3196, 0.0
    %v3213 = vmax.f32 %v3197, 0.0
    %v3214 = vmax.f32 %v3198, 0.0
    %v3215 = vmax.f32 %v3199, 0.0
    %v3216 = vmax.f32 %v3200, 0.0
    %v3217 = vmax.f32 %v3201, 0.0
    %v3218 = vmax.f32 %v3202, 0.0
    %v3219 = vmax.f32 %v3203, 0.0
    %v3220 = vmax.f32 %v3204, 0.0
    %v3221 = vmax.f32 %v3205, 0.0
    %v3222 = vmax.f32 %v3206, 0.0
    %v3223 = vmax.f32 %v3207, 0.0
    %v3224 = vmax.f32 %v3208, 0.0
    %vm3225 = vcmask 261120
    %3226 = vst.msk [vmem:[#allocation2] sm:$0xff] %vm3225, %v3209
    %3227 = vst.msk [vmem:[#allocation2 + $0x8] sm:$0xff] %vm3225, %v3210
    %3228 = vst.msk [vmem:[#allocation2 + $0x10] sm:$0xff] %vm3225, %v3211
    %3229 = vst.msk [vmem:[#allocation2 + $0x18] sm:$0xff] %vm3225, %v3212
    %3230 = vst.msk [vmem:[#allocation2 + $0x20] sm:$0xff] %vm3225, %v3213
    %3231 = vst.msk [vmem:[#allocation2 + $0x28] sm:$0xff] %vm3225, %v3214
    %3232 = vst.msk [vmem:[#allocation2 + $0x30] sm:$0xff] %vm3225, %v3215
    %3233 = vst.msk [vmem:[#allocation2 + $0x38] sm:$0xff] %vm3225, %v3216
    %3234 = vst.msk [vmem:[#allocation2 + $0x40] sm:$0xff] %vm3225, %v3217
    %3235 = vst.msk [vmem:[#allocation2 + $0x48] sm:$0xff] %vm3225, %v3218
    %3236 = vst.msk [vmem:[#allocation2 + $0x50] sm:$0xff] %vm3225, %v3219
    %3237 = vst.msk [vmem:[#allocation2 + $0x58] sm:$0xff] %vm3225, %v3220
    %3238 = vst.msk [vmem:[#allocation2 + $0x60] sm:$0xff] %vm3225, %v3221
    %3239 = vst.msk [vmem:[#allocation2 + $0x68] sm:$0xff] %vm3225, %v3222
    %3240 = vst.msk [vmem:[#allocation2 + $0x70] sm:$0xff] %vm3225, %v3223
    %3241 = vst.msk [vmem:[#allocation2 + $0x78] sm:$0xff] %vm3225, %v3224
    // Predicated region
    $region34: #{bottleneck_forward.1} parent=1 // pred_check
      _
    $region35: #{bottleneck_forward.1} parent=1 // pred_check_branch
      %3243 = sbr.rel (0) target = $region37
    $region36: #{bottleneck_forward.1} parent=1 // pred_region
      %s3245 = ssub.s32 2048, 2048
      %3246 = vsyncadd [#allocation3], %s3245
      %s3247 = sshll.u32 [#allocation2], 4
      %s3248 = int_to_ptr.vmem [resolvable:$true] %s3247
      %3253 = dma.vmem_to_hbm [thread:$0]  %s3248, 2048, %s8, [#allocation3], 128, 128, 8
    $region37: #{bottleneck_forward.1} parent=1 // pred_fallthru
      _
    // Predicated region
    $region38: #{bottleneck_forward.1} parent=1 // pred_check
      _
    $region39: #{bottleneck_forward.1} parent=1 // pred_check_branch
      %3255 = sbr.rel (0) target = $region41
    $region40: #{bottleneck_forward.1} parent=1 // pred_region
      %3256 = dma.done [#allocation3], 2048
    $region41: #{bottleneck_forward.1} parent=1 // pred_fallthru
      _
    %3257 = vsyncpa [#allocation3], 1

// kernel: bottleneck_forward.1
$region0: #{bottleneck_forward.1}
  #allocation0 [shape = 'u32[]', space=smem, size = 0x4, offset = 0x4, fixed_abs, tag = 'smem constant byte address 0x4 - core index']
  #allocation1 [shape = 'u32[144,128]{1,0:T(1,128)}', space=vmem, size = 0x12000, scoped, tag = 'internal scratch']
  %s0 = inlined_call_operand.vmem [shape: bf16[9,128,5], index: 0, kind: input, shape index: {}]
  %s1 = inlined_call_operand.vmem [shape: bf16[128,4], index: 1, kind: input, shape index: {}]
  %s2 = inlined_call_operand.vmem [shape: bf16[5,8], index: 2, kind: input, shape index: {}]
  %s3 = inlined_call_operand.vmem [shape: bf16[9,8,8], index: 3, kind: input, shape index: {}]
  %s4 = inlined_call_operand.vmem [shape: f32[1,8], index: 4, kind: input, shape index: {}]
  %s5 = inlined_call_operand.vmem [shape: bf16[8,32], index: 5, kind: input, shape index: {}]
  %s6 = inlined_call_operand.vmem [shape: f32[1,32], index: 6, kind: input, shape index: {}]
  %s7 = inlined_call_operand.vmem [shape: bf16[4,32], index: 7, kind: input, shape index: {}]
  %s8 = inlined_call_operand.hbm [shape: f32[128,32], index: 8, kind: output, shape index: {}]
  %s9 = sld [smem:[#allocation0]]
  $region42: #{bottleneck_forward.1} parent=0
    _
  %s11 = ssub.s32 1, %s9
  %s12 = scalar_select 0, %s11, %s9
  $region1: #{bottleneck_forward.1} parent=0
    #allocation2 [shape = 'u8[65536]{0}', space=vmem, size = 0x10000, scoped, tag = 'output window, operand 0, single buffered']
    #allocation3 [shape = 's32[1]{0}', space=sflag, size = 0x4, scoped, tag = 'scoped memory for bottleneck_forward.1']
    %13 = vsyncpa [#allocation3], 0
    // Predicated region
    $region2: #{bottleneck_forward.1} parent=1 // pred_check
      _
    $region3: #{bottleneck_forward.1} parent=1 // pred_check_branch
      %15 = sbr.rel (0) target = $region5
    $region4: #{bottleneck_forward.1} parent=1 // pred_region
      _
    $region5: #{bottleneck_forward.1} parent=1 // pred_fallthru
      _
    // Predicated region
    $region6: #{bottleneck_forward.1} parent=1 // pred_check
      _
    $region7: #{bottleneck_forward.1} parent=1 // pred_check_branch
      %17 = sbr.rel (0) target = $region9
    $region8: #{bottleneck_forward.1} parent=1 // pred_region
      _
    $region9: #{bottleneck_forward.1} parent=1 // pred_fallthru
      _
    // Predicated region
    $region10: #{bottleneck_forward.1} parent=1 // pred_check
      _
    $region11: #{bottleneck_forward.1} parent=1 // pred_check_branch
      %19 = sbr.rel (0) target = $region13
    $region12: #{bottleneck_forward.1} parent=1 // pred_region
      _
    $region13: #{bottleneck_forward.1} parent=1 // pred_fallthru
      _
    // Predicated region
    $region14: #{bottleneck_forward.1} parent=1 // pred_check
      _
    $region15: #{bottleneck_forward.1} parent=1 // pred_check_branch
      %21 = sbr.rel (0) target = $region17
    $region16: #{bottleneck_forward.1} parent=1 // pred_region
      _
    $region17: #{bottleneck_forward.1} parent=1 // pred_fallthru
      _
    // Predicated region
    $region18: #{bottleneck_forward.1} parent=1 // pred_check
      _
    $region19: #{bottleneck_forward.1} parent=1 // pred_check_branch
      %23 = sbr.rel (0) target = $region21
    $region20: #{bottleneck_forward.1} parent=1 // pred_region
      _
    $region21: #{bottleneck_forward.1} parent=1 // pred_fallthru
      _
    // Predicated region
    $region22: #{bottleneck_forward.1} parent=1 // pred_check
      _
    $region23: #{bottleneck_forward.1} parent=1 // pred_check_branch
      %25 = sbr.rel (0) target = $region25
    $region24: #{bottleneck_forward.1} parent=1 // pred_region
      _
    $region25: #{bottleneck_forward.1} parent=1 // pred_fallthru
      _
    // Predicated region
    $region26: #{bottleneck_forward.1} parent=1 // pred_check
      _
    $region27: #{bottleneck_forward.1} parent=1 // pred_check_branch
      %27 = sbr.rel (0) target = $region29
    $region28: #{bottleneck_forward.1} parent=1 // pred_region
      _
    $region29: #{bottleneck_forward.1} parent=1 // pred_fallthru
      _
    // Predicated region
    $region30: #{bottleneck_forward.1} parent=1 // pred_check
      _
    $region31: #{bottleneck_forward.1} parent=1 // pred_check_branch
      %29 = sbr.rel (0) target = $region33
    $region32: #{bottleneck_forward.1} parent=1 // pred_region
      _
    $region33: #{bottleneck_forward.1} parent=1 // pred_fallthru
      _
    %v31 = vld [vmem:[%s0] sm:$0xf]
    %v32 = vld [vmem:[%s0 + $0x4] sm:$0xf]
    %v33 = vld [vmem:[%s0 + $0x8] sm:$0xf]
    %v34 = vld [vmem:[%s0 + $0xc] sm:$0xf]
    %v35 = vld [vmem:[%s0 + $0x10] sm:$0xf]
    %v36 = vld [vmem:[%s0 + $0x14] sm:$0xf]
    %v37 = vld [vmem:[%s0 + $0x18] sm:$0xf]
    %v38 = vld [vmem:[%s0 + $0x1c] sm:$0xf]
    %v39 = vld [vmem:[%s0 + $0x20] sm:$0xf]
    %v40 = vld [vmem:[%s0 + $0x24] sm:$0xf]
    %v41 = vld [vmem:[%s0 + $0x28] sm:$0xf]
    %v42 = vld [vmem:[%s0 + $0x2c] sm:$0xf]
    %v43 = vld [vmem:[%s0 + $0x30] sm:$0xf]
    %v44 = vld [vmem:[%s0 + $0x34] sm:$0xf]
    %v45 = vld [vmem:[%s0 + $0x38] sm:$0xf]
    %v46 = vld [vmem:[%s0 + $0x3c] sm:$0xf]
    %v47 = vld [vmem:[%s0 + $0x40] sm:$0xf]
    %v48 = vld [vmem:[%s0 + $0x44] sm:$0xf]
    %v49 = vld [vmem:[%s0 + $0x48] sm:$0xf]
    %v50 = vld [vmem:[%s0 + $0x4c] sm:$0xf]
    %v51 = vld [vmem:[%s0 + $0x50] sm:$0xf]
    %v52 = vld [vmem:[%s0 + $0x54] sm:$0xf]
    %v53 = vld [vmem:[%s0 + $0x58] sm:$0xf]
    %v54 = vld [vmem:[%s0 + $0x5c] sm:$0xf]
    %v55 = vld [vmem:[%s0 + $0x60] sm:$0xf]
    %v56 = vld [vmem:[%s0 + $0x64] sm:$0xf]
    %v57 = vld [vmem:[%s0 + $0x68] sm:$0xf]
    %v58 = vld [vmem:[%s0 + $0x6c] sm:$0xf]
    %v59 = vld [vmem:[%s0 + $0x70] sm:$0xf]
    %v60 = vld [vmem:[%s0 + $0x74] sm:$0xf]
    %v61 = vld [vmem:[%s0 + $0x78] sm:$0xf]
    %v62 = vld [vmem:[%s0 + $0x7c] sm:$0xf]
    %v63 = vld [vmem:[%s0 + $0x80] sm:$0xf]
    %v64 = vld [vmem:[%s0 + $0x84] sm:$0xf]
    %v65 = vld [vmem:[%s0 + $0x88] sm:$0xf]
    %v66 = vld [vmem:[%s0 + $0x8c] sm:$0xf]
    %v67 = vld [vmem:[%s0 + $0x90] sm:$0xf]
    %v68 = vld [vmem:[%s0 + $0x94] sm:$0xf]
    %v69 = vld [vmem:[%s0 + $0x98] sm:$0xf]
    %v70 = vld [vmem:[%s0 + $0x9c] sm:$0xf]
    %v71 = vld [vmem:[%s0 + $0xa0] sm:$0xf]
    %v72 = vld [vmem:[%s0 + $0xa4] sm:$0xf]
    %v73 = vld [vmem:[%s0 + $0xa8] sm:$0xf]
    %v74 = vld [vmem:[%s0 + $0xac] sm:$0xf]
    %v75 = vld [vmem:[%s0 + $0xb0] sm:$0xf]
    %v76 = vld [vmem:[%s0 + $0xb4] sm:$0xf]
    %v77 = vld [vmem:[%s0 + $0xb8] sm:$0xf]
    %v78 = vld [vmem:[%s0 + $0xbc] sm:$0xf]
    %v79 = vld [vmem:[%s0 + $0xc0] sm:$0xf]
    %v80 = vld [vmem:[%s0 + $0xc4] sm:$0xf]
    %v81 = vld [vmem:[%s0 + $0xc8] sm:$0xf]
    %v82 = vld [vmem:[%s0 + $0xcc] sm:$0xf]
    %v83 = vld [vmem:[%s0 + $0xd0] sm:$0xf]
    %v84 = vld [vmem:[%s0 + $0xd4] sm:$0xf]
    %v85 = vld [vmem:[%s0 + $0xd8] sm:$0xf]
    %v86 = vld [vmem:[%s0 + $0xdc] sm:$0xf]
    %v87 = vld [vmem:[%s0 + $0xe0] sm:$0xf]
    %v88 = vld [vmem:[%s0 + $0xe4] sm:$0xf]
    %v89 = vld [vmem:[%s0 + $0xe8] sm:$0xf]
    %v90 = vld [vmem:[%s0 + $0xec] sm:$0xf]
    %v91 = vld [vmem:[%s0 + $0xf0] sm:$0xf]
    %v92 = vld [vmem:[%s0 + $0xf4] sm:$0xf]
    %v93 = vld [vmem:[%s0 + $0xf8] sm:$0xf]
    %v94 = vld [vmem:[%s0 + $0xfc] sm:$0xf]
    %v95 = vld [vmem:[%s0 + $0x100] sm:$0xf]
    %v96 = vld [vmem:[%s0 + $0x104] sm:$0xf]
    %v97 = vld [vmem:[%s0 + $0x108] sm:$0xf]
    %v98 = vld [vmem:[%s0 + $0x10c] sm:$0xf]
    %v99 = vld [vmem:[%s0 + $0x110] sm:$0xf]
    %v100 = vld [vmem:[%s0 + $0x114] sm:$0xf]
    %v101 = vld [vmem:[%s0 + $0x118] sm:$0xf]
    %v102 = vld [vmem:[%s0 + $0x11c] sm:$0xf]
    %v103 = vld [vmem:[%s0 + $0x120] sm:$0xf]
    %v104 = vld [vmem:[%s0 + $0x124] sm:$0xf]
    %v105 = vld [vmem:[%s0 + $0x128] sm:$0xf]
    %v106 = vld [vmem:[%s0 + $0x12c] sm:$0xf]
    %v107 = vld [vmem:[%s0 + $0x130] sm:$0xf]
    %v108 = vld [vmem:[%s0 + $0x134] sm:$0xf]
    %v109 = vld [vmem:[%s0 + $0x138] sm:$0xf]
    %v110 = vld [vmem:[%s0 + $0x13c] sm:$0xf]
    %v111 = vld [vmem:[%s0 + $0x140] sm:$0xf]
    %v112 = vld [vmem:[%s0 + $0x144] sm:$0xf]
    %v113 = vld [vmem:[%s0 + $0x148] sm:$0xf]
    %v114 = vld [vmem:[%s0 + $0x14c] sm:$0xf]
    %v115 = vld [vmem:[%s0 + $0x150] sm:$0xf]
    %v116 = vld [vmem:[%s0 + $0x154] sm:$0xf]
    %v117 = vld [vmem:[%s0 + $0x158] sm:$0xf]
    %v118 = vld [vmem:[%s0 + $0x15c] sm:$0xf]
    %v119 = vld [vmem:[%s0 + $0x160] sm:$0xf]
    %v120 = vld [vmem:[%s0 + $0x164] sm:$0xf]
    %v121 = vld [vmem:[%s0 + $0x168] sm:$0xf]
    %v122 = vld [vmem:[%s0 + $0x16c] sm:$0xf]
    %v123 = vld [vmem:[%s0 + $0x170] sm:$0xf]
    %v124 = vld [vmem:[%s0 + $0x174] sm:$0xf]
    %v125 = vld [vmem:[%s0 + $0x178] sm:$0xf]
    %v126 = vld [vmem:[%s0 + $0x17c] sm:$0xf]
    %v127 = vld [vmem:[%s0 + $0x180] sm:$0xf]
    %v128 = vld [vmem:[%s0 + $0x184] sm:$0xf]
    %v129 = vld [vmem:[%s0 + $0x188] sm:$0xf]
    %v130 = vld [vmem:[%s0 + $0x18c] sm:$0xf]
    %v131 = vld [vmem:[%s0 + $0x190] sm:$0xf]
    %v132 = vld [vmem:[%s0 + $0x194] sm:$0xf]
    %v133 = vld [vmem:[%s0 + $0x198] sm:$0xf]
    %v134 = vld [vmem:[%s0 + $0x19c] sm:$0xf]
    %v135 = vld [vmem:[%s0 + $0x1a0] sm:$0xf]
    %v136 = vld [vmem:[%s0 + $0x1a4] sm:$0xf]
    %v137 = vld [vmem:[%s0 + $0x1a8] sm:$0xf]
    %v138 = vld [vmem:[%s0 + $0x1ac] sm:$0xf]
    %v139 = vld [vmem:[%s0 + $0x1b0] sm:$0xf]
    %v140 = vld [vmem:[%s0 + $0x1b4] sm:$0xf]
    %v141 = vld [vmem:[%s0 + $0x1b8] sm:$0xf]
    %v142 = vld [vmem:[%s0 + $0x1bc] sm:$0xf]
    %v143 = vld [vmem:[%s0 + $0x1c0] sm:$0xf]
    %v144 = vld [vmem:[%s0 + $0x1c4] sm:$0xf]
    %v145 = vld [vmem:[%s0 + $0x1c8] sm:$0xf]
    %v146 = vld [vmem:[%s0 + $0x1cc] sm:$0xf]
    %v147 = vld [vmem:[%s0 + $0x1d0] sm:$0xf]
    %v148 = vld [vmem:[%s0 + $0x1d4] sm:$0xf]
    %v149 = vld [vmem:[%s0 + $0x1d8] sm:$0xf]
    %v150 = vld [vmem:[%s0 + $0x1dc] sm:$0xf]
    %v151 = vld [vmem:[%s0 + $0x1e0] sm:$0xf]
    %v152 = vld [vmem:[%s0 + $0x1e4] sm:$0xf]
    %v153 = vld [vmem:[%s0 + $0x1e8] sm:$0xf]
    %v154 = vld [vmem:[%s0 + $0x1ec] sm:$0xf]
    %v155 = vld [vmem:[%s0 + $0x1f0] sm:$0xf]
    %v156 = vld [vmem:[%s0 + $0x1f4] sm:$0xf]
    %v157 = vld [vmem:[%s0 + $0x1f8] sm:$0xf]
    %v158 = vld [vmem:[%s0 + $0x1fc] sm:$0xf]
    %v159 = vld [vmem:[%s0 + $0x200] sm:$0xf]
    %v160 = vld [vmem:[%s0 + $0x204] sm:$0xf]
    %v161 = vld [vmem:[%s0 + $0x208] sm:$0xf]
    %v162 = vld [vmem:[%s0 + $0x20c] sm:$0xf]
    %v163 = vld [vmem:[%s0 + $0x210] sm:$0xf]
    %v164 = vld [vmem:[%s0 + $0x214] sm:$0xf]
    %v165 = vld [vmem:[%s0 + $0x218] sm:$0xf]
    %v166 = vld [vmem:[%s0 + $0x21c] sm:$0xf]
    %v167 = vld [vmem:[%s0 + $0x220] sm:$0xf]
    %v168 = vld [vmem:[%s0 + $0x224] sm:$0xf]
    %v169 = vld [vmem:[%s0 + $0x228] sm:$0xf]
    %v170 = vld [vmem:[%s0 + $0x22c] sm:$0xf]
    %v171 = vld [vmem:[%s0 + $0x230] sm:$0xf]
    %v172 = vld [vmem:[%s0 + $0x234] sm:$0xf]
    %v173 = vld [vmem:[%s0 + $0x238] sm:$0xf]
    %v174 = vld [vmem:[%s0 + $0x23c] sm:$0xf]
    %v175 = vld [vmem:[%s2] sm:$0x7]
    %v320 = vunpack.c.l.b16 %v31
    %v321 = vunpack.c.l.b16 %v32
    %v322 = vunpack.c.l.b16 %v33
    %v323 = vunpack.c.l.b16 %v34
    %v324 = vunpack.c.l.b16 %v35
    %v325 = vunpack.c.l.b16 %v36
    %v326 = vunpack.c.l.b16 %v37
    %v327 = vunpack.c.l.b16 %v38
    %v328 = vunpack.c.l.b16 %v39
    %v329 = vunpack.c.l.b16 %v40
    %v330 = vunpack.c.l.b16 %v41
    %v331 = vunpack.c.l.b16 %v42
    %v332 = vunpack.c.l.b16 %v43
    %v333 = vunpack.c.l.b16 %v44
    %v334 = vunpack.c.l.b16 %v45
    %v335 = vunpack.c.l.b16 %v46
    %v336 = vunpack.c.l.b16 %v47
    %v337 = vunpack.c.l.b16 %v48
    %v338 = vunpack.c.l.b16 %v49
    %v339 = vunpack.c.l.b16 %v50
    %v340 = vunpack.c.l.b16 %v51
    %v341 = vunpack.c.l.b16 %v52
    %v342 = vunpack.c.l.b16 %v53
    %v343 = vunpack.c.l.b16 %v54
    %v344 = vunpack.c.l.b16 %v55
    %v345 = vunpack.c.l.b16 %v56
    %v346 = vunpack.c.l.b16 %v57
    %v347 = vunpack.c.l.b16 %v58
    %v348 = vunpack.c.l.b16 %v59
    %v349 = vunpack.c.l.b16 %v60
    %v350 = vunpack.c.l.b16 %v61
    %v351 = vunpack.c.l.b16 %v62
    %v352 = vunpack.c.l.b16 %v63
    %v353 = vunpack.c.l.b16 %v64
    %v354 = vunpack.c.l.b16 %v65
    %v355 = vunpack.c.l.b16 %v66
    %v356 = vunpack.c.l.b16 %v67
    %v357 = vunpack.c.l.b16 %v68
    %v358 = vunpack.c.l.b16 %v69
    %v359 = vunpack.c.l.b16 %v70
    %v360 = vunpack.c.l.b16 %v71
    %v361 = vunpack.c.l.b16 %v72
    %v362 = vunpack.c.l.b16 %v73
    %v363 = vunpack.c.l.b16 %v74
    %v364 = vunpack.c.l.b16 %v75
    %v365 = vunpack.c.l.b16 %v76
    %v366 = vunpack.c.l.b16 %v77
    %v367 = vunpack.c.l.b16 %v78
    %v368 = vunpack.c.l.b16 %v79
    %v369 = vunpack.c.l.b16 %v80
    %v370 = vunpack.c.l.b16 %v81
    %v371 = vunpack.c.l.b16 %v82
    %v372 = vunpack.c.l.b16 %v83
    %v373 = vunpack.c.l.b16 %v84
    %v374 = vunpack.c.l.b16 %v85
    %v375 = vunpack.c.l.b16 %v86
    %v376 = vunpack.c.l.b16 %v87
    %v377 = vunpack.c.l.b16 %v88
    %v378 = vunpack.c.l.b16 %v89
    %v379 = vunpack.c.l.b16 %v90
    %v380 = vunpack.c.l.b16 %v91
    %v381 = vunpack.c.l.b16 %v92
    %v382 = vunpack.c.l.b16 %v93
    %v383 = vunpack.c.l.b16 %v94
    %v384 = vunpack.c.l.b16 %v95
    %v385 = vunpack.c.l.b16 %v96
    %v386 = vunpack.c.l.b16 %v97
    %v387 = vunpack.c.l.b16 %v98
    %v388 = vunpack.c.l.b16 %v99
    %v389 = vunpack.c.l.b16 %v100
    %v390 = vunpack.c.l.b16 %v101
    %v391 = vunpack.c.l.b16 %v102
    %v392 = vunpack.c.l.b16 %v103
    %v393 = vunpack.c.l.b16 %v104
    %v394 = vunpack.c.l.b16 %v105
    %v395 = vunpack.c.l.b16 %v106
    %v396 = vunpack.c.l.b16 %v107
    %v397 = vunpack.c.l.b16 %v108
    %v398 = vunpack.c.l.b16 %v109
    %v399 = vunpack.c.l.b16 %v110
    %v400 = vunpack.c.l.b16 %v111
    %v401 = vunpack.c.l.b16 %v112
    %v402 = vunpack.c.l.b16 %v113
    %v403 = vunpack.c.l.b16 %v114
    %v404 = vunpack.c.l.b16 %v115
    %v405 = vunpack.c.l.b16 %v116
    %v406 = vunpack.c.l.b16 %v117
    %v407 = vunpack.c.l.b16 %v118
    %v408 = vunpack.c.l.b16 %v119
    %v409 = vunpack.c.l.b16 %v120
    %v410 = vunpack.c.l.b16 %v121
    %v411 = vunpack.c.l.b16 %v122
    %v412 = vunpack.c.l.b16 %v123
    %v413 = vunpack.c.l.b16 %v124
    %v414 = vunpack.c.l.b16 %v125
    %v415 = vunpack.c.l.b16 %v126
    %v416 = vunpack.c.l.b16 %v127
    %v417 = vunpack.c.l.b16 %v128
    %v418 = vunpack.c.l.b16 %v129
    %v419 = vunpack.c.l.b16 %v130
    %v420 = vunpack.c.l.b16 %v131
    %v421 = vunpack.c.l.b16 %v132
    %v422 = vunpack.c.l.b16 %v133
    %v423 = vunpack.c.l.b16 %v134
    %v424 = vunpack.c.l.b16 %v135
    %v425 = vunpack.c.l.b16 %v136
    %v426 = vunpack.c.l.b16 %v137
    %v427 = vunpack.c.l.b16 %v138
    %v428 = vunpack.c.l.b16 %v139
    %v429 = vunpack.c.l.b16 %v140
    %v430 = vunpack.c.l.b16 %v141
    %v431 = vunpack.c.l.b16 %v142
    %v432 = vunpack.c.l.b16 %v143
    %v433 = vunpack.c.l.b16 %v144
    %v434 = vunpack.c.l.b16 %v145
    %v435 = vunpack.c.l.b16 %v146
    %v436 = vunpack.c.l.b16 %v147
    %v437 = vunpack.c.l.b16 %v148
    %v438 = vunpack.c.l.b16 %v149
    %v439 = vunpack.c.l.b16 %v150
    %v440 = vunpack.c.l.b16 %v151
    %v441 = vunpack.c.l.b16 %v152
    %v442 = vunpack.c.l.b16 %v153
    %v443 = vunpack.c.l.b16 %v154
    %v444 = vunpack.c.l.b16 %v155
    %v445 = vunpack.c.l.b16 %v156
    %v446 = vunpack.c.l.b16 %v157
    %v447 = vunpack.c.l.b16 %v158
    %v448 = vunpack.c.l.b16 %v159
    %v449 = vunpack.c.l.b16 %v160
    %v450 = vunpack.c.l.b16 %v161
    %v451 = vunpack.c.l.b16 %v162
    %v452 = vunpack.c.l.b16 %v163
    %v453 = vunpack.c.l.b16 %v164
    %v454 = vunpack.c.l.b16 %v165
    %v455 = vunpack.c.l.b16 %v166
    %v456 = vunpack.c.l.b16 %v167
    %v457 = vunpack.c.l.b16 %v168
    %v458 = vunpack.c.l.b16 %v169
    %v459 = vunpack.c.l.b16 %v170
    %v460 = vunpack.c.l.b16 %v171
    %v461 = vunpack.c.l.b16 %v172
    %v462 = vunpack.c.l.b16 %v173
    %v463 = vunpack.c.l.b16 %v174
    %v464 = vpack.c.b16 %v321, %v320
    %v465 = vpack.c.b16 %v323, %v322
    %v466 = vpack.c.b16 %v325, %v324
    %v467 = vpack.c.b16 %v327, %v326
    %v468 = vpack.c.b16 %v329, %v328
    %v469 = vpack.c.b16 %v331, %v330
    %v470 = vpack.c.b16 %v333, %v332
    %v471 = vpack.c.b16 %v335, %v334
    %v472 = vpack.c.b16 %v337, %v336
    %v473 = vpack.c.b16 %v339, %v338
    %v474 = vpack.c.b16 %v341, %v340
    %v475 = vpack.c.b16 %v343, %v342
    %v476 = vpack.c.b16 %v345, %v344
    %v477 = vpack.c.b16 %v347, %v346
    %v478 = vpack.c.b16 %v349, %v348
    %v479 = vpack.c.b16 %v351, %v350
    %v480 = vpack.c.b16 %v353, %v352
    %v481 = vpack.c.b16 %v355, %v354
    %v482 = vpack.c.b16 %v357, %v356
    %v483 = vpack.c.b16 %v359, %v358
    %v484 = vpack.c.b16 %v361, %v360
    %v485 = vpack.c.b16 %v363, %v362
    %v486 = vpack.c.b16 %v365, %v364
    %v487 = vpack.c.b16 %v367, %v366
    %v488 = vpack.c.b16 %v369, %v368
    %v489 = vpack.c.b16 %v371, %v370
    %v490 = vpack.c.b16 %v373, %v372
    %v491 = vpack.c.b16 %v375, %v374
    %v492 = vpack.c.b16 %v377, %v376
    %v493 = vpack.c.b16 %v379, %v378
    %v494 = vpack.c.b16 %v381, %v380
    %v495 = vpack.c.b16 %v383, %v382
    %v496 = vpack.c.b16 %v385, %v384
    %v497 = vpack.c.b16 %v387, %v386
    %v498 = vpack.c.b16 %v389, %v388
    %v499 = vpack.c.b16 %v391, %v390
    %v500 = vpack.c.b16 %v393, %v392
    %v501 = vpack.c.b16 %v395, %v394
    %v502 = vpack.c.b16 %v397, %v396
    %v503 = vpack.c.b16 %v399, %v398
    %v504 = vpack.c.b16 %v401, %v400
    %v505 = vpack.c.b16 %v403, %v402
    %v506 = vpack.c.b16 %v405, %v404
    %v507 = vpack.c.b16 %v407, %v406
    %v508 = vpack.c.b16 %v409, %v408
    %v509 = vpack.c.b16 %v411, %v410
    %v510 = vpack.c.b16 %v413, %v412
    %v511 = vpack.c.b16 %v415, %v414
    %v512 = vpack.c.b16 %v417, %v416
    %v513 = vpack.c.b16 %v419, %v418
    %v514 = vpack.c.b16 %v421, %v420
    %v515 = vpack.c.b16 %v423, %v422
    %v516 = vpack.c.b16 %v425, %v424
    %v517 = vpack.c.b16 %v427, %v426
    %v518 = vpack.c.b16 %v429, %v428
    %v519 = vpack.c.b16 %v431, %v430
    %v520 = vpack.c.b16 %v433, %v432
    %v521 = vpack.c.b16 %v435, %v434
    %v522 = vpack.c.b16 %v437, %v436
    %v523 = vpack.c.b16 %v439, %v438
    %v524 = vpack.c.b16 %v441, %v440
    %v525 = vpack.c.b16 %v443, %v442
    %v526 = vpack.c.b16 %v445, %v444
    %v527 = vpack.c.b16 %v447, %v446
    %v528 = vpack.c.b16 %v449, %v448
    %v529 = vpack.c.b16 %v451, %v450
    %v530 = vpack.c.b16 %v453, %v452
    %v531 = vpack.c.b16 %v455, %v454
    %v532 = vpack.c.b16 %v457, %v456
    %v533 = vpack.c.b16 %v459, %v458
    %v534 = vpack.c.b16 %v461, %v460
    %v535 = vpack.c.b16 %v463, %v462
    %vm536 = vcmask 39936
    %v538 = vsel %vm536, %v464, 0
    %v541 = vsel %vm536, %v465, 0
    %v544 = vsel %vm536, %v466, 0
    %v547 = vsel %vm536, %v467, 0
    %v550 = vsel %vm536, %v468, 0
    %v553 = vsel %vm536, %v469, 0
    %v556 = vsel %vm536, %v470, 0
    %v559 = vsel %vm536, %v471, 0
    %v562 = vsel %vm536, %v472, 0
    %v565 = vsel %vm536, %v473, 0
    %v568 = vsel %vm536, %v474, 0
    %v571 = vsel %vm536, %v475, 0
    %v574 = vsel %vm536, %v476, 0
    %v577 = vsel %vm536, %v477, 0
    %v580 = vsel %vm536, %v478, 0
    %v583 = vsel %vm536, %v479, 0
    %v586 = vsel %vm536, %v480, 0
    %v589 = vsel %vm536, %v481, 0
    %v592 = vsel %vm536, %v482, 0
    %v595 = vsel %vm536, %v483, 0
    %v598 = vsel %vm536, %v484, 0
    %v601 = vsel %vm536, %v485, 0
    %v604 = vsel %vm536, %v486, 0
    %v607 = vsel %vm536, %v487, 0
    %v610 = vsel %vm536, %v488, 0
    %v613 = vsel %vm536, %v489, 0
    %v616 = vsel %vm536, %v490, 0
    %v619 = vsel %vm536, %v491, 0
    %v622 = vsel %vm536, %v492, 0
    %v625 = vsel %vm536, %v493, 0
    %v628 = vsel %vm536, %v494, 0
    %v631 = vsel %vm536, %v495, 0
    %v634 = vsel %vm536, %v496, 0
    %v637 = vsel %vm536, %v497, 0
    %v640 = vsel %vm536, %v498, 0
    %v643 = vsel %vm536, %v499, 0
    %v646 = vsel %vm536, %v500, 0
    %v649 = vsel %vm536, %v501, 0
    %v652 = vsel %vm536, %v502, 0
    %v655 = vsel %vm536, %v503, 0
    %v658 = vsel %vm536, %v504, 0
    %v661 = vsel %vm536, %v505, 0
    %v664 = vsel %vm536, %v506, 0
    %v667 = vsel %vm536, %v507, 0
    %v670 = vsel %vm536, %v508, 0
    %v673 = vsel %vm536, %v509, 0
    %v676 = vsel %vm536, %v510, 0
    %v679 = vsel %vm536, %v511, 0
    %v682 = vsel %vm536, %v512, 0
    %v685 = vsel %vm536, %v513, 0
    %v688 = vsel %vm536, %v514, 0
    %v691 = vsel %vm536, %v515, 0
    %v694 = vsel %vm536, %v516, 0
    %v697 = vsel %vm536, %v517, 0
    %v700 = vsel %vm536, %v518, 0
    %v703 = vsel %vm536, %v519, 0
    %v706 = vsel %vm536, %v520, 0
    %v709 = vsel %vm536, %v521, 0
    %v712 = vsel %vm536, %v522, 0
    %v715 = vsel %vm536, %v523, 0
    %v718 = vsel %vm536, %v524, 0
    %v721 = vsel %vm536, %v525, 0
    %v724 = vsel %vm536, %v526, 0
    %v727 = vsel %vm536, %v527, 0
    %v730 = vsel %vm536, %v528, 0
    %v733 = vsel %vm536, %v529, 0
    %v736 = vsel %vm536, %v530, 0
    %v739 = vsel %vm536, %v531, 0
    %v742 = vsel %vm536, %v532, 0
    %v745 = vsel %vm536, %v533, 0
    %v748 = vsel %vm536, %v534, 0
    %v751 = vsel %vm536, %v535, 0
    %vm753 = vcmask 1041408
    %vm754 = vcmask 1042432
    %v755 = vsel %vm753, 4294967295, 65535
    %v756 = vsel %vm754, %v755, 0
    %v758 = vand.u32 %v175, %v756
    %760 = vmatprep.subr.bf16.mxu0 0
    %761 = vmatpush1.bf16.msra.mxu0 %v758
    %762 = vmatprep.subr.bf16.mxu0 0
    %763 = vmatpush1.bf16.msra.mxu0 0
    %764 = vmatprep.subr.bf16.mxu0 0
    %765 = vmatpush1.bf16.msra.mxu0 0
    %766 = vmatprep.subr.bf16.mxu0 0
    %767 = vmatpush1.bf16.msra.mxu0 0
    %768 = vmatprep.subr.bf16.mxu0 0
    %769 = vmatpush1.bf16.msra.mxu0 0
    %770 = vmatprep.subr.bf16.mxu0 0
    %771 = vmatpush1.bf16.msra.mxu0 0
    %772 = vmatprep.subr.bf16.mxu0 0
    %773 = vmatpush1.bf16.msra.mxu0 0
    %774 = vmatprep.subr.bf16.mxu0 0
    %775 = vmatpush1.bf16.msra.mxu0 0
    %776 = vmatprep.subr.bf16.mxu0 0
    %777 = vmatpush1.bf16.msra.mxu0 0
    %778 = vmatprep.subr.bf16.mxu0 0
    %779 = vmatpush1.bf16.msra.mxu0 0
    %780 = vmatprep.subr.bf16.mxu0 0
    %781 = vmatpush1.bf16.msra.mxu0 0
    %782 = vmatprep.subr.bf16.mxu0 0
    %783 = vmatpush1.bf16.msra.mxu0 0
    %784 = vmatprep.subr.bf16.mxu0 0
    %785 = vmatpush1.bf16.msra.mxu0 0
    %786 = vmatprep.subr.bf16.mxu0 0
    %787 = vmatpush1.bf16.msra.mxu0 0
    %788 = vmatprep.subr.bf16.mxu0 0
    %789 = vmatpush1.bf16.msra.mxu0 0
    %790 = vmatprep.subr.bf16.mxu0 0
    %791 = vmatpush1.bf16.msra.mxu0 0
    %792 = vmatprep.mubr.bf16.mxu0 0
    %793 = vmatmul.mubr.bf16.gmra.mrb[0].mxu0 %v538
    %v794 = vpop.f32.mrb[0].mxu0
    %v795 = vadd.f32 0.0, %v794
    %v796 = vpop.f32.mrb[0].mxu0
    %v797 = vpop.f32.mrb[0].mxu0
    %v798 = vadd.f32 0.0, %v797
    %v799 = vpop.f32.mrb[0].mxu0
    %800 = vmatprep.mubr.bf16.mxu0 0
    %801 = vmatmul.mubr.bf16.gmra.mrb[0].mxu0 %v541
    %v802 = vpop.f32.mrb[0].mxu0
    %v803 = vadd.f32 0.0, %v802
    %v804 = vpop.f32.mrb[0].mxu0
    %v805 = vpop.f32.mrb[0].mxu0
    %v806 = vadd.f32 0.0, %v805
    %v807 = vpop.f32.mrb[0].mxu0
    %808 = vmatprep.mubr.bf16.mxu0 0
    %809 = vmatmul.mubr.bf16.gmra.mrb[0].mxu0 %v544
    %v810 = vpop.f32.mrb[0].mxu0
    %v811 = vadd.f32 0.0, %v810
    %v812 = vpop.f32.mrb[0].mxu0
    %v813 = vpop.f32.mrb[0].mxu0
    %v814 = vadd.f32 0.0, %v813
    %v815 = vpop.f32.mrb[0].mxu0
    %816 = vmatprep.mubr.bf16.mxu0 0
    %817 = vmatmul.mubr.bf16.gmra.mrb[0].mxu0 %v547
    %v818 = vpop.f32.mrb[0].mxu0
    %v819 = vadd.f32 0.0, %v818
    %v820 = vpop.f32.mrb[0].mxu0
    %v821 = vpop.f32.mrb[0].mxu0
    %v822 = vadd.f32 0.0, %v821
    %v823 = vpop.f32.mrb[0].mxu0
    %824 = vmatprep.mubr.bf16.mxu0 0
    %825 = vmatmul.mubr.bf16.gmra.mrb[0].mxu0 %v550
    %v826 = vpop.f32.mrb[0].mxu0
    %v827 = vadd.f32 0.0, %v826
    %v828 = vpop.f32.mrb[0].mxu0
    %v829 = vpop.f32.mrb[0].mxu0
    %v830 = vadd.f32 0.0, %v829
    %v831 = vpop.f32.mrb[0].mxu0
    %832 = vmatprep.mubr.bf16.mxu0 0
    %833 = vmatmul.mubr.bf16.gmra.mrb[0].mxu0 %v553
    %v834 = vpop.f32.mrb[0].mxu0
    %v835 = vadd.f32 0.0, %v834
    %v836 = vpop.f32.mrb[0].mxu0
    %v837 = vpop.f32.mrb[0].mxu0
    %v838 = vadd.f32 0.0, %v837
    %v839 = vpop.f32.mrb[0].mxu0
    %840 = vmatprep.mubr.bf16.mxu0 0
    %841 = vmatmul.mubr.bf16.gmra.mrb[0].mxu0 %v556
    %v842 = vpop.f32.mrb[0].mxu0
    %v843 = vadd.f32 0.0, %v842
    %v844 = vpop.f32.mrb[0].mxu0
    %v845 = vpop.f32.mrb[0].mxu0
    %v846 = vadd.f32 0.0, %v845
    %v847 = vpop.f32.mrb[0].mxu0
    %848 = vmatprep.mubr.bf16.mxu0 0
    %849 = vmatmul.mubr.bf16.gmra.mrb[0].mxu0 %v559
    %v850 = vpop.f32.mrb[0].mxu0
    %v851 = vadd.f32 0.0, %v850
    %v852 = vpop.f32.mrb[0].mxu0
    %v853 = vpop.f32.mrb[0].mxu0
    %v854 = vadd.f32 0.0, %v853
    %v855 = vpop.f32.mrb[0].mxu0
    %856 = vmatprep.mubr.bf16.mxu0 0
    %857 = vmatmul.mubr.bf16.gmra.mrb[0].mxu0 %v562
    %v858 = vpop.f32.mrb[0].mxu0
    %v859 = vadd.f32 0.0, %v858
    %v860 = vpop.f32.mrb[0].mxu0
    %v861 = vpop.f32.mrb[0].mxu0
    %v862 = vadd.f32 0.0, %v861
    %v863 = vpop.f32.mrb[0].mxu0
    %864 = vmatprep.mubr.bf16.mxu0 0
    %865 = vmatmul.mubr.bf16.gmra.mrb[0].mxu0 %v565
    %v866 = vpop.f32.mrb[0].mxu0
    %v867 = vadd.f32 0.0, %v866
    %v868 = vpop.f32.mrb[0].mxu0
    %v869 = vpop.f32.mrb[0].mxu0
    %v870 = vadd.f32 0.0, %v869
    %v871 = vpop.f32.mrb[0].mxu0
    %872 = vmatprep.mubr.bf16.mxu0 0
    %873 = vmatmul.mubr.bf16.gmra.mrb[0].mxu0 %v568
    %v874 = vpop.f32.mrb[0].mxu0
    %v875 = vadd.f32 0.0, %v874
    %v876 = vpop.f32.mrb[0].mxu0
    %v877 = vpop.f32.mrb[0].mxu0
    %v878 = vadd.f32 0.0, %v877
    %v879 = vpop.f32.mrb[0].mxu0
    %880 = vmatprep.mubr.bf16.mxu0 0
    %881 = vmatmul.mubr.bf16.gmra.mrb[0].mxu0 %v571
    %v882 = vpop.f32.mrb[0].mxu0
    %v883 = vadd.f32 0.0, %v882
    %v884 = vpop.f32.mrb[0].mxu0
    %v885 = vpop.f32.mrb[0].mxu0
    %v886 = vadd.f32 0.0, %v885
    %v887 = vpop.f32.mrb[0].mxu0
    %888 = vmatprep.mubr.bf16.mxu0 0
    %889 = vmatmul.mubr.bf16.gmra.mrb[0].mxu0 %v574
    %v890 = vpop.f32.mrb[0].mxu0
    %v891 = vadd.f32 0.0, %v890
    %v892 = vpop.f32.mrb[0].mxu0
    %v893 = vpop.f32.mrb[0].mxu0
    %v894 = vadd.f32 0.0, %v893
    %v895 = vpop.f32.mrb[0].mxu0
    %896 = vmatprep.mubr.bf16.mxu0 0
    %897 = vmatmul.mubr.bf16.gmra.mrb[0].mxu0 %v577
    %v898 = vpop.f32.mrb[0].mxu0
    %v899 = vadd.f32 0.0, %v898
    %v900 = vpop.f32.mrb[0].mxu0
    %v901 = vpop.f32.mrb[0].mxu0
    %v902 = vadd.f32 0.0, %v901
    %v903 = vpop.f32.mrb[0].mxu0
    %904 = vmatprep.mubr.bf16.mxu0 0
    %905 = vmatmul.mubr.bf16.gmra.mrb[0].mxu0 %v580
    %v906 = vpop.f32.mrb[0].mxu0
    %v907 = vadd.f32 0.0, %v906
    %v908 = vpop.f32.mrb[0].mxu0
    %v909 = vpop.f32.mrb[0].mxu0
    %v910 = vadd.f32 0.0, %v909
    %v911 = vpop.f32.mrb[0].mxu0
    %912 = vmatprep.mubr.bf16.mxu0 0
    %913 = vmatmul.mubr.bf16.gmra.mrb[0].mxu0 %v583
    %v914 = vpop.f32.mrb[0].mxu0
    %v915 = vadd.f32 0.0, %v914
    %v916 = vpop.f32.mrb[0].mxu0
    %v917 = vpop.f32.mrb[0].mxu0
    %v918 = vadd.f32 0.0, %v917
    %v919 = vpop.f32.mrb[0].mxu0
    %920 = vmatprep.mubr.bf16.mxu0 0
    %921 = vmatmul.mubr.bf16.gmra.mrb[0].mxu0 %v586
    %v922 = vpop.f32.mrb[0].mxu0
    %v923 = vadd.f32 0.0, %v922
    %v924 = vpop.f32.mrb[0].mxu0
    %v925 = vpop.f32.mrb[0].mxu0
    %v926 = vadd.f32 0.0, %v925
    %v927 = vpop.f32.mrb[0].mxu0
    %928 = vmatprep.mubr.bf16.mxu0 0
    %929 = vmatmul.mubr.bf16.gmra.mrb[0].mxu0 %v589
    %v930 = vpop.f32.mrb[0].mxu0
    %v931 = vadd.f32 0.0, %v930
    %v932 = vpop.f32.mrb[0].mxu0
    %v933 = vpop.f32.mrb[0].mxu0
    %v934 = vadd.f32 0.0, %v933
    %v935 = vpop.f32.mrb[0].mxu0
    %936 = vmatprep.mubr.bf16.mxu0 0
    %937 = vmatmul.mubr.bf16.gmra.mrb[0].mxu0 %v592
    %v938 = vpop.f32.mrb[0].mxu0
    %v939 = vadd.f32 0.0, %v938
    %v940 = vpop.f32.mrb[0].mxu0
    %v941 = vpop.f32.mrb[0].mxu0
    %v942 = vadd.f32 0.0, %v941
    %v943 = vpop.f32.mrb[0].mxu0
    %944 = vmatprep.mubr.bf16.mxu0 0
    %945 = vmatmul.mubr.bf16.gmra.mrb[0].mxu0 %v595
    %v946 = vpop.f32.mrb[0].mxu0
    %v947 = vadd.f32 0.0, %v946
    %v948 = vpop.f32.mrb[0].mxu0
    %v949 = vpop.f32.mrb[0].mxu0
    %v950 = vadd.f32 0.0, %v949
    %v951 = vpop.f32.mrb[0].mxu0
    %952 = vmatprep.mubr.bf16.mxu0 0
    %953 = vmatmul.mubr.bf16.gmra.mrb[0].mxu0 %v598
    %v954 = vpop.f32.mrb[0].mxu0
    %v955 = vadd.f32 0.0, %v954
    %v956 = vpop.f32.mrb[0].mxu0
    %v957 = vpop.f32.mrb[0].mxu0
    %v958 = vadd.f32 0.0, %v957
    %v959 = vpop.f32.mrb[0].mxu0
    %960 = vmatprep.mubr.bf16.mxu0 0
    %961 = vmatmul.mubr.bf16.gmra.mrb[0].mxu0 %v601
    %v962 = vpop.f32.mrb[0].mxu0
    %v963 = vadd.f32 0.0, %v962
    %v964 = vpop.f32.mrb[0].mxu0
    %v965 = vpop.f32.mrb[0].mxu0
    %v966 = vadd.f32 0.0, %v965
    %v967 = vpop.f32.mrb[0].mxu0
    %968 = vmatprep.mubr.bf16.mxu0 0
    %969 = vmatmul.mubr.bf16.gmra.mrb[0].mxu0 %v604
    %v970 = vpop.f32.mrb[0].mxu0
    %v971 = vadd.f32 0.0, %v970
    %v972 = vpop.f32.mrb[0].mxu0
    %v973 = vpop.f32.mrb[0].mxu0
    %v974 = vadd.f32 0.0, %v973
    %v975 = vpop.f32.mrb[0].mxu0
    %976 = vmatprep.mubr.bf16.mxu0 0
    %977 = vmatmul.mubr.bf16.gmra.mrb[0].mxu0 %v607
    %v978 = vpop.f32.mrb[0].mxu0
    %v979 = vadd.f32 0.0, %v978
    %v980 = vpop.f32.mrb[0].mxu0
    %v981 = vpop.f32.mrb[0].mxu0
    %v982 = vadd.f32 0.0, %v981
    %v983 = vpop.f32.mrb[0].mxu0
    %984 = vmatprep.mubr.bf16.mxu0 0
    %985 = vmatmul.mubr.bf16.gmra.mrb[0].mxu0 %v610
    %v986 = vpop.f32.mrb[0].mxu0
    %v987 = vadd.f32 0.0, %v986
    %v988 = vpop.f32.mrb[0].mxu0
    %v989 = vpop.f32.mrb[0].mxu0
    %v990 = vadd.f32 0.0, %v989
    %v991 = vpop.f32.mrb[0].mxu0
    %992 = vmatprep.mubr.bf16.mxu0 0
    %993 = vmatmul.mubr.bf16.gmra.mrb[0].mxu0 %v613
    %v994 = vpop.f32.mrb[0].mxu0
    %v995 = vadd.f32 0.0, %v994
    %v996 = vpop.f32.mrb[0].mxu0
    %v997 = vpop.f32.mrb[0].mxu0
    %v998 = vadd.f32 0.0, %v997
    %v999 = vpop.f32.mrb[0].mxu0
    %1000 = vmatprep.mubr.bf16.mxu0 0
    %1001 = vmatmul.mubr.bf16.gmra.mrb[0].mxu0 %v616
    %v1002 = vpop.f32.mrb[0].mxu0
    %v1003 = vadd.f32 0.0, %v1002
    %v1004 = vpop.f32.mrb[0].mxu0
    %v1005 = vpop.f32.mrb[0].mxu0
    %v1006 = vadd.f32 0.0, %v1005
    %v1007 = vpop.f32.mrb[0].mxu0
    %1008 = vmatprep.mubr.bf16.mxu0 0
    %1009 = vmatmul.mubr.bf16.gmra.mrb[0].mxu0 %v619
    %v1010 = vpop.f32.mrb[0].mxu0
    %v1011 = vadd.f32 0.0, %v1010
    %v1012 = vpop.f32.mrb[0].mxu0
    %v1013 = vpop.f32.mrb[0].mxu0
    %v1014 = vadd.f32 0.0, %v1013
    %v1015 = vpop.f32.mrb[0].mxu0
    %1016 = vmatprep.mubr.bf16.mxu0 0
    %1017 = vmatmul.mubr.bf16.gmra.mrb[0].mxu0 %v622
    %v1018 = vpop.f32.mrb[0].mxu0
    %v1019 = vadd.f32 0.0, %v1018
    %v1020 = vpop.f32.mrb[0].mxu0
    %v1021 = vpop.f32.mrb[0].mxu0
    %v1022 = vadd.f32 0.0, %v1021
    %v1023 = vpop.f32.mrb[0].mxu0
    %1024 = vmatprep.mubr.bf16.mxu0 0
    %1025 = vmatmul.mubr.bf16.gmra.mrb[0].mxu0 %v625
    %v1026 = vpop.f32.mrb[0].mxu0
    %v1027 = vadd.f32 0.0, %v1026
    %v1028 = vpop.f32.mrb[0].mxu0
    %v1029 = vpop.f32.mrb[0].mxu0
    %v1030 = vadd.f32 0.0, %v1029
    %v1031 = vpop.f32.mrb[0].mxu0
    %1032 = vmatprep.mubr.bf16.mxu0 0
    %1033 = vmatmul.mubr.bf16.gmra.mrb[0].mxu0 %v628
    %v1034 = vpop.f32.mrb[0].mxu0
    %v1035 = vadd.f32 0.0, %v1034
    %v1036 = vpop.f32.mrb[0].mxu0
    %v1037 = vpop.f32.mrb[0].mxu0
    %v1038 = vadd.f32 0.0, %v1037
    %v1039 = vpop.f32.mrb[0].mxu0
    %1040 = vmatprep.mubr.bf16.mxu0 0
    %1041 = vmatmul.mubr.bf16.gmra.mrb[0].mxu0 %v631
    %v1042 = vpop.f32.mrb[0].mxu0
    %v1043 = vadd.f32 0.0, %v1042
    %v1044 = vpop.f32.mrb[0].mxu0
    %v1045 = vpop.f32.mrb[0].mxu0
    %v1046 = vadd.f32 0.0, %v1045
    %v1047 = vpop.f32.mrb[0].mxu0
    %1048 = vmatprep.mubr.bf16.mxu0 0
    %1049 = vmatmul.mubr.bf16.gmra.mrb[0].mxu0 %v634
    %v1050 = vpop.f32.mrb[0].mxu0
    %v1051 = vadd.f32 0.0, %v1050
    %v1052 = vpop.f32.mrb[0].mxu0
    %v1053 = vpop.f32.mrb[0].mxu0
    %v1054 = vadd.f32 0.0, %v1053
    %v1055 = vpop.f32.mrb[0].mxu0
    %1056 = vmatprep.mubr.bf16.mxu0 0
    %1057 = vmatmul.mubr.bf16.gmra.mrb[0].mxu0 %v637
    %v1058 = vpop.f32.mrb[0].mxu0
    %v1059 = vadd.f32 0.0, %v1058
    %v1060 = vpop.f32.mrb[0].mxu0
    %v1061 = vpop.f32.mrb[0].mxu0
    %v1062 = vadd.f32 0.0, %v1061
    %v1063 = vpop.f32.mrb[0].mxu0
    %1064 = vmatprep.mubr.bf16.mxu0 0
    %1065 = vmatmul.mubr.bf16.gmra.mrb[0].mxu0 %v640
    %v1066 = vpop.f32.mrb[0].mxu0
    %v1067 = vadd.f32 0.0, %v1066
    %v1068 = vpop.f32.mrb[0].mxu0
    %v1069 = vpop.f32.mrb[0].mxu0
    %v1070 = vadd.f32 0.0, %v1069
    %v1071 = vpop.f32.mrb[0].mxu0
    %1072 = vmatprep.mubr.bf16.mxu0 0
    %1073 = vmatmul.mubr.bf16.gmra.mrb[0].mxu0 %v643
    %v1074 = vpop.f32.mrb[0].mxu0
    %v1075 = vadd.f32 0.0, %v1074
    %v1076 = vpop.f32.mrb[0].mxu0
    %v1077 = vpop.f32.mrb[0].mxu0
    %v1078 = vadd.f32 0.0, %v1077
    %v1079 = vpop.f32.mrb[0].mxu0
    %1080 = vmatprep.mubr.bf16.mxu0 0
    %1081 = vmatmul.mubr.bf16.gmra.mrb[0].mxu0 %v646
    %v1082 = vpop.f32.mrb[0].mxu0
    %v1083 = vadd.f32 0.0, %v1082
    %v1084 = vpop.f32.mrb[0].mxu0
    %v1085 = vpop.f32.mrb[0].mxu0
    %v1086 = vadd.f32 0.0, %v1085
    %v1087 = vpop.f32.mrb[0].mxu0
    %1088 = vmatprep.mubr.bf16.mxu0 0
    %1089 = vmatmul.mubr.bf16.gmra.mrb[0].mxu0 %v649
    %v1090 = vpop.f32.mrb[0].mxu0
    %v1091 = vadd.f32 0.0, %v1090
    %v1092 = vpop.f32.mrb[0].mxu0
    %v1093 = vpop.f32.mrb[0].mxu0
    %v1094 = vadd.f32 0.0, %v1093
    %v1095 = vpop.f32.mrb[0].mxu0
    %1096 = vmatprep.mubr.bf16.mxu0 0
    %1097 = vmatmul.mubr.bf16.gmra.mrb[0].mxu0 %v652
    %v1098 = vpop.f32.mrb[0].mxu0
    %v1099 = vadd.f32 0.0, %v1098
    %v1100 = vpop.f32.mrb[0].mxu0
    %v1101 = vpop.f32.mrb[0].mxu0
    %v1102 = vadd.f32 0.0, %v1101
    %v1103 = vpop.f32.mrb[0].mxu0
    %1104 = vmatprep.mubr.bf16.mxu0 0
    %1105 = vmatmul.mubr.bf16.gmra.mrb[0].mxu0 %v655
    %v1106 = vpop.f32.mrb[0].mxu0
    %v1107 = vadd.f32 0.0, %v1106
    %v1108 = vpop.f32.mrb[0].mxu0
    %v1109 = vpop.f32.mrb[0].mxu0
    %v1110 = vadd.f32 0.0, %v1109
    %v1111 = vpop.f32.mrb[0].mxu0
    %1112 = vmatprep.mubr.bf16.mxu0 0
    %1113 = vmatmul.mubr.bf16.gmra.mrb[0].mxu0 %v658
    %v1114 = vpop.f32.mrb[0].mxu0
    %v1115 = vadd.f32 0.0, %v1114
    %v1116 = vpop.f32.mrb[0].mxu0
    %v1117 = vpop.f32.mrb[0].mxu0
    %v1118 = vadd.f32 0.0, %v1117
    %v1119 = vpop.f32.mrb[0].mxu0
    %1120 = vmatprep.mubr.bf16.mxu0 0
    %1121 = vmatmul.mubr.bf16.gmra.mrb[0].mxu0 %v661
    %v1122 = vpop.f32.mrb[0].mxu0
    %v1123 = vadd.f32 0.0, %v1122
    %v1124 = vpop.f32.mrb[0].mxu0
    %v1125 = vpop.f32.mrb[0].mxu0
    %v1126 = vadd.f32 0.0, %v1125
    %v1127 = vpop.f32.mrb[0].mxu0
    %1128 = vmatprep.mubr.bf16.mxu0 0
    %1129 = vmatmul.mubr.bf16.gmra.mrb[0].mxu0 %v664
    %v1130 = vpop.f32.mrb[0].mxu0
    %v1131 = vadd.f32 0.0, %v1130
    %v1132 = vpop.f32.mrb[0].mxu0
    %v1133 = vpop.f32.mrb[0].mxu0
    %v1134 = vadd.f32 0.0, %v1133
    %v1135 = vpop.f32.mrb[0].mxu0
    %1136 = vmatprep.mubr.bf16.mxu0 0
    %1137 = vmatmul.mubr.bf16.gmra.mrb[0].mxu0 %v667
    %v1138 = vpop.f32.mrb[0].mxu0
    %v1139 = vadd.f32 0.0, %v1138
    %v1140 = vpop.f32.mrb[0].mxu0
    %v1141 = vpop.f32.mrb[0].mxu0
    %v1142 = vadd.f32 0.0, %v1141
    %v1143 = vpop.f32.mrb[0].mxu0
    %1144 = vmatprep.mubr.bf16.mxu0 0
    %1145 = vmatmul.mubr.bf16.gmra.mrb[0].mxu0 %v670
    %v1146 = vpop.f32.mrb[0].mxu0
    %v1147 = vadd.f32 0.0, %v1146
    %v1148 = vpop.f32.mrb[0].mxu0
    %v1149 = vpop.f32.mrb[0].mxu0
    %v1150 = vadd.f32 0.0, %v1149
    %v1151 = vpop.f32.mrb[0].mxu0
    %1152 = vmatprep.mubr.bf16.mxu0 0
    %1153 = vmatmul.mubr.bf16.gmra.mrb[0].mxu0 %v673
    %v1154 = vpop.f32.mrb[0].mxu0
    %v1155 = vadd.f32 0.0, %v1154
    %v1156 = vpop.f32.mrb[0].mxu0
    %v1157 = vpop.f32.mrb[0].mxu0
    %v1158 = vadd.f32 0.0, %v1157
    %v1159 = vpop.f32.mrb[0].mxu0
    %1160 = vmatprep.mubr.bf16.mxu0 0
    %1161 = vmatmul.mubr.bf16.gmra.mrb[0].mxu0 %v676
    %v1162 = vpop.f32.mrb[0].mxu0
    %v1163 = vadd.f32 0.0, %v1162
    %v1164 = vpop.f32.mrb[0].mxu0
    %v1165 = vpop.f32.mrb[0].mxu0
    %v1166 = vadd.f32 0.0, %v1165
    %v1167 = vpop.f32.mrb[0].mxu0
    %1168 = vmatprep.mubr.bf16.mxu0 0
    %1169 = vmatmul.mubr.bf16.gmra.mrb[0].mxu0 %v679
    %v1170 = vpop.f32.mrb[0].mxu0
    %v1171 = vadd.f32 0.0, %v1170
    %v1172 = vpop.f32.mrb[0].mxu0
    %v1173 = vpop.f32.mrb[0].mxu0
    %v1174 = vadd.f32 0.0, %v1173
    %v1175 = vpop.f32.mrb[0].mxu0
    %1176 = vmatprep.mubr.bf16.mxu0 0
    %1177 = vmatmul.mubr.bf16.gmra.mrb[0].mxu0 %v682
    %v1178 = vpop.f32.mrb[0].mxu0
    %v1179 = vadd.f32 0.0, %v1178
    %v1180 = vpop.f32.mrb[0].mxu0
    %v1181 = vpop.f32.mrb[0].mxu0
    %v1182 = vadd.f32 0.0, %v1181
    %v1183 = vpop.f32.mrb[0].mxu0
    %1184 = vmatprep.mubr.bf16.mxu0 0
    %1185 = vmatmul.mubr.bf16.gmra.mrb[0].mxu0 %v685
    %v1186 = vpop.f32.mrb[0].mxu0
    %v1187 = vadd.f32 0.0, %v1186
    %v1188 = vpop.f32.mrb[0].mxu0
    %v1189 = vpop.f32.mrb[0].mxu0
    %v1190 = vadd.f32 0.0, %v1189
    %v1191 = vpop.f32.mrb[0].mxu0
    %1192 = vmatprep.mubr.bf16.mxu0 0
    %1193 = vmatmul.mubr.bf16.gmra.mrb[0].mxu0 %v688
    %v1194 = vpop.f32.mrb[0].mxu0
    %v1195 = vadd.f32 0.0, %v1194
    %v1196 = vpop.f32.mrb[0].mxu0
    %v1197 = vpop.f32.mrb[0].mxu0
    %v1198 = vadd.f32 0.0, %v1197
    %v1199 = vpop.f32.mrb[0].mxu0
    %1200 = vmatprep.mubr.bf16.mxu0 0
    %1201 = vmatmul.mubr.bf16.gmra.mrb[0].mxu0 %v691
    %v1202 = vpop.f32.mrb[0].mxu0
    %v1203 = vadd.f32 0.0, %v1202
    %v1204 = vpop.f32.mrb[0].mxu0
    %v1205 = vpop.f32.mrb[0].mxu0
    %v1206 = vadd.f32 0.0, %v1205
    %v1207 = vpop.f32.mrb[0].mxu0
    %1208 = vmatprep.mubr.bf16.mxu0 0
    %1209 = vmatmul.mubr.bf16.gmra.mrb[0].mxu0 %v694
    %v1210 = vpop.f32.mrb[0].mxu0
    %v1211 = vadd.f32 0.0, %v1210
    %v1212 = vpop.f32.mrb[0].mxu0
    %v1213 = vpop.f32.mrb[0].mxu0
    %v1214 = vadd.f32 0.0, %v1213
    %v1215 = vpop.f32.mrb[0].mxu0
    %1216 = vmatprep.mubr.bf16.mxu0 0
    %1217 = vmatmul.mubr.bf16.gmra.mrb[0].mxu0 %v697
    %v1218 = vpop.f32.mrb[0].mxu0
    %v1219 = vadd.f32 0.0, %v1218
    %v1220 = vpop.f32.mrb[0].mxu0
    %v1221 = vpop.f32.mrb[0].mxu0
    %v1222 = vadd.f32 0.0, %v1221
    %v1223 = vpop.f32.mrb[0].mxu0
    %1224 = vmatprep.mubr.bf16.mxu0 0
    %1225 = vmatmul.mubr.bf16.gmra.mrb[0].mxu0 %v700
    %v1226 = vpop.f32.mrb[0].mxu0
    %v1227 = vadd.f32 0.0, %v1226
    %v1228 = vpop.f32.mrb[0].mxu0
    %v1229 = vpop.f32.mrb[0].mxu0
    %v1230 = vadd.f32 0.0, %v1229
    %v1231 = vpop.f32.mrb[0].mxu0
    %1232 = vmatprep.mubr.bf16.mxu0 0
    %1233 = vmatmul.mubr.bf16.gmra.mrb[0].mxu0 %v703
    %v1234 = vpop.f32.mrb[0].mxu0
    %v1235 = vadd.f32 0.0, %v1234
    %v1236 = vpop.f32.mrb[0].mxu0
    %v1237 = vpop.f32.mrb[0].mxu0
    %v1238 = vadd.f32 0.0, %v1237
    %v1239 = vpop.f32.mrb[0].mxu0
    %1240 = vmatprep.mubr.bf16.mxu0 0
    %1241 = vmatmul.mubr.bf16.gmra.mrb[0].mxu0 %v706
    %v1242 = vpop.f32.mrb[0].mxu0
    %v1243 = vadd.f32 0.0, %v1242
    %v1244 = vpop.f32.mrb[0].mxu0
    %v1245 = vpop.f32.mrb[0].mxu0
    %v1246 = vadd.f32 0.0, %v1245
    %v1247 = vpop.f32.mrb[0].mxu0
    %1248 = vmatprep.mubr.bf16.mxu0 0
    %1249 = vmatmul.mubr.bf16.gmra.mrb[0].mxu0 %v709
    %v1250 = vpop.f32.mrb[0].mxu0
    %v1251 = vadd.f32 0.0, %v1250
    %v1252 = vpop.f32.mrb[0].mxu0
    %v1253 = vpop.f32.mrb[0].mxu0
    %v1254 = vadd.f32 0.0, %v1253
    %v1255 = vpop.f32.mrb[0].mxu0
    %1256 = vmatprep.mubr.bf16.mxu0 0
    %1257 = vmatmul.mubr.bf16.gmra.mrb[0].mxu0 %v712
    %v1258 = vpop.f32.mrb[0].mxu0
    %v1259 = vadd.f32 0.0, %v1258
    %v1260 = vpop.f32.mrb[0].mxu0
    %v1261 = vpop.f32.mrb[0].mxu0
    %v1262 = vadd.f32 0.0, %v1261
    %v1263 = vpop.f32.mrb[0].mxu0
    %1264 = vmatprep.mubr.bf16.mxu0 0
    %1265 = vmatmul.mubr.bf16.gmra.mrb[0].mxu0 %v715
    %v1266 = vpop.f32.mrb[0].mxu0
    %v1267 = vadd.f32 0.0, %v1266
    %v1268 = vpop.f32.mrb[0].mxu0
    %v1269 = vpop.f32.mrb[0].mxu0
    %v1270 = vadd.f32 0.0, %v1269
    %v1271 = vpop.f32.mrb[0].mxu0
    %1272 = vmatprep.mubr.bf16.mxu0 0
    %1273 = vmatmul.mubr.bf16.gmra.mrb[0].mxu0 %v718
    %v1274 = vpop.f32.mrb[0].mxu0
    %v1275 = vadd.f32 0.0, %v1274
    %v1276 = vpop.f32.mrb[0].mxu0
    %v1277 = vpop.f32.mrb[0].mxu0
    %v1278 = vadd.f32 0.0, %v1277
    %v1279 = vpop.f32.mrb[0].mxu0
    %1280 = vmatprep.mubr.bf16.mxu0 0
    %1281 = vmatmul.mubr.bf16.gmra.mrb[0].mxu0 %v721
    %v1282 = vpop.f32.mrb[0].mxu0
    %v1283 = vadd.f32 0.0, %v1282
    %v1284 = vpop.f32.mrb[0].mxu0
    %v1285 = vpop.f32.mrb[0].mxu0
    %v1286 = vadd.f32 0.0, %v1285
    %v1287 = vpop.f32.mrb[0].mxu0
    %1288 = vmatprep.mubr.bf16.mxu0 0
    %1289 = vmatmul.mubr.bf16.gmra.mrb[0].mxu0 %v724
    %v1290 = vpop.f32.mrb[0].mxu0
    %v1291 = vadd.f32 0.0, %v1290
    %v1292 = vpop.f32.mrb[0].mxu0
    %v1293 = vpop.f32.mrb[0].mxu0
    %v1294 = vadd.f32 0.0, %v1293
    %v1295 = vpop.f32.mrb[0].mxu0
    %1296 = vmatprep.mubr.bf16.mxu0 0
    %1297 = vmatmul.mubr.bf16.gmra.mrb[0].mxu0 %v727
    %v1298 = vpop.f32.mrb[0].mxu0
    %v1299 = vadd.f32 0.0, %v1298
    %v1300 = vpop.f32.mrb[0].mxu0
    %v1301 = vpop.f32.mrb[0].mxu0
    %v1302 = vadd.f32 0.0, %v1301
    %v1303 = vpop.f32.mrb[0].mxu0
    %1304 = vmatprep.mubr.bf16.mxu0 0
    %1305 = vmatmul.mubr.bf16.gmra.mrb[0].mxu0 %v730
    %v1306 = vpop.f32.mrb[0].mxu0
    %v1307 = vadd.f32 0.0, %v1306
    %v1308 = vpop.f32.mrb[0].mxu0
    %v1309 = vpop.f32.mrb[0].mxu0
    %v1310 = vadd.f32 0.0, %v1309
    %v1311 = vpop.f32.mrb[0].mxu0
    %1312 = vmatprep.mubr.bf16.mxu0 0
    %1313 = vmatmul.mubr.bf16.gmra.mrb[0].mxu0 %v733
    %v1314 = vpop.f32.mrb[0].mxu0
    %v1315 = vadd.f32 0.0, %v1314
    %v1316 = vpop.f32.mrb[0].mxu0
    %v1317 = vpop.f32.mrb[0].mxu0
    %v1318 = vadd.f32 0.0, %v1317
    %v1319 = vpop.f32.mrb[0].mxu0
    %1320 = vmatprep.mubr.bf16.mxu0 0
    %1321 = vmatmul.mubr.bf16.gmra.mrb[0].mxu0 %v736
    %v1322 = vpop.f32.mrb[0].mxu0
    %v1323 = vadd.f32 0.0, %v1322
    %v1324 = vpop.f32.mrb[0].mxu0
    %v1325 = vpop.f32.mrb[0].mxu0
    %v1326 = vadd.f32 0.0, %v1325
    %v1327 = vpop.f32.mrb[0].mxu0
    %1328 = vmatprep.mubr.bf16.mxu0 0
    %1329 = vmatmul.mubr.bf16.gmra.mrb[0].mxu0 %v739
    %v1330 = vpop.f32.mrb[0].mxu0
    %v1331 = vadd.f32 0.0, %v1330
    %v1332 = vpop.f32.mrb[0].mxu0
    %v1333 = vpop.f32.mrb[0].mxu0
    %v1334 = vadd.f32 0.0, %v1333
    %v1335 = vpop.f32.mrb[0].mxu0
    %1336 = vmatprep.mubr.bf16.mxu0 0
    %1337 = vmatmul.mubr.bf16.gmra.mrb[0].mxu0 %v742
    %v1338 = vpop.f32.mrb[0].mxu0
    %v1339 = vadd.f32 0.0, %v1338
    %v1340 = vpop.f32.mrb[0].mxu0
    %v1341 = vpop.f32.mrb[0].mxu0
    %v1342 = vadd.f32 0.0, %v1341
    %v1343 = vpop.f32.mrb[0].mxu0
    %1344 = vmatprep.mubr.bf16.mxu0 0
    %1345 = vmatmul.mubr.bf16.gmra.mrb[0].mxu0 %v745
    %v1346 = vpop.f32.mrb[0].mxu0
    %v1347 = vadd.f32 0.0, %v1346
    %v1348 = vpop.f32.mrb[0].mxu0
    %v1349 = vpop.f32.mrb[0].mxu0
    %v1350 = vadd.f32 0.0, %v1349
    %v1351 = vpop.f32.mrb[0].mxu0
    %1352 = vmatprep.mubr.bf16.mxu0 0
    %1353 = vmatmul.mubr.bf16.gmra.mrb[0].mxu0 %v748
    %v1354 = vpop.f32.mrb[0].mxu0
    %v1355 = vadd.f32 0.0, %v1354
    %v1356 = vpop.f32.mrb[0].mxu0
    %v1357 = vpop.f32.mrb[0].mxu0
    %v1358 = vadd.f32 0.0, %v1357
    %v1359 = vpop.f32.mrb[0].mxu0
    %1360 = vmatprep.mubr.bf16.mxu0 0
    %1361 = vmatmul.mubr.bf16.gmra.mrb[0].mxu0 %v751
    %v1362 = vpop.f32.mrb[0].mxu0
    %v1363 = vadd.f32 0.0, %v1362
    %v1364 = vpop.f32.mrb[0].mxu0
    %v1365 = vpop.f32.mrb[0].mxu0
    %v1366 = vadd.f32 0.0, %v1365
    %v1367 = vpop.f32.mrb[0].mxu0
    %1368 = vdwg.mxu0
    %v1369 = vmax.f32 %v795, 0.0
    %v1370 = vmax.f32 %v798, 0.0
    %v1371 = vmax.f32 %v803, 0.0
    %v1372 = vmax.f32 %v806, 0.0
    %v1373 = vmax.f32 %v811, 0.0
    %v1374 = vmax.f32 %v814, 0.0
    %v1375 = vmax.f32 %v819, 0.0
    %v1376 = vmax.f32 %v822, 0.0
    %v1377 = vmax.f32 %v827, 0.0
    %v1378 = vmax.f32 %v830, 0.0
    %v1379 = vmax.f32 %v835, 0.0
    %v1380 = vmax.f32 %v838, 0.0
    %v1381 = vmax.f32 %v843, 0.0
    %v1382 = vmax.f32 %v846, 0.0
    %v1383 = vmax.f32 %v851, 0.0
    %v1384 = vmax.f32 %v854, 0.0
    %v1385 = vmax.f32 %v859, 0.0
    %v1386 = vmax.f32 %v862, 0.0
    %v1387 = vmax.f32 %v867, 0.0
    %v1388 = vmax.f32 %v870, 0.0
    %v1389 = vmax.f32 %v875, 0.0
    %v1390 = vmax.f32 %v878, 0.0
    %v1391 = vmax.f32 %v883, 0.0
    %v1392 = vmax.f32 %v886, 0.0
    %v1393 = vmax.f32 %v891, 0.0
    %v1394 = vmax.f32 %v894, 0.0
    %v1395 = vmax.f32 %v899, 0.0
    %v1396 = vmax.f32 %v902, 0.0
    %v1397 = vmax.f32 %v907, 0.0
    %v1398 = vmax.f32 %v910, 0.0
    %v1399 = vmax.f32 %v915, 0.0
    %v1400 = vmax.f32 %v918, 0.0
    %v1401 = vmax.f32 %v923, 0.0
    %v1402 = vmax.f32 %v926, 0.0
    %v1403 = vmax.f32 %v931, 0.0
    %v1404 = vmax.f32 %v934, 0.0
    %v1405 = vmax.f32 %v939, 0.0
    %v1406 = vmax.f32 %v942, 0.0
    %v1407 = vmax.f32 %v947, 0.0
    %v1408 = vmax.f32 %v950, 0.0
    %v1409 = vmax.f32 %v955, 0.0
    %v1410 = vmax.f32 %v958, 0.0
    %v1411 = vmax.f32 %v963, 0.0
    %v1412 = vmax.f32 %v966, 0.0
    %v1413 = vmax.f32 %v971, 0.0
    %v1414 = vmax.f32 %v974, 0.0
    %v1415 = vmax.f32 %v979, 0.0
    %v1416 = vmax.f32 %v982, 0.0
    %v1417 = vmax.f32 %v987, 0.0
    %v1418 = vmax.f32 %v990, 0.0
    %v1419 = vmax.f32 %v995, 0.0
    %v1420 = vmax.f32 %v998, 0.0
    %v1421 = vmax.f32 %v1003, 0.0
    %v1422 = vmax.f32 %v1006, 0.0
    %v1423 = vmax.f32 %v1011, 0.0
    %v1424 = vmax.f32 %v1014, 0.0
    %v1425 = vmax.f32 %v1019, 0.0
    %v1426 = vmax.f32 %v1022, 0.0
    %v1427 = vmax.f32 %v1027, 0.0
    %v1428 = vmax.f32 %v1030, 0.0
    %v1429 = vmax.f32 %v1035, 0.0
    %v1430 = vmax.f32 %v1038, 0.0
    %v1431 = vmax.f32 %v1043, 0.0
    %v1432 = vmax.f32 %v1046, 0.0
    %v1433 = vmax.f32 %v1051, 0.0
    %v1434 = vmax.f32 %v1054, 0.0
    %v1435 = vmax.f32 %v1059, 0.0
    %v1436 = vmax.f32 %v1062, 0.0
    %v1437 = vmax.f32 %v1067, 0.0
    %v1438 = vmax.f32 %v1070, 0.0
    %v1439 = vmax.f32 %v1075, 0.0
    %v1440 = vmax.f32 %v1078, 0.0
    %v1441 = vmax.f32 %v1083, 0.0
    %v1442 = vmax.f32 %v1086, 0.0
    %v1443 = vmax.f32 %v1091, 0.0
    %v1444 = vmax.f32 %v1094, 0.0
    %v1445 = vmax.f32 %v1099, 0.0
    %v1446 = vmax.f32 %v1102, 0.0
    %v1447 = vmax.f32 %v1107, 0.0
    %v1448 = vmax.f32 %v1110, 0.0
    %v1449 = vmax.f32 %v1115, 0.0
    %v1450 = vmax.f32 %v1118, 0.0
    %v1451 = vmax.f32 %v1123, 0.0
    %v1452 = vmax.f32 %v1126, 0.0
    %v1453 = vmax.f32 %v1131, 0.0
    %v1454 = vmax.f32 %v1134, 0.0
    %v1455 = vmax.f32 %v1139, 0.0
    %v1456 = vmax.f32 %v1142, 0.0
    %v1457 = vmax.f32 %v1147, 0.0
    %v1458 = vmax.f32 %v1150, 0.0
    %v1459 = vmax.f32 %v1155, 0.0
    %v1460 = vmax.f32 %v1158, 0.0
    %v1461 = vmax.f32 %v1163, 0.0
    %v1462 = vmax.f32 %v1166, 0.0
    %v1463 = vmax.f32 %v1171, 0.0
    %v1464 = vmax.f32 %v1174, 0.0
    %v1465 = vmax.f32 %v1179, 0.0
    %v1466 = vmax.f32 %v1182, 0.0
    %v1467 = vmax.f32 %v1187, 0.0
    %v1468 = vmax.f32 %v1190, 0.0
    %v1469 = vmax.f32 %v1195, 0.0
    %v1470 = vmax.f32 %v1198, 0.0
    %v1471 = vmax.f32 %v1203, 0.0
    %v1472 = vmax.f32 %v1206, 0.0
    %v1473 = vmax.f32 %v1211, 0.0
    %v1474 = vmax.f32 %v1214, 0.0
    %v1475 = vmax.f32 %v1219, 0.0
    %v1476 = vmax.f32 %v1222, 0.0
    %v1477 = vmax.f32 %v1227, 0.0
    %v1478 = vmax.f32 %v1230, 0.0
    %v1479 = vmax.f32 %v1235, 0.0
    %v1480 = vmax.f32 %v1238, 0.0
    %v1481 = vmax.f32 %v1243, 0.0
    %v1482 = vmax.f32 %v1246, 0.0
    %v1483 = vmax.f32 %v1251, 0.0
    %v1484 = vmax.f32 %v1254, 0.0
    %v1485 = vmax.f32 %v1259, 0.0
    %v1486 = vmax.f32 %v1262, 0.0
    %v1487 = vmax.f32 %v1267, 0.0
    %v1488 = vmax.f32 %v1270, 0.0
    %v1489 = vmax.f32 %v1275, 0.0
    %v1490 = vmax.f32 %v1278, 0.0
    %v1491 = vmax.f32 %v1283, 0.0
    %v1492 = vmax.f32 %v1286, 0.0
    %v1493 = vmax.f32 %v1291, 0.0
    %v1494 = vmax.f32 %v1294, 0.0
    %v1495 = vmax.f32 %v1299, 0.0
    %v1496 = vmax.f32 %v1302, 0.0
    %v1497 = vmax.f32 %v1307, 0.0
    %v1498 = vmax.f32 %v1310, 0.0
    %v1499 = vmax.f32 %v1315, 0.0
    %v1500 = vmax.f32 %v1318, 0.0
    %v1501 = vmax.f32 %v1323, 0.0
    %v1502 = vmax.f32 %v1326, 0.0
    %v1503 = vmax.f32 %v1331, 0.0
    %v1504 = vmax.f32 %v1334, 0.0
    %v1505 = vmax.f32 %v1339, 0.0
    %v1506 = vmax.f32 %v1342, 0.0
    %v1507 = vmax.f32 %v1347, 0.0
    %v1508 = vmax.f32 %v1350, 0.0
    %v1509 = vmax.f32 %v1355, 0.0
    %v1510 = vmax.f32 %v1358, 0.0
    %v1511 = vmax.f32 %v1363, 0.0
    %v1512 = vmax.f32 %v1366, 0.0
    %v1513 = vpack.c.bf16 %v1370, %v1369
    %v1514 = vpack.c.bf16 %v1372, %v1371
    %v1515 = vpack.c.bf16 %v1374, %v1373
    %v1516 = vpack.c.bf16 %v1376, %v1375
    %v1517 = vpack.c.bf16 %v1378, %v1377
    %v1518 = vpack.c.bf16 %v1380, %v1379
    %v1519 = vpack.c.bf16 %v1382, %v1381
    %v1520 = vpack.c.bf16 %v1384, %v1383
    %v1521 = vpack.c.bf16 %v1386, %v1385
    %v1522 = vpack.c.bf16 %v1388, %v1387
    %v1523 = vpack.c.bf16 %v1390, %v1389
    %v1524 = vpack.c.bf16 %v1392, %v1391
    %v1525 = vpack.c.bf16 %v1394, %v1393
    %v1526 = vpack.c.bf16 %v1396, %v1395
    %v1527 = vpack.c.bf16 %v1398, %v1397
    %v1528 = vpack.c.bf16 %v1400, %v1399
    %v1529 = vpack.c.bf16 %v1402, %v1401
    %v1530 = vpack.c.bf16 %v1404, %v1403
    %v1531 = vpack.c.bf16 %v1406, %v1405
    %v1532 = vpack.c.bf16 %v1408, %v1407
    %v1533 = vpack.c.bf16 %v1410, %v1409
    %v1534 = vpack.c.bf16 %v1412, %v1411
    %v1535 = vpack.c.bf16 %v1414, %v1413
    %v1536 = vpack.c.bf16 %v1416, %v1415
    %v1537 = vpack.c.bf16 %v1418, %v1417
    %v1538 = vpack.c.bf16 %v1420, %v1419
    %v1539 = vpack.c.bf16 %v1422, %v1421
    %v1540 = vpack.c.bf16 %v1424, %v1423
    %v1541 = vpack.c.bf16 %v1426, %v1425
    %v1542 = vpack.c.bf16 %v1428, %v1427
    %v1543 = vpack.c.bf16 %v1430, %v1429
    %v1544 = vpack.c.bf16 %v1432, %v1431
    %v1545 = vpack.c.bf16 %v1434, %v1433
    %v1546 = vpack.c.bf16 %v1436, %v1435
    %v1547 = vpack.c.bf16 %v1438, %v1437
    %v1548 = vpack.c.bf16 %v1440, %v1439
    %v1549 = vpack.c.bf16 %v1442, %v1441
    %v1550 = vpack.c.bf16 %v1444, %v1443
    %v1551 = vpack.c.bf16 %v1446, %v1445
    %v1552 = vpack.c.bf16 %v1448, %v1447
    %v1553 = vpack.c.bf16 %v1450, %v1449
    %v1554 = vpack.c.bf16 %v1452, %v1451
    %v1555 = vpack.c.bf16 %v1454, %v1453
    %v1556 = vpack.c.bf16 %v1456, %v1455
    %v1557 = vpack.c.bf16 %v1458, %v1457
    %v1558 = vpack.c.bf16 %v1460, %v1459
    %v1559 = vpack.c.bf16 %v1462, %v1461
    %v1560 = vpack.c.bf16 %v1464, %v1463
    %v1561 = vpack.c.bf16 %v1466, %v1465
    %v1562 = vpack.c.bf16 %v1468, %v1467
    %v1563 = vpack.c.bf16 %v1470, %v1469
    %v1564 = vpack.c.bf16 %v1472, %v1471
    %v1565 = vpack.c.bf16 %v1474, %v1473
    %v1566 = vpack.c.bf16 %v1476, %v1475
    %v1567 = vpack.c.bf16 %v1478, %v1477
    %v1568 = vpack.c.bf16 %v1480, %v1479
    %v1569 = vpack.c.bf16 %v1482, %v1481
    %v1570 = vpack.c.bf16 %v1484, %v1483
    %v1571 = vpack.c.bf16 %v1486, %v1485
    %v1572 = vpack.c.bf16 %v1488, %v1487
    %v1573 = vpack.c.bf16 %v1490, %v1489
    %v1574 = vpack.c.bf16 %v1492, %v1491
    %v1575 = vpack.c.bf16 %v1494, %v1493
    %v1576 = vpack.c.bf16 %v1496, %v1495
    %v1577 = vpack.c.bf16 %v1498, %v1497
    %v1578 = vpack.c.bf16 %v1500, %v1499
    %v1579 = vpack.c.bf16 %v1502, %v1501
    %v1580 = vpack.c.bf16 %v1504, %v1503
    %v1581 = vpack.c.bf16 %v1506, %v1505
    %v1582 = vpack.c.bf16 %v1508, %v1507
    %v1583 = vpack.c.bf16 %v1510, %v1509
    %v1584 = vpack.c.bf16 %v1512, %v1511
    %v1585 = vld [vmem:[%s3] sm:$0xf]
    %s1586 = scalar_lea.vmem %s3, 4
    %v1587 = vld [vmem:[%s1586] sm:$0xf]
    %vm1588 = vcmask 64512
    %v1590 = vsel %vm1588, %v1521, 0
    %v1593 = vsel %vm1588, %v1522, 0
    %v1596 = vsel %vm1588, %v1523, 0
    %v1599 = vsel %vm1588, %v1524, 0
    %v1602 = vsel %vm1588, %v1525, 0
    %v1605 = vsel %vm1588, %v1526, 0
    %v1608 = vsel %vm1588, %v1527, 0
    %v1611 = vsel %vm1588, %v1528, 0
    %vm1613 = vcmask 1043456
    %v1615 = vsel %vm1613, %v1587, 0
    %1617 = vmatprep.subr.bf16.mxu0 0
    %1618 = vmatpush1.bf16.msra.mxu0 %v1615
    %1619 = vmatprep.subr.bf16.mxu0 0
    %1620 = vmatpush1.bf16.msra.mxu0 0
    %1621 = vmatprep.subr.bf16.mxu0 0
    %1622 = vmatpush1.bf16.msra.mxu0 0
    %1623 = vmatprep.subr.bf16.mxu0 0
    %1624 = vmatpush1.bf16.msra.mxu0 0
    %1625 = vmatprep.subr.bf16.mxu0 0
    %1626 = vmatpush1.bf16.msra.mxu0 0
    %1627 = vmatprep.subr.bf16.mxu0 0
    %1628 = vmatpush1.bf16.msra.mxu0 0
    %1629 = vmatprep.subr.bf16.mxu0 0
    %1630 = vmatpush1.bf16.msra.mxu0 0
    %1631 = vmatprep.subr.bf16.mxu0 0
    %1632 = vmatpush1.bf16.msra.mxu0 0
    %1633 = vmatprep.subr.bf16.mxu0 0
    %1634 = vmatpush1.bf16.msra.mxu0 0
    %1635 = vmatprep.subr.bf16.mxu0 0
    %1636 = vmatpush1.bf16.msra.mxu0 0
    %1637 = vmatprep.subr.bf16.mxu0 0
    %1638 = vmatpush1.bf16.msra.mxu0 0
    %1639 = vmatprep.subr.bf16.mxu0 0
    %1640 = vmatpush1.bf16.msra.mxu0 0
    %1641 = vmatprep.subr.bf16.mxu0 0
    %1642 = vmatpush1.bf16.msra.mxu0 0
    %1643 = vmatprep.subr.bf16.mxu0 0
    %1644 = vmatpush1.bf16.msra.mxu0 0
    %1645 = vmatprep.subr.bf16.mxu0 0
    %1646 = vmatpush1.bf16.msra.mxu0 0
    %1647 = vmatprep.subr.bf16.mxu0 0
    %1648 = vmatpush1.bf16.msra.mxu0 0
    %1649 = vmatprep.mubr.bf16.mxu0 0
    %1650 = vmatmul.mubr.bf16.gmra.mrb[0].mxu0 %v1590
    %v1651 = vpop.f32.mrb[0].mxu0
    %v1652 = vadd.f32 0.0, %v1651
    %v1653 = vpop.f32.mrb[0].mxu0
    %v1654 = vpop.f32.mrb[0].mxu0
    %v1655 = vadd.f32 0.0, %v1654
    %v1656 = vpop.f32.mrb[0].mxu0
    %1657 = vmatprep.mubr.bf16.mxu0 0
    %1658 = vmatmul.mubr.bf16.gmra.mrb[0].mxu0 %v1593
    %v1659 = vpop.f32.mrb[0].mxu0
    %v1660 = vadd.f32 0.0, %v1659
    %v1661 = vpop.f32.mrb[0].mxu0
    %v1662 = vpop.f32.mrb[0].mxu0
    %v1663 = vadd.f32 0.0, %v1662
    %v1664 = vpop.f32.mrb[0].mxu0
    %1665 = vmatprep.mubr.bf16.mxu0 0
    %1666 = vmatmul.mubr.bf16.gmra.mrb[0].mxu0 %v1596
    %v1667 = vpop.f32.mrb[0].mxu0
    %v1668 = vadd.f32 0.0, %v1667
    %v1669 = vpop.f32.mrb[0].mxu0
    %v1670 = vpop.f32.mrb[0].mxu0
    %v1671 = vadd.f32 0.0, %v1670
    %v1672 = vpop.f32.mrb[0].mxu0
    %1673 = vmatprep.mubr.bf16.mxu0 0
    %1674 = vmatmul.mubr.bf16.gmra.mrb[0].mxu0 %v1599
    %v1675 = vpop.f32.mrb[0].mxu0
    %v1676 = vadd.f32 0.0, %v1675
    %v1677 = vpop.f32.mrb[0].mxu0
    %v1678 = vpop.f32.mrb[0].mxu0
    %v1679 = vadd.f32 0.0, %v1678
    %v1680 = vpop.f32.mrb[0].mxu0
    %1681 = vmatprep.mubr.bf16.mxu0 0
    %1682 = vmatmul.mubr.bf16.gmra.mrb[0].mxu0 %v1602
    %v1683 = vpop.f32.mrb[0].mxu0
    %v1684 = vadd.f32 0.0, %v1683
    %v1685 = vpop.f32.mrb[0].mxu0
    %v1686 = vpop.f32.mrb[0].mxu0
    %v1687 = vadd.f32 0.0, %v1686
    %v1688 = vpop.f32.mrb[0].mxu0
    %1689 = vmatprep.mubr.bf16.mxu0 0
    %1690 = vmatmul.mubr.bf16.gmra.mrb[0].mxu0 %v1605
    %v1691 = vpop.f32.mrb[0].mxu0
    %v1692 = vadd.f32 0.0, %v1691
    %v1693 = vpop.f32.mrb[0].mxu0
    %v1694 = vpop.f32.mrb[0].mxu0
    %v1695 = vadd.f32 0.0, %v1694
    %v1696 = vpop.f32.mrb[0].mxu0
    %1697 = vmatprep.mubr.bf16.mxu0 0
    %1698 = vmatmul.mubr.bf16.gmra.mrb[0].mxu0 %v1608
    %v1699 = vpop.f32.mrb[0].mxu0
    %v1700 = vadd.f32 0.0, %v1699
    %v1701 = vpop.f32.mrb[0].mxu0
    %v1702 = vpop.f32.mrb[0].mxu0
    %v1703 = vadd.f32 0.0, %v1702
    %v1704 = vpop.f32.mrb[0].mxu0
    %1705 = vmatprep.mubr.bf16.mxu0 0
    %1706 = vmatmul.mubr.bf16.gmra.mrb[0].mxu0 %v1611
    %v1707 = vpop.f32.mrb[0].mxu0
    %v1708 = vadd.f32 0.0, %v1707
    %v1709 = vpop.f32.mrb[0].mxu0
    %v1710 = vpop.f32.mrb[0].mxu0
    %v1711 = vadd.f32 0.0, %v1710
    %v1712 = vpop.f32.mrb[0].mxu0
    %1713 = vdwg.mxu0
    %v1715 = vsel %vm1588, %v1513, 0
    %v1718 = vsel %vm1588, %v1514, 0
    %v1721 = vsel %vm1588, %v1515, 0
    %v1724 = vsel %vm1588, %v1516, 0
    %v1727 = vsel %vm1588, %v1517, 0
    %v1730 = vsel %vm1588, %v1518, 0
    %v1733 = vsel %vm1588, %v1519, 0
    %v1736 = vsel %vm1588, %v1520, 0
    %v1739 = vsel %vm1613, %v1585, 0
    %1741 = vmatprep.subr.bf16.mxu0 0
    %1742 = vmatpush1.bf16.msra.mxu0 %v1739
    %1743 = vmatprep.subr.bf16.mxu0 0
    %1744 = vmatpush1.bf16.msra.mxu0 0
    %1745 = vmatprep.subr.bf16.mxu0 0
    %1746 = vmatpush1.bf16.msra.mxu0 0
    %1747 = vmatprep.subr.bf16.mxu0 0
    %1748 = vmatpush1.bf16.msra.mxu0 0
    %1749 = vmatprep.subr.bf16.mxu0 0
    %1750 = vmatpush1.bf16.msra.mxu0 0
    %1751 = vmatprep.subr.bf16.mxu0 0
    %1752 = vmatpush1.bf16.msra.mxu0 0
    %1753 = vmatprep.subr.bf16.mxu0 0
    %1754 = vmatpush1.bf16.msra.mxu0 0
    %1755 = vmatprep.subr.bf16.mxu0 0
    %1756 = vmatpush1.bf16.msra.mxu0 0
    %1757 = vmatprep.subr.bf16.mxu0 0
    %1758 = vmatpush1.bf16.msra.mxu0 0
    %1759 = vmatprep.subr.bf16.mxu0 0
    %1760 = vmatpush1.bf16.msra.mxu0 0
    %1761 = vmatprep.subr.bf16.mxu0 0
    %1762 = vmatpush1.bf16.msra.mxu0 0
    %1763 = vmatprep.subr.bf16.mxu0 0
    %1764 = vmatpush1.bf16.msra.mxu0 0
    %1765 = vmatprep.subr.bf16.mxu0 0
    %1766 = vmatpush1.bf16.msra.mxu0 0
    %1767 = vmatprep.subr.bf16.mxu0 0
    %1768 = vmatpush1.bf16.msra.mxu0 0
    %1769 = vmatprep.subr.bf16.mxu0 0
    %1770 = vmatpush1.bf16.msra.mxu0 0
    %1771 = vmatprep.subr.bf16.mxu0 0
    %1772 = vmatpush1.bf16.msra.mxu0 0
    %1773 = vmatprep.mubr.bf16.mxu0 0
    %1774 = vmatmul.mubr.bf16.gmra.mrb[0].mxu0 %v1715
    %v1775 = vpop.f32.mrb[0].mxu0
    %v1776 = vadd.f32 %v1652, %v1775
    %v1777 = vpop.f32.mrb[0].mxu0
    %v1778 = vpop.f32.mrb[0].mxu0
    %v1779 = vadd.f32 %v1655, %v1778
    %v1780 = vpop.f32.mrb[0].mxu0
    %1781 = vmatprep.mubr.bf16.mxu0 0
    %1782 = vmatmul.mubr.bf16.gmra.mrb[0].mxu0 %v1718
    %v1783 = vpop.f32.mrb[0].mxu0
    %v1784 = vadd.f32 %v1660, %v1783
    %v1785 = vpop.f32.mrb[0].mxu0
    %v1786 = vpop.f32.mrb[0].mxu0
    %v1787 = vadd.f32 %v1663, %v1786
    %v1788 = vpop.f32.mrb[0].mxu0
    %1789 = vmatprep.mubr.bf16.mxu0 0
    %1790 = vmatmul.mubr.bf16.gmra.mrb[0].mxu0 %v1721
    %v1791 = vpop.f32.mrb[0].mxu0
    %v1792 = vadd.f32 %v1668, %v1791
    %v1793 = vpop.f32.mrb[0].mxu0
    %v1794 = vpop.f32.mrb[0].mxu0
    %v1795 = vadd.f32 %v1671, %v1794
    %v1796 = vpop.f32.mrb[0].mxu0
    %1797 = vmatprep.mubr.bf16.mxu0 0
    %1798 = vmatmul.mubr.bf16.gmra.mrb[0].mxu0 %v1724
    %v1799 = vpop.f32.mrb[0].mxu0
    %v1800 = vadd.f32 %v1676, %v1799
    %v1801 = vpop.f32.mrb[0].mxu0
    %v1802 = vpop.f32.mrb[0].mxu0
    %v1803 = vadd.f32 %v1679, %v1802
    %v1804 = vpop.f32.mrb[0].mxu0
    %1805 = vmatprep.mubr.bf16.mxu0 0
    %1806 = vmatmul.mubr.bf16.gmra.mrb[0].mxu0 %v1727
    %v1807 = vpop.f32.mrb[0].mxu0
    %v1808 = vadd.f32 %v1684, %v1807
    %v1809 = vpop.f32.mrb[0].mxu0
    %v1810 = vpop.f32.mrb[0].mxu0
    %v1811 = vadd.f32 %v1687, %v1810
    %v1812 = vpop.f32.mrb[0].mxu0
    %1813 = vmatprep.mubr.bf16.mxu0 0
    %1814 = vmatmul.mubr.bf16.gmra.mrb[0].mxu0 %v1730
    %v1815 = vpop.f32.mrb[0].mxu0
    %v1816 = vadd.f32 %v1692, %v1815
    %v1817 = vpop.f32.mrb[0].mxu0
    %v1818 = vpop.f32.mrb[0].mxu0
    %v1819 = vadd.f32 %v1695, %v1818
    %v1820 = vpop.f32.mrb[0].mxu0
    %1821 = vmatprep.mubr.bf16.mxu0 0
    %1822 = vmatmul.mubr.bf16.gmra.mrb[0].mxu0 %v1733
    %v1823 = vpop.f32.mrb[0].mxu0
    %v1824 = vadd.f32 %v1700, %v1823
    %v1825 = vpop.f32.mrb[0].mxu0
    %v1826 = vpop.f32.mrb[0].mxu0
    %v1827 = vadd.f32 %v1703, %v1826
    %v1828 = vpop.f32.mrb[0].mxu0
    %1829 = vmatprep.mubr.bf16.mxu0 0
    %1830 = vmatmul.mubr.bf16.gmra.mrb[0].mxu0 %v1736
    %v1831 = vpop.f32.mrb[0].mxu0
    %v1832 = vadd.f32 %v1708, %v1831
    %v1833 = vpop.f32.mrb[0].mxu0
    %v1834 = vpop.f32.mrb[0].mxu0
    %v1835 = vadd.f32 %v1711, %v1834
    %v1836 = vpop.f32.mrb[0].mxu0
    %1837 = vdwg.mxu0
    %s1838 = scalar_lea.vmem %s3, 8
    %v1839 = vld [vmem:[%s1838] sm:$0xf]
    %v1841 = vsel %vm1588, %v1529, 0
    %v1844 = vsel %vm1588, %v1530, 0
    %v1847 = vsel %vm1588, %v1531, 0
    %v1850 = vsel %vm1588, %v1532, 0
    %v1853 = vsel %vm1588, %v1533, 0
    %v1856 = vsel %vm1588, %v1534, 0
    %v1859 = vsel %vm1588, %v1535, 0
    %v1862 = vsel %vm1588, %v1536, 0
    %v1865 = vsel %vm1613, %v1839, 0
    %1867 = vmatprep.subr.bf16.mxu0 0
    %1868 = vmatpush1.bf16.msra.mxu0 %v1865
    %1869 = vmatprep.subr.bf16.mxu0 0
    %1870 = vmatpush1.bf16.msra.mxu0 0
    %1871 = vmatprep.subr.bf16.mxu0 0
    %1872 = vmatpush1.bf16.msra.mxu0 0
    %1873 = vmatprep.subr.bf16.mxu0 0
    %1874 = vmatpush1.bf16.msra.mxu0 0
    %1875 = vmatprep.subr.bf16.mxu0 0
    %1876 = vmatpush1.bf16.msra.mxu0 0
    %1877 = vmatprep.subr.bf16.mxu0 0
    %1878 = vmatpush1.bf16.msra.mxu0 0
    %1879 = vmatprep.subr.bf16.mxu0 0
    %1880 = vmatpush1.bf16.msra.mxu0 0
    %1881 = vmatprep.subr.bf16.mxu0 0
    %1882 = vmatpush1.bf16.msra.mxu0 0
    %1883 = vmatprep.subr.bf16.mxu0 0
    %1884 = vmatpush1.bf16.msra.mxu0 0
    %1885 = vmatprep.subr.bf16.mxu0 0
    %1886 = vmatpush1.bf16.msra.mxu0 0
    %1887 = vmatprep.subr.bf16.mxu0 0
    %1888 = vmatpush1.bf16.msra.mxu0 0
    %1889 = vmatprep.subr.bf16.mxu0 0
    %1890 = vmatpush1.bf16.msra.mxu0 0
    %1891 = vmatprep.subr.bf16.mxu0 0
    %1892 = vmatpush1.bf16.msra.mxu0 0
    %1893 = vmatprep.subr.bf16.mxu0 0
    %1894 = vmatpush1.bf16.msra.mxu0 0
    %1895 = vmatprep.subr.bf16.mxu0 0
    %1896 = vmatpush1.bf16.msra.mxu0 0
    %1897 = vmatprep.subr.bf16.mxu0 0
    %1898 = vmatpush1.bf16.msra.mxu0 0
    %1899 = vmatprep.mubr.bf16.mxu0 0
    %1900 = vmatmul.mubr.bf16.gmra.mrb[0].mxu0 %v1841
    %v1901 = vpop.f32.mrb[0].mxu0
    %v1902 = vadd.f32 0.0, %v1901
    %v1903 = vpop.f32.mrb[0].mxu0
    %v1904 = vpop.f32.mrb[0].mxu0
    %v1905 = vadd.f32 0.0, %v1904
    %v1906 = vpop.f32.mrb[0].mxu0
    %1907 = vmatprep.mubr.bf16.mxu0 0
    %1908 = vmatmul.mubr.bf16.gmra.mrb[0].mxu0 %v1844
    %v1909 = vpop.f32.mrb[0].mxu0
    %v1910 = vadd.f32 0.0, %v1909
    %v1911 = vpop.f32.mrb[0].mxu0
    %v1912 = vpop.f32.mrb[0].mxu0
    %v1913 = vadd.f32 0.0, %v1912
    %v1914 = vpop.f32.mrb[0].mxu0
    %1915 = vmatprep.mubr.bf16.mxu0 0
    %1916 = vmatmul.mubr.bf16.gmra.mrb[0].mxu0 %v1847
    %v1917 = vpop.f32.mrb[0].mxu0
    %v1918 = vadd.f32 0.0, %v1917
    %v1919 = vpop.f32.mrb[0].mxu0
    %v1920 = vpop.f32.mrb[0].mxu0
    %v1921 = vadd.f32 0.0, %v1920
    %v1922 = vpop.f32.mrb[0].mxu0
    %1923 = vmatprep.mubr.bf16.mxu0 0
    %1924 = vmatmul.mubr.bf16.gmra.mrb[0].mxu0 %v1850
    %v1925 = vpop.f32.mrb[0].mxu0
    %v1926 = vadd.f32 0.0, %v1925
    %v1927 = vpop.f32.mrb[0].mxu0
    %v1928 = vpop.f32.mrb[0].mxu0
    %v1929 = vadd.f32 0.0, %v1928
    %v1930 = vpop.f32.mrb[0].mxu0
    %1931 = vmatprep.mubr.bf16.mxu0 0
    %1932 = vmatmul.mubr.bf16.gmra.mrb[0].mxu0 %v1853
    %v1933 = vpop.f32.mrb[0].mxu0
    %v1934 = vadd.f32 0.0, %v1933
    %v1935 = vpop.f32.mrb[0].mxu0
    %v1936 = vpop.f32.mrb[0].mxu0
    %v1937 = vadd.f32 0.0, %v1936
    %v1938 = vpop.f32.mrb[0].mxu0
    %1939 = vmatprep.mubr.bf16.mxu0 0
    %1940 = vmatmul.mubr.bf16.gmra.mrb[0].mxu0 %v1856
    %v1941 = vpop.f32.mrb[0].mxu0
    %v1942 = vadd.f32 0.0, %v1941
    %v1943 = vpop.f32.mrb[0].mxu0
    %v1944 = vpop.f32.mrb[0].mxu0
    %v1945 = vadd.f32 0.0, %v1944
    %v1946 = vpop.f32.mrb[0].mxu0
    %1947 = vmatprep.mubr.bf16.mxu0 0
    %1948 = vmatmul.mubr.bf16.gmra.mrb[0].mxu0 %v1859
    %v1949 = vpop.f32.mrb[0].mxu0
    %v1950 = vadd.f32 0.0, %v1949
    %v1951 = vpop.f32.mrb[0].mxu0
    %v1952 = vpop.f32.mrb[0].mxu0
    %v1953 = vadd.f32 0.0, %v1952
    %v1954 = vpop.f32.mrb[0].mxu0
    %1955 = vmatprep.mubr.bf16.mxu0 0
    %1956 = vmatmul.mubr.bf16.gmra.mrb[0].mxu0 %v1862
    %v1957 = vpop.f32.mrb[0].mxu0
    %v1958 = vadd.f32 0.0, %v1957
    %v1959 = vpop.f32.mrb[0].mxu0
    %v1960 = vpop.f32.mrb[0].mxu0
    %v1961 = vadd.f32 0.0, %v1960
    %v1962 = vpop.f32.mrb[0].mxu0
    %1963 = vdwg.mxu0
    %v1964 = vadd.f32 %v1776, %v1902
    %v1965 = vadd.f32 %v1779, %v1905
    %v1966 = vadd.f32 %v1784, %v1910
    %v1967 = vadd.f32 %v1787, %v1913
    %v1968 = vadd.f32 %v1792, %v1918
    %v1969 = vadd.f32 %v1795, %v1921
    %v1970 = vadd.f32 %v1800, %v1926
    %v1971 = vadd.f32 %v1803, %v1929
    %v1972 = vadd.f32 %v1808, %v1934
    %v1973 = vadd.f32 %v1811, %v1937
    %v1974 = vadd.f32 %v1816, %v1942
    %v1975 = vadd.f32 %v1819, %v1945
    %v1976 = vadd.f32 %v1824, %v1950
    %v1977 = vadd.f32 %v1827, %v1953
    %v1978 = vadd.f32 %v1832, %v1958
    %v1979 = vadd.f32 %v1835, %v1961
    %s1980 = scalar_lea.vmem %s3, 12
    %v1981 = vld [vmem:[%s1980] sm:$0xf]
    %v1983 = vsel %vm1588, %v1537, 0
    %v1986 = vsel %vm1588, %v1538, 0
    %v1989 = vsel %vm1588, %v1539, 0
    %v1992 = vsel %vm1588, %v1540, 0
    %v1995 = vsel %vm1588, %v1541, 0
    %v1998 = vsel %vm1588, %v1542, 0
    %v2001 = vsel %vm1588, %v1543, 0
    %v2004 = vsel %vm1588, %v1544, 0
    %v2007 = vsel %vm1613, %v1981, 0
    %2009 = vmatprep.subr.bf16.mxu0 0
    %2010 = vmatpush1.bf16.msra.mxu0 %v2007
    %2011 = vmatprep.subr.bf16.mxu0 0
    %2012 = vmatpush1.bf16.msra.mxu0 0
    %2013 = vmatprep.subr.bf16.mxu0 0
    %2014 = vmatpush1.bf16.msra.mxu0 0
    %2015 = vmatprep.subr.bf16.mxu0 0
    %2016 = vmatpush1.bf16.msra.mxu0 0
    %2017 = vmatprep.subr.bf16.mxu0 0
    %2018 = vmatpush1.bf16.msra.mxu0 0
    %2019 = vmatprep.subr.bf16.mxu0 0
    %2020 = vmatpush1.bf16.msra.mxu0 0
    %2021 = vmatprep.subr.bf16.mxu0 0
    %2022 = vmatpush1.bf16.msra.mxu0 0
    %2023 = vmatprep.subr.bf16.mxu0 0
    %2024 = vmatpush1.bf16.msra.mxu0 0
    %2025 = vmatprep.subr.bf16.mxu0 0
    %2026 = vmatpush1.bf16.msra.mxu0 0
    %2027 = vmatprep.subr.bf16.mxu0 0
    %2028 = vmatpush1.bf16.msra.mxu0 0
    %2029 = vmatprep.subr.bf16.mxu0 0
    %2030 = vmatpush1.bf16.msra.mxu0 0
    %2031 = vmatprep.subr.bf16.mxu0 0
    %2032 = vmatpush1.bf16.msra.mxu0 0
    %2033 = vmatprep.subr.bf16.mxu0 0
    %2034 = vmatpush1.bf16.msra.mxu0 0
    %2035 = vmatprep.subr.bf16.mxu0 0
    %2036 = vmatpush1.bf16.msra.mxu0 0
    %2037 = vmatprep.subr.bf16.mxu0 0
    %2038 = vmatpush1.bf16.msra.mxu0 0
    %2039 = vmatprep.subr.bf16.mxu0 0
    %2040 = vmatpush1.bf16.msra.mxu0 0
    %2041 = vmatprep.mubr.bf16.mxu0 0
    %2042 = vmatmul.mubr.bf16.gmra.mrb[0].mxu0 %v1983
    %v2043 = vpop.f32.mrb[0].mxu0
    %v2044 = vadd.f32 0.0, %v2043
    %v2045 = vpop.f32.mrb[0].mxu0
    %v2046 = vpop.f32.mrb[0].mxu0
    %v2047 = vadd.f32 0.0, %v2046
    %v2048 = vpop.f32.mrb[0].mxu0
    %2049 = vmatprep.mubr.bf16.mxu0 0
    %2050 = vmatmul.mubr.bf16.gmra.mrb[0].mxu0 %v1986
    %v2051 = vpop.f32.mrb[0].mxu0
    %v2052 = vadd.f32 0.0, %v2051
    %v2053 = vpop.f32.mrb[0].mxu0
    %v2054 = vpop.f32.mrb[0].mxu0
    %v2055 = vadd.f32 0.0, %v2054
    %v2056 = vpop.f32.mrb[0].mxu0
    %2057 = vmatprep.mubr.bf16.mxu0 0
    %2058 = vmatmul.mubr.bf16.gmra.mrb[0].mxu0 %v1989
    %v2059 = vpop.f32.mrb[0].mxu0
    %v2060 = vadd.f32 0.0, %v2059
    %v2061 = vpop.f32.mrb[0].mxu0
    %v2062 = vpop.f32.mrb[0].mxu0
    %v2063 = vadd.f32 0.0, %v2062
    %v2064 = vpop.f32.mrb[0].mxu0
    %2065 = vmatprep.mubr.bf16.mxu0 0
    %2066 = vmatmul.mubr.bf16.gmra.mrb[0].mxu0 %v1992
    %v2067 = vpop.f32.mrb[0].mxu0
    %v2068 = vadd.f32 0.0, %v2067
    %v2069 = vpop.f32.mrb[0].mxu0
    %v2070 = vpop.f32.mrb[0].mxu0
    %v2071 = vadd.f32 0.0, %v2070
    %v2072 = vpop.f32.mrb[0].mxu0
    %2073 = vmatprep.mubr.bf16.mxu0 0
    %2074 = vmatmul.mubr.bf16.gmra.mrb[0].mxu0 %v1995
    %v2075 = vpop.f32.mrb[0].mxu0
    %v2076 = vadd.f32 0.0, %v2075
    %v2077 = vpop.f32.mrb[0].mxu0
    %v2078 = vpop.f32.mrb[0].mxu0
    %v2079 = vadd.f32 0.0, %v2078
    %v2080 = vpop.f32.mrb[0].mxu0
    %2081 = vmatprep.mubr.bf16.mxu0 0
    %2082 = vmatmul.mubr.bf16.gmra.mrb[0].mxu0 %v1998
    %v2083 = vpop.f32.mrb[0].mxu0
    %v2084 = vadd.f32 0.0, %v2083
    %v2085 = vpop.f32.mrb[0].mxu0
    %v2086 = vpop.f32.mrb[0].mxu0
    %v2087 = vadd.f32 0.0, %v2086
    %v2088 = vpop.f32.mrb[0].mxu0
    %2089 = vmatprep.mubr.bf16.mxu0 0
    %2090 = vmatmul.mubr.bf16.gmra.mrb[0].mxu0 %v2001
    %v2091 = vpop.f32.mrb[0].mxu0
    %v2092 = vadd.f32 0.0, %v2091
    %v2093 = vpop.f32.mrb[0].mxu0
    %v2094 = vpop.f32.mrb[0].mxu0
    %v2095 = vadd.f32 0.0, %v2094
    %v2096 = vpop.f32.mrb[0].mxu0
    %2097 = vmatprep.mubr.bf16.mxu0 0
    %2098 = vmatmul.mubr.bf16.gmra.mrb[0].mxu0 %v2004
    %v2099 = vpop.f32.mrb[0].mxu0
    %v2100 = vadd.f32 0.0, %v2099
    %v2101 = vpop.f32.mrb[0].mxu0
    %v2102 = vpop.f32.mrb[0].mxu0
    %v2103 = vadd.f32 0.0, %v2102
    %v2104 = vpop.f32.mrb[0].mxu0
    %2105 = vdwg.mxu0
    %v2106 = vadd.f32 %v1964, %v2044
    %v2107 = vadd.f32 %v1965, %v2047
    %v2108 = vadd.f32 %v1966, %v2052
    %v2109 = vadd.f32 %v1967, %v2055
    %v2110 = vadd.f32 %v1968, %v2060
    %v2111 = vadd.f32 %v1969, %v2063
    %v2112 = vadd.f32 %v1970, %v2068
    %v2113 = vadd.f32 %v1971, %v2071
    %v2114 = vadd.f32 %v1972, %v2076
    %v2115 = vadd.f32 %v1973, %v2079
    %v2116 = vadd.f32 %v1974, %v2084
    %v2117 = vadd.f32 %v1975, %v2087
    %v2118 = vadd.f32 %v1976, %v2092
    %v2119 = vadd.f32 %v1977, %v2095
    %v2120 = vadd.f32 %v1978, %v2100
    %v2121 = vadd.f32 %v1979, %v2103
    %s2122 = scalar_lea.vmem %s3, 16
    %v2123 = vld [vmem:[%s2122] sm:$0xf]
    %v2125 = vsel %vm1588, %v1545, 0
    %v2128 = vsel %vm1588, %v1546, 0
    %v2131 = vsel %vm1588, %v1547, 0
    %v2134 = vsel %vm1588, %v1548, 0
    %v2137 = vsel %vm1588, %v1549, 0
    %v2140 = vsel %vm1588, %v1550, 0
    %v2143 = vsel %vm1588, %v1551, 0
    %v2146 = vsel %vm1588, %v1552, 0
    %v2149 = vsel %vm1613, %v2123, 0
    %2151 = vmatprep.subr.bf16.mxu0 0
    %2152 = vmatpush1.bf16.msra.mxu0 %v2149
    %2153 = vmatprep.subr.bf16.mxu0 0
    %2154 = vmatpush1.bf16.msra.mxu0 0
    %2155 = vmatprep.subr.bf16.mxu0 0
    %2156 = vmatpush1.bf16.msra.mxu0 0
    %2157 = vmatprep.subr.bf16.mxu0 0
    %2158 = vmatpush1.bf16.msra.mxu0 0
    %2159 = vmatprep.subr.bf16.mxu0 0
    %2160 = vmatpush1.bf16.msra.mxu0 0
    %2161 = vmatprep.subr.bf16.mxu0 0
    %2162 = vmatpush1.bf16.msra.mxu0 0
    %2163 = vmatprep.subr.bf16.mxu0 0
    %2164 = vmatpush1.bf16.msra.mxu0 0
    %2165 = vmatprep.subr.bf16.mxu0 0
    %2166 = vmatpush1.bf16.msra.mxu0 0
    %2167 = vmatprep.subr.bf16.mxu0 0
    %2168 = vmatpush1.bf16.msra.mxu0 0
    %2169 = vmatprep.subr.bf16.mxu0 0
    %2170 = vmatpush1.bf16.msra.mxu0 0
    %2171 = vmatprep.subr.bf16.mxu0 0
    %2172 = vmatpush1.bf16.msra.mxu0 0
    %2173 = vmatprep.subr.bf16.mxu0 0
    %2174 = vmatpush1.bf16.msra.mxu0 0
    %2175 = vmatprep.subr.bf16.mxu0 0
    %2176 = vmatpush1.bf16.msra.mxu0 0
    %2177 = vmatprep.subr.bf16.mxu0 0
    %2178 = vmatpush1.bf16.msra.mxu0 0
    %2179 = vmatprep.subr.bf16.mxu0 0
    %2180 = vmatpush1.bf16.msra.mxu0 0
    %2181 = vmatprep.subr.bf16.mxu0 0
    %2182 = vmatpush1.bf16.msra.mxu0 0
    %2183 = vmatprep.mubr.bf16.mxu0 0
    %2184 = vmatmul.mubr.bf16.gmra.mrb[0].mxu0 %v2125
    %v2185 = vpop.f32.mrb[0].mxu0
    %v2186 = vadd.f32 0.0, %v2185
    %v2187 = vpop.f32.mrb[0].mxu0
    %v2188 = vpop.f32.mrb[0].mxu0
    %v2189 = vadd.f32 0.0, %v2188
    %v2190 = vpop.f32.mrb[0].mxu0
    %2191 = vmatprep.mubr.bf16.mxu0 0
    %2192 = vmatmul.mubr.bf16.gmra.mrb[0].mxu0 %v2128
    %v2193 = vpop.f32.mrb[0].mxu0
    %v2194 = vadd.f32 0.0, %v2193
    %v2195 = vpop.f32.mrb[0].mxu0
    %v2196 = vpop.f32.mrb[0].mxu0
    %v2197 = vadd.f32 0.0, %v2196
    %v2198 = vpop.f32.mrb[0].mxu0
    %2199 = vmatprep.mubr.bf16.mxu0 0
    %2200 = vmatmul.mubr.bf16.gmra.mrb[0].mxu0 %v2131
    %v2201 = vpop.f32.mrb[0].mxu0
    %v2202 = vadd.f32 0.0, %v2201
    %v2203 = vpop.f32.mrb[0].mxu0
    %v2204 = vpop.f32.mrb[0].mxu0
    %v2205 = vadd.f32 0.0, %v2204
    %v2206 = vpop.f32.mrb[0].mxu0
    %2207 = vmatprep.mubr.bf16.mxu0 0
    %2208 = vmatmul.mubr.bf16.gmra.mrb[0].mxu0 %v2134
    %v2209 = vpop.f32.mrb[0].mxu0
    %v2210 = vadd.f32 0.0, %v2209
    %v2211 = vpop.f32.mrb[0].mxu0
    %v2212 = vpop.f32.mrb[0].mxu0
    %v2213 = vadd.f32 0.0, %v2212
    %v2214 = vpop.f32.mrb[0].mxu0
    %2215 = vmatprep.mubr.bf16.mxu0 0
    %2216 = vmatmul.mubr.bf16.gmra.mrb[0].mxu0 %v2137
    %v2217 = vpop.f32.mrb[0].mxu0
    %v2218 = vadd.f32 0.0, %v2217
    %v2219 = vpop.f32.mrb[0].mxu0
    %v2220 = vpop.f32.mrb[0].mxu0
    %v2221 = vadd.f32 0.0, %v2220
    %v2222 = vpop.f32.mrb[0].mxu0
    %2223 = vmatprep.mubr.bf16.mxu0 0
    %2224 = vmatmul.mubr.bf16.gmra.mrb[0].mxu0 %v2140
    %v2225 = vpop.f32.mrb[0].mxu0
    %v2226 = vadd.f32 0.0, %v2225
    %v2227 = vpop.f32.mrb[0].mxu0
    %v2228 = vpop.f32.mrb[0].mxu0
    %v2229 = vadd.f32 0.0, %v2228
    %v2230 = vpop.f32.mrb[0].mxu0
    %2231 = vmatprep.mubr.bf16.mxu0 0
    %2232 = vmatmul.mubr.bf16.gmra.mrb[0].mxu0 %v2143
    %v2233 = vpop.f32.mrb[0].mxu0
    %v2234 = vadd.f32 0.0, %v2233
    %v2235 = vpop.f32.mrb[0].mxu0
    %v2236 = vpop.f32.mrb[0].mxu0
    %v2237 = vadd.f32 0.0, %v2236
    %v2238 = vpop.f32.mrb[0].mxu0
    %2239 = vmatprep.mubr.bf16.mxu0 0
    %2240 = vmatmul.mubr.bf16.gmra.mrb[0].mxu0 %v2146
    %v2241 = vpop.f32.mrb[0].mxu0
    %v2242 = vadd.f32 0.0, %v2241
    %v2243 = vpop.f32.mrb[0].mxu0
    %v2244 = vpop.f32.mrb[0].mxu0
    %v2245 = vadd.f32 0.0, %v2244
    %v2246 = vpop.f32.mrb[0].mxu0
    %2247 = vdwg.mxu0
    %v2248 = vadd.f32 %v2106, %v2186
    %v2249 = vadd.f32 %v2107, %v2189
    %v2250 = vadd.f32 %v2108, %v2194
    %v2251 = vadd.f32 %v2109, %v2197
    %v2252 = vadd.f32 %v2110, %v2202
    %v2253 = vadd.f32 %v2111, %v2205
    %v2254 = vadd.f32 %v2112, %v2210
    %v2255 = vadd.f32 %v2113, %v2213
    %v2256 = vadd.f32 %v2114, %v2218
    %v2257 = vadd.f32 %v2115, %v2221
    %v2258 = vadd.f32 %v2116, %v2226
    %v2259 = vadd.f32 %v2117, %v2229
    %v2260 = vadd.f32 %v2118, %v2234
    %v2261 = vadd.f32 %v2119, %v2237
    %v2262 = vadd.f32 %v2120, %v2242
    %v2263 = vadd.f32 %v2121, %v2245
    %s2264 = scalar_lea.vmem %s3, 20
    %v2265 = vld [vmem:[%s2264] sm:$0xf]
    %v2267 = vsel %vm1588, %v1553, 0
    %v2270 = vsel %vm1588, %v1554, 0
    %v2273 = vsel %vm1588, %v1555, 0
    %v2276 = vsel %vm1588, %v1556, 0
    %v2279 = vsel %vm1588, %v1557, 0
    %v2282 = vsel %vm1588, %v1558, 0
    %v2285 = vsel %vm1588, %v1559, 0
    %v2288 = vsel %vm1588, %v1560, 0
    %v2291 = vsel %vm1613, %v2265, 0
    %2293 = vmatprep.subr.bf16.mxu0 0
    %2294 = vmatpush1.bf16.msra.mxu0 %v2291
    %2295 = vmatprep.subr.bf16.mxu0 0
    %2296 = vmatpush1.bf16.msra.mxu0 0
    %2297 = vmatprep.subr.bf16.mxu0 0
    %2298 = vmatpush1.bf16.msra.mxu0 0
    %2299 = vmatprep.subr.bf16.mxu0 0
    %2300 = vmatpush1.bf16.msra.mxu0 0
    %2301 = vmatprep.subr.bf16.mxu0 0
    %2302 = vmatpush1.bf16.msra.mxu0 0
    %2303 = vmatprep.subr.bf16.mxu0 0
    %2304 = vmatpush1.bf16.msra.mxu0 0
    %2305 = vmatprep.subr.bf16.mxu0 0
    %2306 = vmatpush1.bf16.msra.mxu0 0
    %2307 = vmatprep.subr.bf16.mxu0 0
    %2308 = vmatpush1.bf16.msra.mxu0 0
    %2309 = vmatprep.subr.bf16.mxu0 0
    %2310 = vmatpush1.bf16.msra.mxu0 0
    %2311 = vmatprep.subr.bf16.mxu0 0
    %2312 = vmatpush1.bf16.msra.mxu0 0
    %2313 = vmatprep.subr.bf16.mxu0 0
    %2314 = vmatpush1.bf16.msra.mxu0 0
    %2315 = vmatprep.subr.bf16.mxu0 0
    %2316 = vmatpush1.bf16.msra.mxu0 0
    %2317 = vmatprep.subr.bf16.mxu0 0
    %2318 = vmatpush1.bf16.msra.mxu0 0
    %2319 = vmatprep.subr.bf16.mxu0 0
    %2320 = vmatpush1.bf16.msra.mxu0 0
    %2321 = vmatprep.subr.bf16.mxu0 0
    %2322 = vmatpush1.bf16.msra.mxu0 0
    %2323 = vmatprep.subr.bf16.mxu0 0
    %2324 = vmatpush1.bf16.msra.mxu0 0
    %2325 = vmatprep.mubr.bf16.mxu0 0
    %2326 = vmatmul.mubr.bf16.gmra.mrb[0].mxu0 %v2267
    %v2327 = vpop.f32.mrb[0].mxu0
    %v2328 = vadd.f32 0.0, %v2327
    %v2329 = vpop.f32.mrb[0].mxu0
    %v2330 = vpop.f32.mrb[0].mxu0
    %v2331 = vadd.f32 0.0, %v2330
    %v2332 = vpop.f32.mrb[0].mxu0
    %2333 = vmatprep.mubr.bf16.mxu0 0
    %2334 = vmatmul.mubr.bf16.gmra.mrb[0].mxu0 %v2270
    %v2335 = vpop.f32.mrb[0].mxu0
    %v2336 = vadd.f32 0.0, %v2335
    %v2337 = vpop.f32.mrb[0].mxu0
    %v2338 = vpop.f32.mrb[0].mxu0
    %v2339 = vadd.f32 0.0, %v2338
    %v2340 = vpop.f32.mrb[0].mxu0
    %2341 = vmatprep.mubr.bf16.mxu0 0
    %2342 = vmatmul.mubr.bf16.gmra.mrb[0].mxu0 %v2273
    %v2343 = vpop.f32.mrb[0].mxu0
    %v2344 = vadd.f32 0.0, %v2343
    %v2345 = vpop.f32.mrb[0].mxu0
    %v2346 = vpop.f32.mrb[0].mxu0
    %v2347 = vadd.f32 0.0, %v2346
    %v2348 = vpop.f32.mrb[0].mxu0
    %2349 = vmatprep.mubr.bf16.mxu0 0
    %2350 = vmatmul.mubr.bf16.gmra.mrb[0].mxu0 %v2276
    %v2351 = vpop.f32.mrb[0].mxu0
    %v2352 = vadd.f32 0.0, %v2351
    %v2353 = vpop.f32.mrb[0].mxu0
    %v2354 = vpop.f32.mrb[0].mxu0
    %v2355 = vadd.f32 0.0, %v2354
    %v2356 = vpop.f32.mrb[0].mxu0
    %2357 = vmatprep.mubr.bf16.mxu0 0
    %2358 = vmatmul.mubr.bf16.gmra.mrb[0].mxu0 %v2279
    %v2359 = vpop.f32.mrb[0].mxu0
    %v2360 = vadd.f32 0.0, %v2359
    %v2361 = vpop.f32.mrb[0].mxu0
    %v2362 = vpop.f32.mrb[0].mxu0
    %v2363 = vadd.f32 0.0, %v2362
    %v2364 = vpop.f32.mrb[0].mxu0
    %2365 = vmatprep.mubr.bf16.mxu0 0
    %2366 = vmatmul.mubr.bf16.gmra.mrb[0].mxu0 %v2282
    %v2367 = vpop.f32.mrb[0].mxu0
    %v2368 = vadd.f32 0.0, %v2367
    %v2369 = vpop.f32.mrb[0].mxu0
    %v2370 = vpop.f32.mrb[0].mxu0
    %v2371 = vadd.f32 0.0, %v2370
    %v2372 = vpop.f32.mrb[0].mxu0
    %2373 = vmatprep.mubr.bf16.mxu0 0
    %2374 = vmatmul.mubr.bf16.gmra.mrb[0].mxu0 %v2285
    %v2375 = vpop.f32.mrb[0].mxu0
    %v2376 = vadd.f32 0.0, %v2375
    %v2377 = vpop.f32.mrb[0].mxu0
    %v2378 = vpop.f32.mrb[0].mxu0
    %v2379 = vadd.f32 0.0, %v2378
    %v2380 = vpop.f32.mrb[0].mxu0
    %2381 = vmatprep.mubr.bf16.mxu0 0
    %2382 = vmatmul.mubr.bf16.gmra.mrb[0].mxu0 %v2288
    %v2383 = vpop.f32.mrb[0].mxu0
    %v2384 = vadd.f32 0.0, %v2383
    %v2385 = vpop.f32.mrb[0].mxu0
    %v2386 = vpop.f32.mrb[0].mxu0
    %v2387 = vadd.f32 0.0, %v2386
    %v2388 = vpop.f32.mrb[0].mxu0
    %2389 = vdwg.mxu0
    %v2390 = vadd.f32 %v2248, %v2328
    %v2391 = vadd.f32 %v2249, %v2331
    %v2392 = vadd.f32 %v2250, %v2336
    %v2393 = vadd.f32 %v2251, %v2339
    %v2394 = vadd.f32 %v2252, %v2344
    %v2395 = vadd.f32 %v2253, %v2347
    %v2396 = vadd.f32 %v2254, %v2352
    %v2397 = vadd.f32 %v2255, %v2355
    %v2398 = vadd.f32 %v2256, %v2360
    %v2399 = vadd.f32 %v2257, %v2363
    %v2400 = vadd.f32 %v2258, %v2368
    %v2401 = vadd.f32 %v2259, %v2371
    %v2402 = vadd.f32 %v2260, %v2376
    %v2403 = vadd.f32 %v2261, %v2379
    %v2404 = vadd.f32 %v2262, %v2384
    %v2405 = vadd.f32 %v2263, %v2387
    %s2406 = scalar_lea.vmem %s3, 24
    %v2407 = vld [vmem:[%s2406] sm:$0xf]
    %v2409 = vsel %vm1588, %v1561, 0
    %v2412 = vsel %vm1588, %v1562, 0
    %v2415 = vsel %vm1588, %v1563, 0
    %v2418 = vsel %vm1588, %v1564, 0
    %v2421 = vsel %vm1588, %v1565, 0
    %v2424 = vsel %vm1588, %v1566, 0
    %v2427 = vsel %vm1588, %v1567, 0
    %v2430 = vsel %vm1588, %v1568, 0
    %v2433 = vsel %vm1613, %v2407, 0
    %2435 = vmatprep.subr.bf16.mxu0 0
    %2436 = vmatpush1.bf16.msra.mxu0 %v2433
    %2437 = vmatprep.subr.bf16.mxu0 0
    %2438 = vmatpush1.bf16.msra.mxu0 0
    %2439 = vmatprep.subr.bf16.mxu0 0
    %2440 = vmatpush1.bf16.msra.mxu0 0
    %2441 = vmatprep.subr.bf16.mxu0 0
    %2442 = vmatpush1.bf16.msra.mxu0 0
    %2443 = vmatprep.subr.bf16.mxu0 0
    %2444 = vmatpush1.bf16.msra.mxu0 0
    %2445 = vmatprep.subr.bf16.mxu0 0
    %2446 = vmatpush1.bf16.msra.mxu0 0
    %2447 = vmatprep.subr.bf16.mxu0 0
    %2448 = vmatpush1.bf16.msra.mxu0 0
    %2449 = vmatprep.subr.bf16.mxu0 0
    %2450 = vmatpush1.bf16.msra.mxu0 0
    %2451 = vmatprep.subr.bf16.mxu0 0
    %2452 = vmatpush1.bf16.msra.mxu0 0
    %2453 = vmatprep.subr.bf16.mxu0 0
    %2454 = vmatpush1.bf16.msra.mxu0 0
    %2455 = vmatprep.subr.bf16.mxu0 0
    %2456 = vmatpush1.bf16.msra.mxu0 0
    %2457 = vmatprep.subr.bf16.mxu0 0
    %2458 = vmatpush1.bf16.msra.mxu0 0
    %2459 = vmatprep.subr.bf16.mxu0 0
    %2460 = vmatpush1.bf16.msra.mxu0 0
    %2461 = vmatprep.subr.bf16.mxu0 0
    %2462 = vmatpush1.bf16.msra.mxu0 0
    %2463 = vmatprep.subr.bf16.mxu0 0
    %2464 = vmatpush1.bf16.msra.mxu0 0
    %2465 = vmatprep.subr.bf16.mxu0 0
    %2466 = vmatpush1.bf16.msra.mxu0 0
    %2467 = vmatprep.mubr.bf16.mxu0 0
    %2468 = vmatmul.mubr.bf16.gmra.mrb[0].mxu0 %v2409
    %v2469 = vpop.f32.mrb[0].mxu0
    %v2470 = vadd.f32 0.0, %v2469
    %v2471 = vpop.f32.mrb[0].mxu0
    %v2472 = vpop.f32.mrb[0].mxu0
    %v2473 = vadd.f32 0.0, %v2472
    %v2474 = vpop.f32.mrb[0].mxu0
    %2475 = vmatprep.mubr.bf16.mxu0 0
    %2476 = vmatmul.mubr.bf16.gmra.mrb[0].mxu0 %v2412
    %v2477 = vpop.f32.mrb[0].mxu0
    %v2478 = vadd.f32 0.0, %v2477
    %v2479 = vpop.f32.mrb[0].mxu0
    %v2480 = vpop.f32.mrb[0].mxu0
    %v2481 = vadd.f32 0.0, %v2480
    %v2482 = vpop.f32.mrb[0].mxu0
    %2483 = vmatprep.mubr.bf16.mxu0 0
    %2484 = vmatmul.mubr.bf16.gmra.mrb[0].mxu0 %v2415
    %v2485 = vpop.f32.mrb[0].mxu0
    %v2486 = vadd.f32 0.0, %v2485
    %v2487 = vpop.f32.mrb[0].mxu0
    %v2488 = vpop.f32.mrb[0].mxu0
    %v2489 = vadd.f32 0.0, %v2488
    %v2490 = vpop.f32.mrb[0].mxu0
    %2491 = vmatprep.mubr.bf16.mxu0 0
    %2492 = vmatmul.mubr.bf16.gmra.mrb[0].mxu0 %v2418
    %v2493 = vpop.f32.mrb[0].mxu0
    %v2494 = vadd.f32 0.0, %v2493
    %v2495 = vpop.f32.mrb[0].mxu0
    %v2496 = vpop.f32.mrb[0].mxu0
    %v2497 = vadd.f32 0.0, %v2496
    %v2498 = vpop.f32.mrb[0].mxu0
    %2499 = vmatprep.mubr.bf16.mxu0 0
    %2500 = vmatmul.mubr.bf16.gmra.mrb[0].mxu0 %v2421
    %v2501 = vpop.f32.mrb[0].mxu0
    %v2502 = vadd.f32 0.0, %v2501
    %v2503 = vpop.f32.mrb[0].mxu0
    %v2504 = vpop.f32.mrb[0].mxu0
    %v2505 = vadd.f32 0.0, %v2504
    %v2506 = vpop.f32.mrb[0].mxu0
    %2507 = vmatprep.mubr.bf16.mxu0 0
    %2508 = vmatmul.mubr.bf16.gmra.mrb[0].mxu0 %v2424
    %v2509 = vpop.f32.mrb[0].mxu0
    %v2510 = vadd.f32 0.0, %v2509
    %v2511 = vpop.f32.mrb[0].mxu0
    %v2512 = vpop.f32.mrb[0].mxu0
    %v2513 = vadd.f32 0.0, %v2512
    %v2514 = vpop.f32.mrb[0].mxu0
    %2515 = vmatprep.mubr.bf16.mxu0 0
    %2516 = vmatmul.mubr.bf16.gmra.mrb[0].mxu0 %v2427
    %v2517 = vpop.f32.mrb[0].mxu0
    %v2518 = vadd.f32 0.0, %v2517
    %v2519 = vpop.f32.mrb[0].mxu0
    %v2520 = vpop.f32.mrb[0].mxu0
    %v2521 = vadd.f32 0.0, %v2520
    %v2522 = vpop.f32.mrb[0].mxu0
    %2523 = vmatprep.mubr.bf16.mxu0 0
    %2524 = vmatmul.mubr.bf16.gmra.mrb[0].mxu0 %v2430
    %v2525 = vpop.f32.mrb[0].mxu0
    %v2526 = vadd.f32 0.0, %v2525
    %v2527 = vpop.f32.mrb[0].mxu0
    %v2528 = vpop.f32.mrb[0].mxu0
    %v2529 = vadd.f32 0.0, %v2528
    %v2530 = vpop.f32.mrb[0].mxu0
    %2531 = vdwg.mxu0
    %v2532 = vadd.f32 %v2390, %v2470
    %v2533 = vadd.f32 %v2391, %v2473
    %v2534 = vadd.f32 %v2392, %v2478
    %v2535 = vadd.f32 %v2393, %v2481
    %v2536 = vadd.f32 %v2394, %v2486
    %v2537 = vadd.f32 %v2395, %v2489
    %v2538 = vadd.f32 %v2396, %v2494
    %v2539 = vadd.f32 %v2397, %v2497
    %v2540 = vadd.f32 %v2398, %v2502
    %v2541 = vadd.f32 %v2399, %v2505
    %v2542 = vadd.f32 %v2400, %v2510
    %v2543 = vadd.f32 %v2401, %v2513
    %v2544 = vadd.f32 %v2402, %v2518
    %v2545 = vadd.f32 %v2403, %v2521
    %v2546 = vadd.f32 %v2404, %v2526
    %v2547 = vadd.f32 %v2405, %v2529
    %s2548 = scalar_lea.vmem %s3, 28
    %v2549 = vld [vmem:[%s2548] sm:$0xf]
    %v2551 = vsel %vm1588, %v1569, 0
    %v2554 = vsel %vm1588, %v1570, 0
    %v2557 = vsel %vm1588, %v1571, 0
    %v2560 = vsel %vm1588, %v1572, 0
    %v2563 = vsel %vm1588, %v1573, 0
    %v2566 = vsel %vm1588, %v1574, 0
    %v2569 = vsel %vm1588, %v1575, 0
    %v2572 = vsel %vm1588, %v1576, 0
    %v2575 = vsel %vm1613, %v2549, 0
    %2577 = vmatprep.subr.bf16.mxu0 0
    %2578 = vmatpush1.bf16.msra.mxu0 %v2575
    %2579 = vmatprep.subr.bf16.mxu0 0
    %2580 = vmatpush1.bf16.msra.mxu0 0
    %2581 = vmatprep.subr.bf16.mxu0 0
    %2582 = vmatpush1.bf16.msra.mxu0 0
    %2583 = vmatprep.subr.bf16.mxu0 0
    %2584 = vmatpush1.bf16.msra.mxu0 0
    %2585 = vmatprep.subr.bf16.mxu0 0
    %2586 = vmatpush1.bf16.msra.mxu0 0
    %2587 = vmatprep.subr.bf16.mxu0 0
    %2588 = vmatpush1.bf16.msra.mxu0 0
    %2589 = vmatprep.subr.bf16.mxu0 0
    %2590 = vmatpush1.bf16.msra.mxu0 0
    %2591 = vmatprep.subr.bf16.mxu0 0
    %2592 = vmatpush1.bf16.msra.mxu0 0
    %2593 = vmatprep.subr.bf16.mxu0 0
    %2594 = vmatpush1.bf16.msra.mxu0 0
    %2595 = vmatprep.subr.bf16.mxu0 0
    %2596 = vmatpush1.bf16.msra.mxu0 0
    %2597 = vmatprep.subr.bf16.mxu0 0
    %2598 = vmatpush1.bf16.msra.mxu0 0
    %2599 = vmatprep.subr.bf16.mxu0 0
    %2600 = vmatpush1.bf16.msra.mxu0 0
    %2601 = vmatprep.subr.bf16.mxu0 0
    %2602 = vmatpush1.bf16.msra.mxu0 0
    %2603 = vmatprep.subr.bf16.mxu0 0
    %2604 = vmatpush1.bf16.msra.mxu0 0
    %2605 = vmatprep.subr.bf16.mxu0 0
    %2606 = vmatpush1.bf16.msra.mxu0 0
    %2607 = vmatprep.subr.bf16.mxu0 0
    %2608 = vmatpush1.bf16.msra.mxu0 0
    %2609 = vmatprep.mubr.bf16.mxu0 0
    %2610 = vmatmul.mubr.bf16.gmra.mrb[0].mxu0 %v2551
    %v2611 = vpop.f32.mrb[0].mxu0
    %v2612 = vadd.f32 0.0, %v2611
    %v2613 = vpop.f32.mrb[0].mxu0
    %v2614 = vpop.f32.mrb[0].mxu0
    %v2615 = vadd.f32 0.0, %v2614
    %v2616 = vpop.f32.mrb[0].mxu0
    %2617 = vmatprep.mubr.bf16.mxu0 0
    %2618 = vmatmul.mubr.bf16.gmra.mrb[0].mxu0 %v2554
    %v2619 = vpop.f32.mrb[0].mxu0
    %v2620 = vadd.f32 0.0, %v2619
    %v2621 = vpop.f32.mrb[0].mxu0
    %v2622 = vpop.f32.mrb[0].mxu0
    %v2623 = vadd.f32 0.0, %v2622
    %v2624 = vpop.f32.mrb[0].mxu0
    %2625 = vmatprep.mubr.bf16.mxu0 0
    %2626 = vmatmul.mubr.bf16.gmra.mrb[0].mxu0 %v2557
    %v2627 = vpop.f32.mrb[0].mxu0
    %v2628 = vadd.f32 0.0, %v2627
    %v2629 = vpop.f32.mrb[0].mxu0
    %v2630 = vpop.f32.mrb[0].mxu0
    %v2631 = vadd.f32 0.0, %v2630
    %v2632 = vpop.f32.mrb[0].mxu0
    %2633 = vmatprep.mubr.bf16.mxu0 0
    %2634 = vmatmul.mubr.bf16.gmra.mrb[0].mxu0 %v2560
    %v2635 = vpop.f32.mrb[0].mxu0
    %v2636 = vadd.f32 0.0, %v2635
    %v2637 = vpop.f32.mrb[0].mxu0
    %v2638 = vpop.f32.mrb[0].mxu0
    %v2639 = vadd.f32 0.0, %v2638
    %v2640 = vpop.f32.mrb[0].mxu0
    %2641 = vmatprep.mubr.bf16.mxu0 0
    %2642 = vmatmul.mubr.bf16.gmra.mrb[0].mxu0 %v2563
    %v2643 = vpop.f32.mrb[0].mxu0
    %v2644 = vadd.f32 0.0, %v2643
    %v2645 = vpop.f32.mrb[0].mxu0
    %v2646 = vpop.f32.mrb[0].mxu0
    %v2647 = vadd.f32 0.0, %v2646
    %v2648 = vpop.f32.mrb[0].mxu0
    %2649 = vmatprep.mubr.bf16.mxu0 0
    %2650 = vmatmul.mubr.bf16.gmra.mrb[0].mxu0 %v2566
    %v2651 = vpop.f32.mrb[0].mxu0
    %v2652 = vadd.f32 0.0, %v2651
    %v2653 = vpop.f32.mrb[0].mxu0
    %v2654 = vpop.f32.mrb[0].mxu0
    %v2655 = vadd.f32 0.0, %v2654
    %v2656 = vpop.f32.mrb[0].mxu0
    %2657 = vmatprep.mubr.bf16.mxu0 0
    %2658 = vmatmul.mubr.bf16.gmra.mrb[0].mxu0 %v2569
    %v2659 = vpop.f32.mrb[0].mxu0
    %v2660 = vadd.f32 0.0, %v2659
    %v2661 = vpop.f32.mrb[0].mxu0
    %v2662 = vpop.f32.mrb[0].mxu0
    %v2663 = vadd.f32 0.0, %v2662
    %v2664 = vpop.f32.mrb[0].mxu0
    %2665 = vmatprep.mubr.bf16.mxu0 0
    %2666 = vmatmul.mubr.bf16.gmra.mrb[0].mxu0 %v2572
    %v2667 = vpop.f32.mrb[0].mxu0
    %v2668 = vadd.f32 0.0, %v2667
    %v2669 = vpop.f32.mrb[0].mxu0
    %v2670 = vpop.f32.mrb[0].mxu0
    %v2671 = vadd.f32 0.0, %v2670
    %v2672 = vpop.f32.mrb[0].mxu0
    %2673 = vdwg.mxu0
    %v2674 = vadd.f32 %v2532, %v2612
    %v2675 = vadd.f32 %v2533, %v2615
    %v2676 = vadd.f32 %v2534, %v2620
    %v2677 = vadd.f32 %v2535, %v2623
    %v2678 = vadd.f32 %v2536, %v2628
    %v2679 = vadd.f32 %v2537, %v2631
    %v2680 = vadd.f32 %v2538, %v2636
    %v2681 = vadd.f32 %v2539, %v2639
    %v2682 = vadd.f32 %v2540, %v2644
    %v2683 = vadd.f32 %v2541, %v2647
    %v2684 = vadd.f32 %v2542, %v2652
    %v2685 = vadd.f32 %v2543, %v2655
    %v2686 = vadd.f32 %v2544, %v2660
    %v2687 = vadd.f32 %v2545, %v2663
    %v2688 = vadd.f32 %v2546, %v2668
    %v2689 = vadd.f32 %v2547, %v2671
    %s2690 = scalar_lea.vmem %s3, 32
    %v2691 = vld [vmem:[%s2690] sm:$0xf]
    %v2693 = vsel %vm1588, %v1577, 0
    %v2696 = vsel %vm1588, %v1578, 0
    %v2699 = vsel %vm1588, %v1579, 0
    %v2702 = vsel %vm1588, %v1580, 0
    %v2705 = vsel %vm1588, %v1581, 0
    %v2708 = vsel %vm1588, %v1582, 0
    %v2711 = vsel %vm1588, %v1583, 0
    %v2714 = vsel %vm1588, %v1584, 0
    %v2717 = vsel %vm1613, %v2691, 0
    %2719 = vmatprep.subr.bf16.mxu0 0
    %2720 = vmatpush1.bf16.msra.mxu0 %v2717
    %2721 = vmatprep.subr.bf16.mxu0 0
    %2722 = vmatpush1.bf16.msra.mxu0 0
    %2723 = vmatprep.subr.bf16.mxu0 0
    %2724 = vmatpush1.bf16.msra.mxu0 0
    %2725 = vmatprep.subr.bf16.mxu0 0
    %2726 = vmatpush1.bf16.msra.mxu0 0
    %2727 = vmatprep.subr.bf16.mxu0 0
    %2728 = vmatpush1.bf16.msra.mxu0 0
    %2729 = vmatprep.subr.bf16.mxu0 0
    %2730 = vmatpush1.bf16.msra.mxu0 0
    %2731 = vmatprep.subr.bf16.mxu0 0
    %2732 = vmatpush1.bf16.msra.mxu0 0
    %2733 = vmatprep.subr.bf16.mxu0 0
    %2734 = vmatpush1.bf16.msra.mxu0 0
    %2735 = vmatprep.subr.bf16.mxu0 0
    %2736 = vmatpush1.bf16.msra.mxu0 0
    %2737 = vmatprep.subr.bf16.mxu0 0
    %2738 = vmatpush1.bf16.msra.mxu0 0
    %2739 = vmatprep.subr.bf16.mxu0 0
    %2740 = vmatpush1.bf16.msra.mxu0 0
    %2741 = vmatprep.subr.bf16.mxu0 0
    %2742 = vmatpush1.bf16.msra.mxu0 0
    %2743 = vmatprep.subr.bf16.mxu0 0
    %2744 = vmatpush1.bf16.msra.mxu0 0
    %2745 = vmatprep.subr.bf16.mxu0 0
    %2746 = vmatpush1.bf16.msra.mxu0 0
    %2747 = vmatprep.subr.bf16.mxu0 0
    %2748 = vmatpush1.bf16.msra.mxu0 0
    %2749 = vmatprep.subr.bf16.mxu0 0
    %2750 = vmatpush1.bf16.msra.mxu0 0
    %2751 = vmatprep.mubr.bf16.mxu0 0
    %2752 = vmatmul.mubr.bf16.gmra.mrb[0].mxu0 %v2693
    %v2753 = vpop.f32.mrb[0].mxu0
    %v2754 = vadd.f32 0.0, %v2753
    %v2755 = vpop.f32.mrb[0].mxu0
    %v2756 = vpop.f32.mrb[0].mxu0
    %v2757 = vadd.f32 0.0, %v2756
    %v2758 = vpop.f32.mrb[0].mxu0
    %2759 = vmatprep.mubr.bf16.mxu0 0
    %2760 = vmatmul.mubr.bf16.gmra.mrb[0].mxu0 %v2696
    %v2761 = vpop.f32.mrb[0].mxu0
    %v2762 = vadd.f32 0.0, %v2761
    %v2763 = vpop.f32.mrb[0].mxu0
    %v2764 = vpop.f32.mrb[0].mxu0
    %v2765 = vadd.f32 0.0, %v2764
    %v2766 = vpop.f32.mrb[0].mxu0
    %2767 = vmatprep.mubr.bf16.mxu0 0
    %2768 = vmatmul.mubr.bf16.gmra.mrb[0].mxu0 %v2699
    %v2769 = vpop.f32.mrb[0].mxu0
    %v2770 = vadd.f32 0.0, %v2769
    %v2771 = vpop.f32.mrb[0].mxu0
    %v2772 = vpop.f32.mrb[0].mxu0
    %v2773 = vadd.f32 0.0, %v2772
    %v2774 = vpop.f32.mrb[0].mxu0
    %2775 = vmatprep.mubr.bf16.mxu0 0
    %2776 = vmatmul.mubr.bf16.gmra.mrb[0].mxu0 %v2702
    %v2777 = vpop.f32.mrb[0].mxu0
    %v2778 = vadd.f32 0.0, %v2777
    %v2779 = vpop.f32.mrb[0].mxu0
    %v2780 = vpop.f32.mrb[0].mxu0
    %v2781 = vadd.f32 0.0, %v2780
    %v2782 = vpop.f32.mrb[0].mxu0
    %2783 = vmatprep.mubr.bf16.mxu0 0
    %2784 = vmatmul.mubr.bf16.gmra.mrb[0].mxu0 %v2705
    %v2785 = vpop.f32.mrb[0].mxu0
    %v2786 = vadd.f32 0.0, %v2785
    %v2787 = vpop.f32.mrb[0].mxu0
    %v2788 = vpop.f32.mrb[0].mxu0
    %v2789 = vadd.f32 0.0, %v2788
    %v2790 = vpop.f32.mrb[0].mxu0
    %2791 = vmatprep.mubr.bf16.mxu0 0
    %2792 = vmatmul.mubr.bf16.gmra.mrb[0].mxu0 %v2708
    %v2793 = vpop.f32.mrb[0].mxu0
    %v2794 = vadd.f32 0.0, %v2793
    %v2795 = vpop.f32.mrb[0].mxu0
    %v2796 = vpop.f32.mrb[0].mxu0
    %v2797 = vadd.f32 0.0, %v2796
    %v2798 = vpop.f32.mrb[0].mxu0
    %2799 = vmatprep.mubr.bf16.mxu0 0
    %2800 = vmatmul.mubr.bf16.gmra.mrb[0].mxu0 %v2711
    %v2801 = vpop.f32.mrb[0].mxu0
    %v2802 = vadd.f32 0.0, %v2801
    %v2803 = vpop.f32.mrb[0].mxu0
    %v2804 = vpop.f32.mrb[0].mxu0
    %v2805 = vadd.f32 0.0, %v2804
    %v2806 = vpop.f32.mrb[0].mxu0
    %2807 = vmatprep.mubr.bf16.mxu0 0
    %2808 = vmatmul.mubr.bf16.gmra.mrb[0].mxu0 %v2714
    %v2809 = vpop.f32.mrb[0].mxu0
    %v2810 = vadd.f32 0.0, %v2809
    %v2811 = vpop.f32.mrb[0].mxu0
    %v2812 = vpop.f32.mrb[0].mxu0
    %v2813 = vadd.f32 0.0, %v2812
    %v2814 = vpop.f32.mrb[0].mxu0
    %2815 = vdwg.mxu0
    %v2816 = vadd.f32 %v2674, %v2754
    %v2817 = vadd.f32 %v2675, %v2757
    %v2818 = vadd.f32 %v2676, %v2762
    %v2819 = vadd.f32 %v2677, %v2765
    %v2820 = vadd.f32 %v2678, %v2770
    %v2821 = vadd.f32 %v2679, %v2773
    %v2822 = vadd.f32 %v2680, %v2778
    %v2823 = vadd.f32 %v2681, %v2781
    %v2824 = vadd.f32 %v2682, %v2786
    %v2825 = vadd.f32 %v2683, %v2789
    %v2826 = vadd.f32 %v2684, %v2794
    %v2827 = vadd.f32 %v2685, %v2797
    %v2828 = vadd.f32 %v2686, %v2802
    %v2829 = vadd.f32 %v2687, %v2805
    %v2830 = vadd.f32 %v2688, %v2810
    %v2831 = vadd.f32 %v2689, %v2813
    %v2832 = vld [vmem:[%s4] sm:$0x1]
    %v2834 = vlaneseq
    %v2835 = vshrl.u32 %v2834, 7
    %v2836 = vsub.s32 0, %v2835
    %v2837 = vrot.slane %v2832, %v2836
    %v2839 = vadd.f32 %v2816, %v2837
    %v2840 = vadd.f32 %v2817, %v2837
    %v2841 = vadd.f32 %v2818, %v2837
    %v2842 = vadd.f32 %v2819, %v2837
    %v2843 = vadd.f32 %v2820, %v2837
    %v2844 = vadd.f32 %v2821, %v2837
    %v2845 = vadd.f32 %v2822, %v2837
    %v2846 = vadd.f32 %v2823, %v2837
    %v2847 = vadd.f32 %v2824, %v2837
    %v2848 = vadd.f32 %v2825, %v2837
    %v2849 = vadd.f32 %v2826, %v2837
    %v2850 = vadd.f32 %v2827, %v2837
    %v2851 = vadd.f32 %v2828, %v2837
    %v2852 = vadd.f32 %v2829, %v2837
    %v2853 = vadd.f32 %v2830, %v2837
    %v2854 = vadd.f32 %v2831, %v2837
    %v2855 = vmax.f32 %v2839, 0.0
    %v2856 = vmax.f32 %v2840, 0.0
    %v2857 = vmax.f32 %v2841, 0.0
    %v2858 = vmax.f32 %v2842, 0.0
    %v2859 = vmax.f32 %v2843, 0.0
    %v2860 = vmax.f32 %v2844, 0.0
    %v2861 = vmax.f32 %v2845, 0.0
    %v2862 = vmax.f32 %v2846, 0.0
    %v2863 = vmax.f32 %v2847, 0.0
    %v2864 = vmax.f32 %v2848, 0.0
    %v2865 = vmax.f32 %v2849, 0.0
    %v2866 = vmax.f32 %v2850, 0.0
    %v2867 = vmax.f32 %v2851, 0.0
    %v2868 = vmax.f32 %v2852, 0.0
    %v2869 = vmax.f32 %v2853, 0.0
    %v2870 = vmax.f32 %v2854, 0.0
    %v2871 = vpack.c.bf16 %v2856, %v2855
    %v2872 = vpack.c.bf16 %v2858, %v2857
    %v2873 = vpack.c.bf16 %v2860, %v2859
    %v2874 = vpack.c.bf16 %v2862, %v2861
    %v2875 = vpack.c.bf16 %v2864, %v2863
    %v2876 = vpack.c.bf16 %v2866, %v2865
    %v2877 = vpack.c.bf16 %v2868, %v2867
    %v2878 = vpack.c.bf16 %v2870, %v2869
    %v2879 = vld [vmem:[%s5] sm:$0xf]
    %v2880 = vld [vmem:[%s6] sm:$0x1]
    %v2882 = vlaneseq
    %v2883 = vshrl.u32 %v2882, 7
    %v2884 = vsub.s32 0, %v2883
    %v2885 = vrot.slane %v2880, %v2884
    %v2888 = vsel %vm1588, %v2871, 0
    %v2891 = vsel %vm1588, %v2872, 0
    %v2894 = vsel %vm1588, %v2873, 0
    %v2897 = vsel %vm1588, %v2874, 0
    %v2900 = vsel %vm1588, %v2875, 0
    %v2903 = vsel %vm1588, %v2876, 0
    %v2906 = vsel %vm1588, %v2877, 0
    %v2909 = vsel %vm1588, %v2878, 0
    %v2912 = vsel %vm1613, %v2879, 0
    %2914 = vmatprep.subr.bf16.mxu0 0
    %2915 = vmatpush1.bf16.msra.mxu0 %v2912
    %2916 = vmatprep.subr.bf16.mxu0 0
    %2917 = vmatpush1.bf16.msra.mxu0 0
    %2918 = vmatprep.subr.bf16.mxu0 0
    %2919 = vmatpush1.bf16.msra.mxu0 0
    %2920 = vmatprep.subr.bf16.mxu0 0
    %2921 = vmatpush1.bf16.msra.mxu0 0
    %2922 = vmatprep.subr.bf16.mxu0 0
    %2923 = vmatpush1.bf16.msra.mxu0 0
    %2924 = vmatprep.subr.bf16.mxu0 0
    %2925 = vmatpush1.bf16.msra.mxu0 0
    %2926 = vmatprep.subr.bf16.mxu0 0
    %2927 = vmatpush1.bf16.msra.mxu0 0
    %2928 = vmatprep.subr.bf16.mxu0 0
    %2929 = vmatpush1.bf16.msra.mxu0 0
    %2930 = vmatprep.subr.bf16.mxu0 0
    %2931 = vmatpush1.bf16.msra.mxu0 0
    %2932 = vmatprep.subr.bf16.mxu0 0
    %2933 = vmatpush1.bf16.msra.mxu0 0
    %2934 = vmatprep.subr.bf16.mxu0 0
    %2935 = vmatpush1.bf16.msra.mxu0 0
    %2936 = vmatprep.subr.bf16.mxu0 0
    %2937 = vmatpush1.bf16.msra.mxu0 0
    %2938 = vmatprep.subr.bf16.mxu0 0
    %2939 = vmatpush1.bf16.msra.mxu0 0
    %2940 = vmatprep.subr.bf16.mxu0 0
    %2941 = vmatpush1.bf16.msra.mxu0 0
    %2942 = vmatprep.subr.bf16.mxu0 0
    %2943 = vmatpush1.bf16.msra.mxu0 0
    %2944 = vmatprep.subr.bf16.mxu0 0
    %2945 = vmatpush1.bf16.msra.mxu0 0
    %2946 = vmatprep.mubr.bf16.mxu0 0
    %2947 = vmatmul.mubr.bf16.gmra.mrb[0].mxu0 %v2888
    %v2948 = vpop.f32.mrb[0].mxu0
    %v2949 = vadd.f32 %v2885, %v2948
    %v2950 = vpop.f32.mrb[0].mxu0
    %v2951 = vpop.f32.mrb[0].mxu0
    %v2952 = vadd.f32 %v2885, %v2951
    %v2953 = vpop.f32.mrb[0].mxu0
    %2954 = vmatprep.mubr.bf16.mxu0 0
    %2955 = vmatmul.mubr.bf16.gmra.mrb[0].mxu0 %v2891
    %v2956 = vpop.f32.mrb[0].mxu0
    %v2957 = vadd.f32 %v2885, %v2956
    %v2958 = vpop.f32.mrb[0].mxu0
    %v2959 = vpop.f32.mrb[0].mxu0
    %v2960 = vadd.f32 %v2885, %v2959
    %v2961 = vpop.f32.mrb[0].mxu0
    %2962 = vmatprep.mubr.bf16.mxu0 0
    %2963 = vmatmul.mubr.bf16.gmra.mrb[0].mxu0 %v2894
    %v2964 = vpop.f32.mrb[0].mxu0
    %v2965 = vadd.f32 %v2885, %v2964
    %v2966 = vpop.f32.mrb[0].mxu0
    %v2967 = vpop.f32.mrb[0].mxu0
    %v2968 = vadd.f32 %v2885, %v2967
    %v2969 = vpop.f32.mrb[0].mxu0
    %2970 = vmatprep.mubr.bf16.mxu0 0
    %2971 = vmatmul.mubr.bf16.gmra.mrb[0].mxu0 %v2897
    %v2972 = vpop.f32.mrb[0].mxu0
    %v2973 = vadd.f32 %v2885, %v2972
    %v2974 = vpop.f32.mrb[0].mxu0
    %v2975 = vpop.f32.mrb[0].mxu0
    %v2976 = vadd.f32 %v2885, %v2975
    %v2977 = vpop.f32.mrb[0].mxu0
    %2978 = vmatprep.mubr.bf16.mxu0 0
    %2979 = vmatmul.mubr.bf16.gmra.mrb[0].mxu0 %v2900
    %v2980 = vpop.f32.mrb[0].mxu0
    %v2981 = vadd.f32 %v2885, %v2980
    %v2982 = vpop.f32.mrb[0].mxu0
    %v2983 = vpop.f32.mrb[0].mxu0
    %v2984 = vadd.f32 %v2885, %v2983
    %v2985 = vpop.f32.mrb[0].mxu0
    %2986 = vmatprep.mubr.bf16.mxu0 0
    %2987 = vmatmul.mubr.bf16.gmra.mrb[0].mxu0 %v2903
    %v2988 = vpop.f32.mrb[0].mxu0
    %v2989 = vadd.f32 %v2885, %v2988
    %v2990 = vpop.f32.mrb[0].mxu0
    %v2991 = vpop.f32.mrb[0].mxu0
    %v2992 = vadd.f32 %v2885, %v2991
    %v2993 = vpop.f32.mrb[0].mxu0
    %2994 = vmatprep.mubr.bf16.mxu0 0
    %2995 = vmatmul.mubr.bf16.gmra.mrb[0].mxu0 %v2906
    %v2996 = vpop.f32.mrb[0].mxu0
    %v2997 = vadd.f32 %v2885, %v2996
    %v2998 = vpop.f32.mrb[0].mxu0
    %v2999 = vpop.f32.mrb[0].mxu0
    %v3000 = vadd.f32 %v2885, %v2999
    %v3001 = vpop.f32.mrb[0].mxu0
    %3002 = vmatprep.mubr.bf16.mxu0 0
    %3003 = vmatmul.mubr.bf16.gmra.mrb[0].mxu0 %v2909
    %v3004 = vpop.f32.mrb[0].mxu0
    %v3005 = vadd.f32 %v2885, %v3004
    %v3006 = vpop.f32.mrb[0].mxu0
    %v3007 = vpop.f32.mrb[0].mxu0
    %v3008 = vadd.f32 %v2885, %v3007
    %v3009 = vpop.f32.mrb[0].mxu0
    %3010 = vdwg.mxu0
    %v3011 = vld [vmem:[%s1] sm:$0xf]
    %v3012 = vld [vmem:[%s1 + $0x4] sm:$0xf]
    %v3013 = vld [vmem:[%s1 + $0x8] sm:$0xf]
    %v3014 = vld [vmem:[%s1 + $0xc] sm:$0xf]
    %v3015 = vld [vmem:[%s1 + $0x10] sm:$0xf]
    %v3016 = vld [vmem:[%s1 + $0x14] sm:$0xf]
    %v3017 = vld [vmem:[%s1 + $0x18] sm:$0xf]
    %v3018 = vld [vmem:[%s1 + $0x1c] sm:$0xf]
    %v3019 = vld [vmem:[%s1 + $0x20] sm:$0xf]
    %v3020 = vld [vmem:[%s1 + $0x24] sm:$0xf]
    %v3021 = vld [vmem:[%s1 + $0x28] sm:$0xf]
    %v3022 = vld [vmem:[%s1 + $0x2c] sm:$0xf]
    %v3023 = vld [vmem:[%s1 + $0x30] sm:$0xf]
    %v3024 = vld [vmem:[%s1 + $0x34] sm:$0xf]
    %v3025 = vld [vmem:[%s1 + $0x38] sm:$0xf]
    %v3026 = vld [vmem:[%s1 + $0x3c] sm:$0xf]
    %v3027 = vld [vmem:[%s7] sm:$0x3]
    %v3044 = vunpack.c.l.b16 %v3011
    %v3045 = vunpack.c.l.b16 %v3012
    %v3046 = vunpack.c.l.b16 %v3013
    %v3047 = vunpack.c.l.b16 %v3014
    %v3048 = vunpack.c.l.b16 %v3015
    %v3049 = vunpack.c.l.b16 %v3016
    %v3050 = vunpack.c.l.b16 %v3017
    %v3051 = vunpack.c.l.b16 %v3018
    %v3052 = vunpack.c.l.b16 %v3019
    %v3053 = vunpack.c.l.b16 %v3020
    %v3054 = vunpack.c.l.b16 %v3021
    %v3055 = vunpack.c.l.b16 %v3022
    %v3056 = vunpack.c.l.b16 %v3023
    %v3057 = vunpack.c.l.b16 %v3024
    %v3058 = vunpack.c.l.b16 %v3025
    %v3059 = vunpack.c.l.b16 %v3026
    %v3060 = vpack.c.b16 %v3045, %v3044
    %v3061 = vpack.c.b16 %v3047, %v3046
    %v3062 = vpack.c.b16 %v3049, %v3048
    %v3063 = vpack.c.b16 %v3051, %v3050
    %v3064 = vpack.c.b16 %v3053, %v3052
    %v3065 = vpack.c.b16 %v3055, %v3054
    %v3066 = vpack.c.b16 %v3057, %v3056
    %v3067 = vpack.c.b16 %v3059, %v3058
    %vm3068 = vcmask 31744
    %v3070 = vsel %vm3068, %v3060, 0
    %v3073 = vsel %vm3068, %v3061, 0
    %v3076 = vsel %vm3068, %v3062, 0
    %v3079 = vsel %vm3068, %v3063, 0
    %v3082 = vsel %vm3068, %v3064, 0
    %v3085 = vsel %vm3068, %v3065, 0
    %v3088 = vsel %vm3068, %v3066, 0
    %v3091 = vsel %vm3068, %v3067, 0
    %v3094 = vsel %vm753, %v3027, 0
    %3096 = vmatprep.subr.bf16.mxu0 0
    %3097 = vmatpush1.bf16.msra.mxu0 %v3094
    %3098 = vmatprep.subr.bf16.mxu0 0
    %3099 = vmatpush1.bf16.msra.mxu0 0
    %3100 = vmatprep.subr.bf16.mxu0 0
    %3101 = vmatpush1.bf16.msra.mxu0 0
    %3102 = vmatprep.subr.bf16.mxu0 0
    %3103 = vmatpush1.bf16.msra.mxu0 0
    %3104 = vmatprep.subr.bf16.mxu0 0
    %3105 = vmatpush1.bf16.msra.mxu0 0
    %3106 = vmatprep.subr.bf16.mxu0 0
    %3107 = vmatpush1.bf16.msra.mxu0 0
    %3108 = vmatprep.subr.bf16.mxu0 0
    %3109 = vmatpush1.bf16.msra.mxu0 0
    %3110 = vmatprep.subr.bf16.mxu0 0
    %3111 = vmatpush1.bf16.msra.mxu0 0
    %3112 = vmatprep.subr.bf16.mxu0 0
    %3113 = vmatpush1.bf16.msra.mxu0 0
    %3114 = vmatprep.subr.bf16.mxu0 0
    %3115 = vmatpush1.bf16.msra.mxu0 0
    %3116 = vmatprep.subr.bf16.mxu0 0
    %3117 = vmatpush1.bf16.msra.mxu0 0
    %3118 = vmatprep.subr.bf16.mxu0 0
    %3119 = vmatpush1.bf16.msra.mxu0 0
    %3120 = vmatprep.subr.bf16.mxu0 0
    %3121 = vmatpush1.bf16.msra.mxu0 0
    %3122 = vmatprep.subr.bf16.mxu0 0
    %3123 = vmatpush1.bf16.msra.mxu0 0
    %3124 = vmatprep.subr.bf16.mxu0 0
    %3125 = vmatpush1.bf16.msra.mxu0 0
    %3126 = vmatprep.subr.bf16.mxu0 0
    %3127 = vmatpush1.bf16.msra.mxu0 0
    %3128 = vmatprep.mubr.bf16.mxu0 0
    %3129 = vmatmul.mubr.bf16.gmra.mrb[0].mxu0 %v3070
    %v3130 = vpop.f32.mrb[0].mxu0
    %v3131 = vadd.f32 0.0, %v3130
    %v3132 = vpop.f32.mrb[0].mxu0
    %v3133 = vpop.f32.mrb[0].mxu0
    %v3134 = vadd.f32 0.0, %v3133
    %v3135 = vpop.f32.mrb[0].mxu0
    %3136 = vmatprep.mubr.bf16.mxu0 0
    %3137 = vmatmul.mubr.bf16.gmra.mrb[0].mxu0 %v3073
    %v3138 = vpop.f32.mrb[0].mxu0
    %v3139 = vadd.f32 0.0, %v3138
    %v3140 = vpop.f32.mrb[0].mxu0
    %v3141 = vpop.f32.mrb[0].mxu0
    %v3142 = vadd.f32 0.0, %v3141
    %v3143 = vpop.f32.mrb[0].mxu0
    %3144 = vmatprep.mubr.bf16.mxu0 0
    %3145 = vmatmul.mubr.bf16.gmra.mrb[0].mxu0 %v3076
    %v3146 = vpop.f32.mrb[0].mxu0
    %v3147 = vadd.f32 0.0, %v3146
    %v3148 = vpop.f32.mrb[0].mxu0
    %v3149 = vpop.f32.mrb[0].mxu0
    %v3150 = vadd.f32 0.0, %v3149
    %v3151 = vpop.f32.mrb[0].mxu0
    %3152 = vmatprep.mubr.bf16.mxu0 0
    %3153 = vmatmul.mubr.bf16.gmra.mrb[0].mxu0 %v3079
    %v3154 = vpop.f32.mrb[0].mxu0
    %v3155 = vadd.f32 0.0, %v3154
    %v3156 = vpop.f32.mrb[0].mxu0
    %v3157 = vpop.f32.mrb[0].mxu0
    %v3158 = vadd.f32 0.0, %v3157
    %v3159 = vpop.f32.mrb[0].mxu0
    %3160 = vmatprep.mubr.bf16.mxu0 0
    %3161 = vmatmul.mubr.bf16.gmra.mrb[0].mxu0 %v3082
    %v3162 = vpop.f32.mrb[0].mxu0
    %v3163 = vadd.f32 0.0, %v3162
    %v3164 = vpop.f32.mrb[0].mxu0
    %v3165 = vpop.f32.mrb[0].mxu0
    %v3166 = vadd.f32 0.0, %v3165
    %v3167 = vpop.f32.mrb[0].mxu0
    %3168 = vmatprep.mubr.bf16.mxu0 0
    %3169 = vmatmul.mubr.bf16.gmra.mrb[0].mxu0 %v3085
    %v3170 = vpop.f32.mrb[0].mxu0
    %v3171 = vadd.f32 0.0, %v3170
    %v3172 = vpop.f32.mrb[0].mxu0
    %v3173 = vpop.f32.mrb[0].mxu0
    %v3174 = vadd.f32 0.0, %v3173
    %v3175 = vpop.f32.mrb[0].mxu0
    %3176 = vmatprep.mubr.bf16.mxu0 0
    %3177 = vmatmul.mubr.bf16.gmra.mrb[0].mxu0 %v3088
    %v3178 = vpop.f32.mrb[0].mxu0
    %v3179 = vadd.f32 0.0, %v3178
    %v3180 = vpop.f32.mrb[0].mxu0
    %v3181 = vpop.f32.mrb[0].mxu0
    %v3182 = vadd.f32 0.0, %v3181
    %v3183 = vpop.f32.mrb[0].mxu0
    %3184 = vmatprep.mubr.bf16.mxu0 0
    %3185 = vmatmul.mubr.bf16.gmra.mrb[0].mxu0 %v3091
    %v3186 = vpop.f32.mrb[0].mxu0
    %v3187 = vadd.f32 0.0, %v3186
    %v3188 = vpop.f32.mrb[0].mxu0
    %v3189 = vpop.f32.mrb[0].mxu0
    %v3190 = vadd.f32 0.0, %v3189
    %v3191 = vpop.f32.mrb[0].mxu0
    %3192 = vdwg.mxu0
    %v3193 = vadd.f32 %v2949, %v3131
    %v3194 = vadd.f32 %v2952, %v3134
    %v3195 = vadd.f32 %v2957, %v3139
    %v3196 = vadd.f32 %v2960, %v3142
    %v3197 = vadd.f32 %v2965, %v3147
    %v3198 = vadd.f32 %v2968, %v3150
    %v3199 = vadd.f32 %v2973, %v3155
    %v3200 = vadd.f32 %v2976, %v3158
    %v3201 = vadd.f32 %v2981, %v3163
    %v3202 = vadd.f32 %v2984, %v3166
    %v3203 = vadd.f32 %v2989, %v3171
    %v3204 = vadd.f32 %v2992, %v3174
    %v3205 = vadd.f32 %v2997, %v3179
    %v3206 = vadd.f32 %v3000, %v3182
    %v3207 = vadd.f32 %v3005, %v3187
    %v3208 = vadd.f32 %v3008, %v3190
    %v3209 = vmax.f32 %v3193, 0.0
    %v3210 = vmax.f32 %v3194, 0.0
    %v3211 = vmax.f32 %v3195, 0.0
    %v3212 = vmax.f32 %v3196, 0.0
    %v3213 = vmax.f32 %v3197, 0.0
    %v3214 = vmax.f32 %v3198, 0.0
    %v3215 = vmax.f32 %v3199, 0.0
    %v3216 = vmax.f32 %v3200, 0.0
    %v3217 = vmax.f32 %v3201, 0.0
    %v3218 = vmax.f32 %v3202, 0.0
    %v3219 = vmax.f32 %v3203, 0.0
    %v3220 = vmax.f32 %v3204, 0.0
    %v3221 = vmax.f32 %v3205, 0.0
    %v3222 = vmax.f32 %v3206, 0.0
    %v3223 = vmax.f32 %v3207, 0.0
    %v3224 = vmax.f32 %v3208, 0.0
    %vm3225 = vcmask 261120
    %3226 = vst.msk [vmem:[#allocation2] sm:$0xff] %vm3225, %v3209
    %3227 = vst.msk [vmem:[#allocation2 + $0x8] sm:$0xff] %vm3225, %v3210
    %3228 = vst.msk [vmem:[#allocation2 + $0x10] sm:$0xff] %vm3225, %v3211
    %3229 = vst.msk [vmem:[#allocation2 + $0x18] sm:$0xff] %vm3225, %v3212
    %3230 = vst.msk [vmem:[#allocation2 + $0x20] sm:$0xff] %vm3225, %v3213
    %3231 = vst.msk [vmem:[#allocation2 + $0x28] sm:$0xff] %vm3225, %v3214
    %3232 = vst.msk [vmem:[#allocation2 + $0x30] sm:$0xff] %vm3225, %v3215
    %3233 = vst.msk [vmem:[#allocation2 + $0x38] sm:$0xff] %vm3225, %v3216
    %3234 = vst.msk [vmem:[#allocation2 + $0x40] sm:$0xff] %vm3225, %v3217
    %3235 = vst.msk [vmem:[#allocation2 + $0x48] sm:$0xff] %vm3225, %v3218
    %3236 = vst.msk [vmem:[#allocation2 + $0x50] sm:$0xff] %vm3225, %v3219
    %3237 = vst.msk [vmem:[#allocation2 + $0x58] sm:$0xff] %vm3225, %v3220
    %3238 = vst.msk [vmem:[#allocation2 + $0x60] sm:$0xff] %vm3225, %v3221
    %3239 = vst.msk [vmem:[#allocation2 + $0x68] sm:$0xff] %vm3225, %v3222
    %3240 = vst.msk [vmem:[#allocation2 + $0x70] sm:$0xff] %vm3225, %v3223
    %3241 = vst.msk [vmem:[#allocation2 + $0x78] sm:$0xff] %vm3225, %v3224
    // Predicated region
    $region34: #{bottleneck_forward.1} parent=1 // pred_check
      _
    $region35: #{bottleneck_forward.1} parent=1 // pred_check_branch
      %3243 = sbr.rel (0) target = $region37
    $region36: #{bottleneck_forward.1} parent=1 // pred_region
      %s3245 = ssub.s32 2048, 2048
      %3246 = vsyncadd [#allocation3], %s3245
      %s3247 = sshll.u32 [#allocation2], 4
      %s3248 = int_to_ptr.vmem [resolvable:$true] %s3247
      %3253 = dma.vmem_to_hbm [thread:$0]  %s3248, 2048, %s8, [#allocation3], 128, 128, 8
    $region37: #{bottleneck_forward.1} parent=1 // pred_fallthru
      _
    // Predicated region
    $region38: #{bottleneck_forward.1} parent=1 // pred_check
      _
    $region39: #{bottleneck_forward.1} parent=1 // pred_check_branch
      %3255 = sbr.rel (0) target = $region41
    $region40: #{bottleneck_forward.1} parent=1 // pred_region
      %3256 = dma.done [#allocation3], 2048
    $region41: #{bottleneck_forward.1} parent=1 // pred_fallthru
      _
    %3257 = vsyncpa [#allocation3], 1

</llo_original>
